<compile_context>
chip_gen: v5e
topology: v5e:2x2
jax: 0.10.0
libtpu: 0.0.40
codegen_flags: <defaults>
</compile_context>

<pallas_src>
import functools
import math

import jax
import jax.numpy as jnp
from jax import lax
from jax.experimental import pallas as pl
from jax.experimental.pallas import tpu as pltpu


def birnn_gru_kernel(T_real, x_ref, len_ref, wih_ref, bih_ref, whh_ref,
                     bhh_n_ref, fc1_w_ref, fc1_b_ref, fc2_w_ref, fc2_b_ref,
                     out_ref, gi_ref, h_ref):
    i = pl.program_id(0)
    n_chunks = pl.num_programs(0)
    Bp, Hp2 = h_ref.shape                 # (Bp, 2*Hp): [h_fwd | h_bwd]
    Hp = Hp2 // 2
    Tc = gi_ref.shape[0] // Bp

    @pl.when(i == 0)
    def _():
        h_ref[...] = jnp.zeros_like(h_ref)

    # Per-chunk input projection for BOTH directions and all 3 gates in one
    # matmul (bih + r/z-gate bhh already folded into bih_ref).  Lane layout of
    # the 6Hp output: [r_f r_b | z_f z_b | n_f n_b].
    gi_ref[...] = (jnp.dot(x_ref[...], wih_ref[...],
                           preferred_element_type=jnp.float32) + bih_ref[...])

    whh = whh_ref[...]                                      # (2Hp, 6Hp) bf16
    bhh_n = jnp.broadcast_to(bhh_n_ref[...], (Bp, Hp2))     # hoisted broadcast
    lens = len_ref[...]                                     # (Bp, 1) int32

    # Per-lane active window [lo, hi) over the forward loop counter t:
    #   forward lanes  : t in [0, len)     (pack_padded: freeze past len-1)
    #   backward lanes : t in [T-len, T)   (stay zero until the true last token)
    is_bwd = lax.broadcasted_iota(jnp.int32, (Bp, Hp2), 1) >= Hp
    lo = jnp.where(is_bwd, T_real - lens, 0)
    hi = jnp.where(is_bwd, T_real, lens)
    t0 = i * Tc

    def body(s, h):
        t = t0 + s
        row = pl.multiple_of(s * Bp, Bp)
        gi = gi_ref[pl.ds(row, Bp), :]          # (Bp, 6Hp) f32, all lanes used
        # The only op that must stay on the serial critical path: one fused dot.
        gh = jnp.dot(h.astype(jnp.bfloat16), whh,
                     preferred_element_type=jnp.float32)      # (Bp, 6Hp)
        rz = jax.nn.sigmoid(gi[:, :2 * Hp2] + gh[:, :2 * Hp2])  # [r_f r_b z_f z_b]
        r = rz[:, :Hp2]
        z = rz[:, Hp2:]
        n = jnp.tanh(gi[:, 2 * Hp2:] + r * (gh[:, 2 * Hp2:] + bhh_n))
        h_new = (1.0 - z) * n + z * h
        return jnp.where((t >= lo) & (t < hi), h_new, h)

    h = lax.fori_loop(0, Tc, body, h_ref[...],
                      unroll=True if Tc <= 16 else 8)
    h_ref[...] = h

    @pl.when(i == n_chunks - 1)
    def _():
        # rnn_out.permute(1,0,2).reshape(B, 2H) == [h_fwd | h_bwd]; FC head in
        # f32 (off the critical path).  Dropout is identity in eval mode.
        hid = jnp.maximum(
            jnp.dot(h, fc1_w_ref[...], preferred_element_type=jnp.float32)
            + fc1_b_ref[...], 0.0)
        out_ref[...] = (jnp.dot(hid, fc2_w_ref[...],
                                preferred_element_type=jnp.float32)
                        + fc2_b_ref[...])


def _ceil_to(x, m):
    return ((x + m - 1) // m) * m


def _build_wih_blockdiag(wih_f, wih_b, bih_f, bih_b, bhh_f, bhh_b, E, H, Hp):
    """(2E, 6Hp) block-diagonal input weights, columns [r_f r_b|z_f z_b|n_f n_b],
    plus the (1, 6Hp) bias with the r/z hidden biases folded in."""
    w_cols, b_cols = [], []
    for g in range(3):
        wf = jnp.zeros((2 * E, Hp), jnp.float32).at[:E, :H].set(wih_f[g])
        wb = jnp.zeros((2 * E, Hp), jnp.float32).at[E:, :H].set(wih_b[g])
        w_cols += [wf, wb]
        bf = bih_f[g] + (bhh_f[g] if g < 2 else jnp.zeros_like(bhh_f[g]))
        bb = bih_b[g] + (bhh_b[g] if g < 2 else jnp.zeros_like(bhh_b[g]))
        b_cols += [jnp.pad(bf, ((0, 0), (0, Hp - H))),
                   jnp.pad(bb, ((0, 0), (0, Hp - H)))]
    return jnp.concatenate(w_cols, 1), jnp.concatenate(b_cols, 1)


def _build_whh_blockdiag(whh_f, whh_b, H, Hp):
    """(2Hp, 6Hp): h_cat = [h_f | h_b] -> gh with columns [r_f r_b|z_f z_b|n_f n_b]."""
    cols = []
    for g in range(3):
        wf = jnp.zeros((2 * Hp, Hp), jnp.float32).at[:H, :H].set(whh_f[g])
        wb = jnp.zeros((2 * Hp, Hp), jnp.float32).at[Hp:Hp + H, :H].set(whh_b[g])
        cols += [wf, wb]
    return jnp.concatenate(cols, 1)


def birnn_forward(sent, sent_length, params, *, chunk=32):
    """Pallas-backed forward for BiRNNModel (GRU, use_maxpool=False, eval)."""
    B, T = sent.shape
    E = params["emb"].shape[1]
    H = params["whh_f"].shape[2]
    FC = params["fc1_w"].shape[1]
    C = params["fc2_w"].shape[1]

    Bp = _ceil_to(B, 16)           # bf16 packs 16 sublanes per vreg
    Hp = _ceil_to(H, 128)          # lane-aligned gate blocks
    FCp = _ceil_to(FC, 128)
    Cp = _ceil_to(C, 128)
    Tc = min(chunk, T)
    Tp = _ceil_to(T, Tc)
    n_chunks = Tp // Tc

    # fetch_embedding(..., squash=True): plain lookup, gathered directly
    # time-major in bf16.  x_comb[t] = [x[t] | x[T-1-t]] feeds both directions
    # from one streamed BlockSpec (padded chunk rows are fully length-masked).
    emb = params["emb"].astype(jnp.bfloat16)
    x_tbe = emb[sent.T]                                          # (T, B, E)
    x_tbe = jnp.pad(x_tbe, ((0, 0), (0, Bp - B), (0, 0)))        # (T, Bp, E)
    x_fwd = jnp.pad(x_tbe, ((0, Tp - T), (0, 0), (0, 0)))
    x_bwd = jnp.pad(x_tbe[::-1], ((0, Tp - T), (0, 0), (0, 0)))
    x_comb = jnp.concatenate([x_fwd, x_bwd], -1).reshape(Tp * Bp, 2 * E)

    # Zero lengths bumped to 1 (matches the RuntimeError handler in forward()).
    lens = jnp.maximum(sent_length.astype(jnp.int32), 1)
    lens = jnp.pad(lens, (0, Bp - B), constant_values=1).reshape(Bp, 1)

    wih_blk, bih_cat = _build_wih_blockdiag(
        params["wih_f"], params["wih_b"], params["bih_f"], params["bih_b"],
        params["bhh_f"], params["bhh_b"], E, H, Hp)
    whh_blk = _build_whh_blockdiag(params["whh_f"], params["whh_b"], H, Hp)
    bhh_n = jnp.concatenate(
        [jnp.pad(params["bhh_f"][2], ((0, 0), (0, Hp - H))),
         jnp.pad(params["bhh_b"][2], ((0, 0), (0, Hp - H)))], 1)   # (1, 2Hp)

    fc1_w = jnp.zeros((2 * Hp, FCp), jnp.float32)
    fc1_w = fc1_w.at[:H, :FC].set(params["fc1_w"][:H])
    fc1_w = fc1_w.at[Hp:Hp + H, :FC].set(params["fc1_w"][H:])
    fc1_b = jnp.zeros((1, FCp), jnp.float32).at[:, :FC].set(params["fc1_b"])
    fc2_w = jnp.zeros((FCp, Cp), jnp.float32).at[:FC, :C].set(params["fc2_w"])
    fc2_b = jnp.zeros((1, Cp), jnp.float32).at[:, :C].set(params["fc2_b"])

    operands = (x_comb, lens,
                wih_blk.astype(jnp.bfloat16), bih_cat,
                whh_blk.astype(jnp.bfloat16), bhh_n,
                fc1_w, fc1_b, fc2_w, fc2_b)

    def full_spec(a):
        return pl.BlockSpec(a.shape, lambda i: (0,) * a.ndim)

    in_specs = ([pl.BlockSpec((Tc * Bp, 2 * E), lambda i: (i, 0))]
                + [full_spec(a) for a in operands[1:]])
    out_spec = pl.BlockSpec((Bp, Cp), lambda i: (0, 0))

    # Realistic VMEM sizing: double-buffered x chunk + resident operands +
    # scratch, against a generation-aware ceiling.
    resident = sum(int(a.size) * a.dtype.itemsize for a in operands[1:])
    chunk_bytes = Tc * Bp * 2 * E * 2
    scratch_bytes = Tc * Bp * 6 * Hp * 4 + Bp * 2 * Hp * 4
    needed = 2 * chunk_bytes + 2 * resident + scratch_bytes + 2 * Bp * Cp * 4
    try:
        cap = int(pltpu.get_tpu_info().vmem_capacity_bytes)
    except Exception:
        cap = 64 << 20                          # v7x-safe fallback
    ceiling = max(cap - (8 << 20), 32 << 20)
    vmem_limit = int(min(max(needed + (4 << 20), 32 << 20), ceiling))

    out = pl.pallas_call(
        functools.partial(birnn_gru_kernel, T),
        out_shape=jax.ShapeDtypeStruct((Bp, Cp), jnp.float32),
        grid=(n_chunks,),
        in_specs=in_specs,
        out_specs=out_spec,
        scratch_shapes=[pltpu.VMEM((Tc * Bp, 6 * Hp), jnp.float32),
                        pltpu.VMEM((Bp, 2 * Hp), jnp.float32)],
        compiler_params=pltpu.CompilerParams(
            dimension_semantics=("arbitrary",),
            vmem_limit_bytes=vmem_limit),
    )(*operands)
    return out[:B, :C]


def birnn_reference(sent, sent_length, params):
    """Pure-JAX f32 reference (same math, no Pallas) for a sanity check."""
    x = params["emb"][sent].astype(jnp.float32)
    B, T, E = x.shape
    H = params["whh_f"].shape[2]
    lens = jnp.maximum(sent_length.astype(jnp.int32), 1)

    def run_dir(wih, whh, bih, bhh, reverse):
        h = jnp.zeros((B, H), jnp.float32)
        order = range(T - 1, -1, -1) if reverse else range(T)
        for t in order:
            x_t = x[:, t, :]
            r = jax.nn.sigmoid(x_t @ wih[0] + bih[0] + h @ whh[0] + bhh[0])
            z = jax.nn.sigmoid(x_t @ wih[1] + bih[1] + h @ whh[1] + bhh[1])
            n = jnp.tanh(x_t @ wih[2] + bih[2] + r * (h @ whh[2] + bhh[2]))
            h_new = (1.0 - z) * n + z * h
            h = jnp.where((t < lens)[:, None], h_new, h)
        return h

    h_f = run_dir(params["wih_f"], params["whh_f"],
                  params["bih_f"], params["bhh_f"], reverse=False)
    h_b = run_dir(params["wih_b"], params["whh_b"],
                  params["bih_b"], params["bhh_b"], reverse=True)
    feat = jnp.concatenate([h_f, h_b], axis=1)
    hid = jnp.maximum(feat @ params["fc1_w"] + params["fc1_b"], 0.0)
    return hid @ params["fc2_w"] + params["fc2_b"]


def init_params(key, vocab, emb_dim, hidden, fc_size, n_classes):
    """Deterministic synthetic parameters matching the module's shapes."""
    ks = jax.random.split(key, 14)

    def uni(k, shape, bound):
        return jax.random.uniform(k, shape, jnp.float32, -bound, bound)

    kg = 1.0 / math.sqrt(hidden)          # nn.GRU init bound
    k1 = 1.0 / math.sqrt(2 * hidden)      # fc1 fan_in = 2H
    k2 = 1.0 / math.sqrt(fc_size)         # fc2 fan_in = fc_size
    return {
        "emb":   jax.random.normal(ks[0], (vocab, emb_dim), jnp.float32),
        # GRU weights stored as (gate, in, out); gate order = (r, z, n).
        "wih_f": uni(ks[1], (3, emb_dim, hidden), kg),
        "whh_f": uni(ks[2], (3, hidden, hidden), kg),
        "bih_f": uni(ks[3], (3, 1, hidden), kg),
        "bhh_f": uni(ks[4], (3, 1, hidden), kg),
        "wih_b": uni(ks[5], (3, emb_dim, hidden), kg),
        "whh_b": uni(ks[6], (3, hidden, hidden), kg),
        "bih_b": uni(ks[7], (3, 1, hidden), kg),
        "bhh_b": uni(ks[8], (3, 1, hidden), kg),
        "fc1_w": uni(ks[9], (2 * hidden, fc_size), k1),
        "fc1_b": uni(ks[10], (1, fc_size), k1),
        "fc2_w": uni(ks[11], (fc_size, n_classes), k2),
        "fc2_b": uni(ks[12], (1, n_classes), k2),
    }


if __name__ == "__main__":
    B, T = 2, 8
    VOCAB, EMB, HIDDEN, FC, N_CLASSES = 50, 16, 32, 64, 4

    key = jax.random.PRNGKey(0)
    k_sent, k_params = jax.random.split(key)
    sent = jax.random.randint(k_sent, (B, T), 0, VOCAB, dtype=jnp.int32)
    sent_length = jnp.array([T, 5], dtype=jnp.int32)     # variable lengths
    params = init_params(k_params, VOCAB, EMB, HIDDEN, FC, N_CLASSES)

    # chunk=4 -> 2 grid steps, exercising the streamed x chunks and the
    # cross-chunk hidden-state carry in VMEM scratch.
    logits = birnn_forward(sent, sent_length, params, chunk=4)
    logits = jax.block_until_ready(logits)

    ref = jax.block_until_ready(birnn_reference(sent, sent_length, params))
    assert logits.shape == (B, N_CLASSES)
    assert bool(jnp.all(jnp.isfinite(logits)))
    assert bool(jnp.allclose(logits, ref, rtol=5e-2, atol=5e-2)), (
        f"mismatch: max abs diff {float(jnp.max(jnp.abs(logits - ref)))}")

    print("KERNEL_OK")
</pallas_src>

<mosaic_0001>
module attributes {stable_mosaic.version = 11 : i64} {
  func.func @birnn_gru_kernel(%arg0: i32, %arg1: memref<64x32xbf16, #tpu.memory_space<vmem>>, %arg2: memref<16x1xi32, #tpu.memory_space<vmem>>, %arg3: memref<32x768xbf16, #tpu.memory_space<vmem>>, %arg4: memref<1x768xf32, #tpu.memory_space<vmem>>, %arg5: memref<256x768xbf16, #tpu.memory_space<vmem>>, %arg6: memref<1x256xf32, #tpu.memory_space<vmem>>, %arg7: memref<256x128xf32, #tpu.memory_space<vmem>>, %arg8: memref<1x128xf32, #tpu.memory_space<vmem>>, %arg9: memref<128x128xf32, #tpu.memory_space<vmem>>, %arg10: memref<1x128xf32, #tpu.memory_space<vmem>>, %arg11: memref<16x128xf32, #tpu.memory_space<vmem>>, %arg12: memref<64x768xf32, #tpu.memory_space<vmem>>, %arg13: memref<16x256xf32, #tpu.memory_space<vmem>>) attributes {dimension_semantics = [#tpu.dimension_semantics<arbitrary>], iteration_bounds = array<i64: 2>, scalar_prefetch = 0 : i64, scratch_operands = 2 : i64, tpu.core_type = #tpu.core_type<tc>, window_params = [{transform_indices = @transform_0, window_bounds = array<i64: 64, 32>}, {pipeline_mode = #tpu.pipeline_mode<synchronous>, transform_indices = @transform_1, window_bounds = array<i64: 16, 1>}, {pipeline_mode = #tpu.pipeline_mode<synchronous>, transform_indices = @transform_2, window_bounds = array<i64: 32, 768>}, {pipeline_mode = #tpu.pipeline_mode<synchronous>, transform_indices = @transform_3, window_bounds = array<i64: 1, 768>}, {pipeline_mode = #tpu.pipeline_mode<synchronous>, transform_indices = @transform_4, window_bounds = array<i64: 256, 768>}, {pipeline_mode = #tpu.pipeline_mode<synchronous>, transform_indices = @transform_5, window_bounds = array<i64: 1, 256>}, {pipeline_mode = #tpu.pipeline_mode<synchronous>, transform_indices = @transform_6, window_bounds = array<i64: 256, 128>}, {pipeline_mode = #tpu.pipeline_mode<synchronous>, transform_indices = @transform_7, window_bounds = array<i64: 1, 128>}, {pipeline_mode = #tpu.pipeline_mode<synchronous>, transform_indices = @transform_8, window_bounds = array<i64: 128, 128>}, {pipeline_mode = #tpu.pipeline_mode<synchronous>, transform_indices = @transform_9, window_bounds = array<i64: 1, 128>}, {pipeline_mode = #tpu.pipeline_mode<synchronous>, transform_indices = @transform_10, window_bounds = array<i64: 16, 128>}]} {
    %c0_i32 = arith.constant 0 : i32
    %0 = arith.cmpi eq, %arg0, %c0_i32 : i32
    %1 = arith.extui %0 : i1 to i32
    %c0_i32_0 = arith.constant 0 : i32
    %2 = arith.cmpi ne, %1, %c0_i32_0 : i32
    scf.if %2 {
      %cst_43 = arith.constant 0.000000e+00 : f32
      %170 = vector.broadcast %cst_43 : f32 to vector<16x256xf32>
      %c0_44 = arith.constant 0 : index
      %c0_45 = arith.constant 0 : index
      %171 = vector.load %arg13[%c0_44, %c0_45] : memref<16x256xf32, #tpu.memory_space<vmem>>, vector<16x256xf32>
      tpu.vector_store %arg13[%c0_44, %c0_45], %170 {strides = array<i32>} : memref<16x256xf32, #tpu.memory_space<vmem>>, vector<16x256xf32>,
    } else {
    }
    %c0 = arith.constant 0 : index
    %c0_1 = arith.constant 0 : index
    %3 = vector.load %arg1[%c0, %c0_1] : memref<64x32xbf16, #tpu.memory_space<vmem>>, vector<64x32xbf16>
    %c0_2 = arith.constant 0 : index
    %c0_3 = arith.constant 0 : index
    %4 = vector.load %arg3[%c0_2, %c0_3] : memref<32x768xbf16, #tpu.memory_space<vmem>>, vector<32x768xbf16>
    %cst = arith.constant dense<0.000000e+00> : vector<64x768xf32>
    %5 = tpu.matmul %3, %4, %cst {dimension_numbers = #tpu.dot_dimension_numbers<[1], [0], [0], [1], [0, 0, 1, 1], [], []>} : vector<64x32xbf16>, vector<32x768xbf16>, vector<64x768xf32> -> vector<64x768xf32>
    %c0_4 = arith.constant 0 : index
    %c0_5 = arith.constant 0 : index
    %6 = vector.load %arg4[%c0_4, %c0_5] : memref<1x768xf32, #tpu.memory_space<vmem>>, vector<1x768xf32>
    %7 = vector.broadcast %6 : vector<1x768xf32> to vector<64x768xf32>
    %8 = arith.addf %5, %7 : vector<64x768xf32>
    %c0_6 = arith.constant 0 : index
    %c0_7 = arith.constant 0 : index
    %9 = vector.load %arg12[%c0_6, %c0_7] : memref<64x768xf32, #tpu.memory_space<vmem>>, vector<64x768xf32>
    tpu.vector_store %arg12[%c0_6, %c0_7], %8 {strides = array<i32>} : memref<64x768xf32, #tpu.memory_space<vmem>>, vector<64x768xf32>,
    %c0_8 = arith.constant 0 : index
    %c0_9 = arith.constant 0 : index
    %10 = vector.load %arg5[%c0_8, %c0_9] : memref<256x768xbf16, #tpu.memory_space<vmem>>, vector<256x768xbf16>
    %c0_10 = arith.constant 0 : index
    %c0_11 = arith.constant 0 : index
    %11 = vector.load %arg6[%c0_10, %c0_11] : memref<1x256xf32, #tpu.memory_space<vmem>>, vector<1x256xf32>
    %12 = vector.shape_cast %11 : vector<1x256xf32> to vector<1x256xf32>
    %13 = vector.broadcast %12 : vector<1x256xf32> to vector<16x256xf32>
    %c0_12 = arith.constant 0 : index
    %c0_13 = arith.constant 0 : index
    %14 = vector.load %arg2[%c0_12, %c0_13] : memref<16x1xi32, #tpu.memory_space<vmem>>, vector<16x1xi32>
    %15 = tpu.iota {dimensions = array<i32: 1>} : vector<16x256xi32>
    %c128_i32 = arith.constant 128 : i32
    %16 = vector.broadcast %c128_i32 : i32 to vector<16x256xi32>
    %17 = arith.cmpi sge, %15, %16 : vector<16x256xi32>
    %c8_i32 = arith.constant 8 : i32
    %18 = vector.broadcast %c8_i32 : i32 to vector<16x1xi32>
    %19 = arith.subi %18, %14 : vector<16x1xi32>
    %c0_i32_14 = arith.constant 0 : i32
    %20 = vector.shape_cast %19 : vector<16x1xi32> to vector<16x1xi32>
    %21 = vector.broadcast %20 : vector<16x1xi32> to vector<16x256xi32>
    %22 = vector.broadcast %c0_i32_14 : i32 to vector<16x256xi32>
    %23 = arith.select %17, %21, %22 : vector<16x256xi1>, vector<16x256xi32>
    %c8_i32_15 = arith.constant 8 : i32
    %24 = vector.broadcast %c8_i32_15 : i32 to vector<16x256xi32>
    %25 = vector.shape_cast %14 : vector<16x1xi32> to vector<16x1xi32>
    %26 = vector.broadcast %25 : vector<16x1xi32> to vector<16x256xi32>
    %27 = arith.select %17, %24, %26 : vector<16x256xi1>, vector<16x256xi32>
    %c4_i32 = arith.constant 4 : i32
    %28 = arith.muli %arg0, %c4_i32 : i32
    %c0_16 = arith.constant 0 : index
    %c0_17 = arith.constant 0 : index
    %29 = vector.load %arg13[%c0_16, %c0_17] : memref<16x256xf32, #tpu.memory_space<vmem>>, vector<16x256xf32>
    %c0_i32_18 = arith.constant 0 : i32
    %30 = arith.addi %28, %c0_i32_18 : i32
    %c16_i32 = arith.constant 16 : i32
    %31 = arith.muli %c0_i32_18, %c16_i32 : i32
    %32 = tpu.assume_multiple %31, 16 : i32
    %33 = arith.index_cast %32 : i32 to index
    %c0_19 = arith.constant 0 : index
    %34 = vector.load %arg12[%33, %c0_19] : memref<64x768xf32, #tpu.memory_space<vmem>>, vector<16x768xf32>
    %35 = arith.truncf %29 : vector<16x256xf32> to vector<16x256xbf16>
    %cst_20 = arith.constant dense<0.000000e+00> : vector<16x768xf32>
    %36 = tpu.matmul %35, %10, %cst_20 {dimension_numbers = #tpu.dot_dimension_numbers<[1], [0], [0], [1], [0, 0, 1, 1], [], []>} : vector<16x256xbf16>, vector<256x768xbf16>, vector<16x768xf32> -> vector<16x768xf32>
    %37 = vector.extract_strided_slice %34 {offsets = [0, 0], sizes = [16, 512], strides = [1, 1]} : vector<16x768xf32> to vector<16x512xf32>
    %38 = vector.extract_strided_slice %36 {offsets = [0, 0], sizes = [16, 512], strides = [1, 1]} : vector<16x768xf32> to vector<16x512xf32>
    %39 = arith.addf %37, %38 : vector<16x512xf32>
    %40 = arith.negf %39 : vector<16x512xf32>
    %41 = math.exp %40 : vector<16x512xf32>
    %cst_21 = arith.constant 1.000000e+00 : f32
    %42 = vector.broadcast %cst_21 : f32 to vector<16x512xf32>
    %43 = arith.addf %42, %41 : vector<16x512xf32>
    %44 = arith.divf %42, %43 : vector<16x512xf32>
    %45 = vector.extract_strided_slice %44 {offsets = [0, 0], sizes = [16, 256], strides = [1, 1]} : vector<16x512xf32> to vector<16x256xf32>
    %46 = vector.extract_strided_slice %44 {offsets = [0, 256], sizes = [16, 256], strides = [1, 1]} : vector<16x512xf32> to vector<16x256xf32>
    %47 = vector.extract_strided_slice %34 {offsets = [0, 512], sizes = [16, 256], strides = [1, 1]} : vector<16x768xf32> to vector<16x256xf32>
    %48 = vector.extract_strided_slice %36 {offsets = [0, 512], sizes = [16, 256], strides = [1, 1]} : vector<16x768xf32> to vector<16x256xf32>
    %49 = arith.addf %48, %13 : vector<16x256xf32>
    %50 = arith.mulf %45, %49 : vector<16x256xf32>
    %51 = arith.addf %47, %50 : vector<16x256xf32>
    %52 = math.tanh %51 : vector<16x256xf32>
    %cst_22 = arith.constant 1.000000e+00 : f32
    %53 = vector.broadcast %cst_22 : f32 to vector<16x256xf32>
    %54 = arith.subf %53, %46 : vector<16x256xf32>
    %55 = arith.mulf %54, %52 : vector<16x256xf32>
    %56 = arith.mulf %46, %29 : vector<16x256xf32>
    %57 = arith.addf %55, %56 : vector<16x256xf32>
    %58 = vector.broadcast %30 : i32 to vector<16x256xi32>
    %59 = arith.cmpi sge, %58, %23 : vector<16x256xi32>
    %60 = vector.broadcast %30 : i32 to vector<16x256xi32>
    %61 = arith.cmpi slt, %60, %27 : vector<16x256xi32>
    %62 = arith.andi %59, %61 : vector<16x256xi1>
    %63 = arith.select %62, %57, %29 : vector<16x256xi1>, vector<16x256xf32>
    %c1_i32 = arith.constant 1 : i32
    %64 = arith.addi %28, %c1_i32 : i32
    %c16_i32_23 = arith.constant 16 : i32
    %65 = arith.muli %c1_i32, %c16_i32_23 : i32
    %66 = tpu.assume_multiple %65, 16 : i32
    %67 = arith.index_cast %66 : i32 to index
    %c0_24 = arith.constant 0 : index
    %68 = vector.load %arg12[%67, %c0_24] : memref<64x768xf32, #tpu.memory_space<vmem>>, vector<16x768xf32>
    %69 = arith.truncf %63 : vector<16x256xf32> to vector<16x256xbf16>
    %cst_25 = arith.constant dense<0.000000e+00> : vector<16x768xf32>
    %70 = tpu.matmul %69, %10, %cst_25 {dimension_numbers = #tpu.dot_dimension_numbers<[1], [0], [0], [1], [0, 0, 1, 1], [], []>} : vector<16x256xbf16>, vector<256x768xbf16>, vector<16x768xf32> -> vector<16x768xf32>
    %71 = vector.extract_strided_slice %68 {offsets = [0, 0], sizes = [16, 512], strides = [1, 1]} : vector<16x768xf32> to vector<16x512xf32>
    %72 = vector.extract_strided_slice %70 {offsets = [0, 0], sizes = [16, 512], strides = [1, 1]} : vector<16x768xf32> to vector<16x512xf32>
    %73 = arith.addf %71, %72 : vector<16x512xf32>
    %74 = arith.negf %73 : vector<16x512xf32>
    %75 = math.exp %74 : vector<16x512xf32>
    %cst_26 = arith.constant 1.000000e+00 : f32
    %76 = vector.broadcast %cst_26 : f32 to vector<16x512xf32>
    %77 = arith.addf %76, %75 : vector<16x512xf32>
    %78 = arith.divf %76, %77 : vector<16x512xf32>
    %79 = vector.extract_strided_slice %78 {offsets = [0, 0], sizes = [16, 256], strides = [1, 1]} : vector<16x512xf32> to vector<16x256xf32>
    %80 = vector.extract_strided_slice %78 {offsets = [0, 256], sizes = [16, 256], strides = [1, 1]} : vector<16x512xf32> to vector<16x256xf32>
    %81 = vector.extract_strided_slice %68 {offsets = [0, 512], sizes = [16, 256], strides = [1, 1]} : vector<16x768xf32> to vector<16x256xf32>
    %82 = vector.extract_strided_slice %70 {offsets = [0, 512], sizes = [16, 256], strides = [1, 1]} : vector<16x768xf32> to vector<16x256xf32>
    %83 = arith.addf %82, %13 : vector<16x256xf32>
    %84 = arith.mulf %79, %83 : vector<16x256xf32>
    %85 = arith.addf %81, %84 : vector<16x256xf32>
    %86 = math.tanh %85 : vector<16x256xf32>
    %cst_27 = arith.constant 1.000000e+00 : f32
    %87 = vector.broadcast %cst_27 : f32 to vector<16x256xf32>
    %88 = arith.subf %87, %80 : vector<16x256xf32>
    %89 = arith.mulf %88, %86 : vector<16x256xf32>
    %90 = arith.mulf %80, %63 : vector<16x256xf32>
    %91 = arith.addf %89, %90 : vector<16x256xf32>
    %92 = vector.broadcast %64 : i32 to vector<16x256xi32>
    %93 = arith.cmpi sge, %92, %23 : vector<16x256xi32>
    %94 = vector.broadcast %64 : i32 to vector<16x256xi32>
    %95 = arith.cmpi slt, %94, %27 : vector<16x256xi32>
    %96 = arith.andi %93, %95 : vector<16x256xi1>
    %97 = arith.select %96, %91, %63 : vector<16x256xi1>, vector<16x256xf32>
    %c2_i32 = arith.constant 2 : i32
    %98 = arith.addi %28, %c2_i32 : i32
    %c16_i32_28 = arith.constant 16 : i32
    %99 = arith.muli %c2_i32, %c16_i32_28 : i32
    %100 = tpu.assume_multiple %99, 16 : i32
    %101 = arith.index_cast %100 : i32 to index
    %c0_29 = arith.constant 0 : index
    %102 = vector.load %arg12[%101, %c0_29] : memref<64x768xf32, #tpu.memory_space<vmem>>, vector<16x768xf32>
    %103 = arith.truncf %97 : vector<16x256xf32> to vector<16x256xbf16>
    %cst_30 = arith.constant dense<0.000000e+00> : vector<16x768xf32>
    %104 = tpu.matmul %103, %10, %cst_30 {dimension_numbers = #tpu.dot_dimension_numbers<[1], [0], [0], [1], [0, 0, 1, 1], [], []>} : vector<16x256xbf16>, vector<256x768xbf16>, vector<16x768xf32> -> vector<16x768xf32>
    %105 = vector.extract_strided_slice %102 {offsets = [0, 0], sizes = [16, 512], strides = [1, 1]} : vector<16x768xf32> to vector<16x512xf32>
    %106 = vector.extract_strided_slice %104 {offsets = [0, 0], sizes = [16, 512], strides = [1, 1]} : vector<16x768xf32> to vector<16x512xf32>
    %107 = arith.addf %105, %106 : vector<16x512xf32>
    %108 = arith.negf %107 : vector<16x512xf32>
    %109 = math.exp %108 : vector<16x512xf32>
    %cst_31 = arith.constant 1.000000e+00 : f32
    %110 = vector.broadcast %cst_31 : f32 to vector<16x512xf32>
    %111 = arith.addf %110, %109 : vector<16x512xf32>
    %112 = arith.divf %110, %111 : vector<16x512xf32>
    %113 = vector.extract_strided_slice %112 {offsets = [0, 0], sizes = [16, 256], strides = [1, 1]} : vector<16x512xf32> to vector<16x256xf32>
    %114 = vector.extract_strided_slice %112 {offsets = [0, 256], sizes = [16, 256], strides = [1, 1]} : vector<16x512xf32> to vector<16x256xf32>
    %115 = vector.extract_strided_slice %102 {offsets = [0, 512], sizes = [16, 256], strides = [1, 1]} : vector<16x768xf32> to vector<16x256xf32>
    %116 = vector.extract_strided_slice %104 {offsets = [0, 512], sizes = [16, 256], strides = [1, 1]} : vector<16x768xf32> to vector<16x256xf32>
    %117 = arith.addf %116, %13 : vector<16x256xf32>
    %118 = arith.mulf %113, %117 : vector<16x256xf32>
    %119 = arith.addf %115, %118 : vector<16x256xf32>
    %120 = math.tanh %119 : vector<16x256xf32>
    %cst_32 = arith.constant 1.000000e+00 : f32
    %121 = vector.broadcast %cst_32 : f32 to vector<16x256xf32>
    %122 = arith.subf %121, %114 : vector<16x256xf32>
    %123 = arith.mulf %122, %120 : vector<16x256xf32>
    %124 = arith.mulf %114, %97 : vector<16x256xf32>
    %125 = arith.addf %123, %124 : vector<16x256xf32>
    %126 = vector.broadcast %98 : i32 to vector<16x256xi32>
    %127 = arith.cmpi sge, %126, %23 : vector<16x256xi32>
    %128 = vector.broadcast %98 : i32 to vector<16x256xi32>
    %129 = arith.cmpi slt, %128, %27 : vector<16x256xi32>
    %130 = arith.andi %127, %129 : vector<16x256xi1>
    %131 = arith.select %130, %125, %97 : vector<16x256xi1>, vector<16x256xf32>
    %c3_i32 = arith.constant 3 : i32
    %132 = arith.addi %28, %c3_i32 : i32
    %c16_i32_33 = arith.constant 16 : i32
    %133 = arith.muli %c3_i32, %c16_i32_33 : i32
    %134 = tpu.assume_multiple %133, 16 : i32
    %135 = arith.index_cast %134 : i32 to index
    %c0_34 = arith.constant 0 : index
    %136 = vector.load %arg12[%135, %c0_34] : memref<64x768xf32, #tpu.memory_space<vmem>>, vector<16x768xf32>
    %137 = arith.truncf %131 : vector<16x256xf32> to vector<16x256xbf16>
    %cst_35 = arith.constant dense<0.000000e+00> : vector<16x768xf32>
    %138 = tpu.matmul %137, %10, %cst_35 {dimension_numbers = #tpu.dot_dimension_numbers<[1], [0], [0], [1], [0, 0, 1, 1], [], []>} : vector<16x256xbf16>, vector<256x768xbf16>, vector<16x768xf32> -> vector<16x768xf32>
    %139 = vector.extract_strided_slice %136 {offsets = [0, 0], sizes = [16, 512], strides = [1, 1]} : vector<16x768xf32> to vector<16x512xf32>
    %140 = vector.extract_strided_slice %138 {offsets = [0, 0], sizes = [16, 512], strides = [1, 1]} : vector<16x768xf32> to vector<16x512xf32>
    %141 = arith.addf %139, %140 : vector<16x512xf32>
    %142 = arith.negf %141 : vector<16x512xf32>
    %143 = math.exp %142 : vector<16x512xf32>
    %cst_36 = arith.constant 1.000000e+00 : f32
    %144 = vector.broadcast %cst_36 : f32 to vector<16x512xf32>
    %145 = arith.addf %144, %143 : vector<16x512xf32>
    %146 = arith.divf %144, %145 : vector<16x512xf32>
    %147 = vector.extract_strided_slice %146 {offsets = [0, 0], sizes = [16, 256], strides = [1, 1]} : vector<16x512xf32> to vector<16x256xf32>
    %148 = vector.extract_strided_slice %146 {offsets = [0, 256], sizes = [16, 256], strides = [1, 1]} : vector<16x512xf32> to vector<16x256xf32>
    %149 = vector.extract_strided_slice %136 {offsets = [0, 512], sizes = [16, 256], strides = [1, 1]} : vector<16x768xf32> to vector<16x256xf32>
    %150 = vector.extract_strided_slice %138 {offsets = [0, 512], sizes = [16, 256], strides = [1, 1]} : vector<16x768xf32> to vector<16x256xf32>
    %151 = arith.addf %150, %13 : vector<16x256xf32>
    %152 = arith.mulf %147, %151 : vector<16x256xf32>
    %153 = arith.addf %149, %152 : vector<16x256xf32>
    %154 = math.tanh %153 : vector<16x256xf32>
    %cst_37 = arith.constant 1.000000e+00 : f32
    %155 = vector.broadcast %cst_37 : f32 to vector<16x256xf32>
    %156 = arith.subf %155, %148 : vector<16x256xf32>
    %157 = arith.mulf %156, %154 : vector<16x256xf32>
    %158 = arith.mulf %148, %131 : vector<16x256xf32>
    %159 = arith.addf %157, %158 : vector<16x256xf32>
    %160 = vector.broadcast %132 : i32 to vector<16x256xi32>
    %161 = arith.cmpi sge, %160, %23 : vector<16x256xi32>
    %162 = vector.broadcast %132 : i32 to vector<16x256xi32>
    %163 = arith.cmpi slt, %162, %27 : vector<16x256xi32>
    %164 = arith.andi %161, %163 : vector<16x256xi1>
    %165 = arith.select %164, %159, %131 : vector<16x256xi1>, vector<16x256xf32>
    %c4_i32_38 = arith.constant 4 : i32
    %c0_39 = arith.constant 0 : index
    %c0_40 = arith.constant 0 : index
    %166 = vector.load %arg13[%c0_39, %c0_40] : memref<16x256xf32, #tpu.memory_space<vmem>>, vector<16x256xf32>
    tpu.vector_store %arg13[%c0_39, %c0_40], %165 {strides = array<i32>} : memref<16x256xf32, #tpu.memory_space<vmem>>, vector<16x256xf32>,
    %c1_i32_41 = arith.constant 1 : i32
    %167 = arith.cmpi eq, %arg0, %c1_i32_41 : i32
    %168 = arith.extui %167 : i1 to i32
    %c0_i32_42 = arith.constant 0 : i32
    %169 = arith.cmpi ne, %168, %c0_i32_42 : i32
    scf.if %169 {
      %c0_43 = arith.constant 0 : index
      %c0_44 = arith.constant 0 : index
      %170 = vector.load %arg7[%c0_43, %c0_44] : memref<256x128xf32, #tpu.memory_space<vmem>>, vector<256x128xf32>
      %cst_45 = arith.constant dense<0.000000e+00> : vector<16x128xf32>
      %171 = tpu.matmul %165, %170, %cst_45 {dimension_numbers = #tpu.dot_dimension_numbers<[1], [0], [0], [1], [0, 0, 1, 1], [], []>} : vector<16x256xf32>, vector<256x128xf32>, vector<16x128xf32> -> vector<16x128xf32>
      %c0_46 = arith.constant 0 : index
      %c0_47 = arith.constant 0 : index
      %172 = vector.load %arg8[%c0_46, %c0_47] : memref<1x128xf32, #tpu.memory_space<vmem>>, vector<1x128xf32>
      %173 = vector.broadcast %172 : vector<1x128xf32> to vector<16x128xf32>
      %174 = arith.addf %171, %173 : vector<16x128xf32>
      %cst_48 = arith.constant 0.000000e+00 : f32
      %175 = vector.broadcast %cst_48 : f32 to vector<16x128xf32>
      %176 = arith.maximumf %174, %175 : vector<16x128xf32>
      %c0_49 = arith.constant 0 : index
      %c0_50 = arith.constant 0 : index
      %177 = vector.load %arg9[%c0_49, %c0_50] : memref<128x128xf32, #tpu.memory_space<vmem>>, vector<128x128xf32>
      %cst_51 = arith.constant dense<0.000000e+00> : vector<16x128xf32>
      %178 = tpu.matmul %176, %177, %cst_51 {dimension_numbers = #tpu.dot_dimension_numbers<[1], [0], [0], [1], [0, 0, 1, 1], [], []>} : vector<16x128xf32>, vector<128x128xf32>, vector<16x128xf32> -> vector<16x128xf32>
      %c0_52 = arith.constant 0 : index
      %c0_53 = arith.constant 0 : index
      %179 = vector.load %arg10[%c0_52, %c0_53] : memref<1x128xf32, #tpu.memory_space<vmem>>, vector<1x128xf32>
      %180 = vector.broadcast %179 : vector<1x128xf32> to vector<16x128xf32>
      %181 = arith.addf %178, %180 : vector<16x128xf32>
      %c0_54 = arith.constant 0 : index
      %c0_55 = arith.constant 0 : index
      %182 = vector.load %arg11[%c0_54, %c0_55] : memref<16x128xf32, #tpu.memory_space<vmem>>, vector<16x128xf32>
      tpu.vector_store %arg11[%c0_54, %c0_55], %181 {strides = array<i32>} : memref<16x128xf32, #tpu.memory_space<vmem>>, vector<16x128xf32>,
    } else {
    }
    return
  }
  func.func @transform_0(%arg0: i32) -> (i32, i32) {
    %c0_i32 = arith.constant 0 : i32
    %c0_i32_0 = arith.constant 0 : i32
    return %arg0, %c0_i32 : i32, i32
  }
  func.func @transform_1(%arg0: i32) -> (i32, i32) {
    %c0_i32 = arith.constant 0 : i32
    %c0_i32_0 = arith.constant 0 : i32
    %c0_i32_1 = arith.constant 0 : i32
    return %c0_i32, %c0_i32_0 : i32, i32
  }
  func.func @transform_2(%arg0: i32) -> (i32, i32) {
    %c0_i32 = arith.constant 0 : i32
    %c0_i32_0 = arith.constant 0 : i32
    %c0_i32_1 = arith.constant 0 : i32
    return %c0_i32, %c0_i32_0 : i32, i32
  }
  func.func @transform_3(%arg0: i32) -> (i32, i32) {
    %c0_i32 = arith.constant 0 : i32
    %c0_i32_0 = arith.constant 0 : i32
    %c0_i32_1 = arith.constant 0 : i32
    return %c0_i32, %c0_i32_0 : i32, i32
  }
  func.func @transform_4(%arg0: i32) -> (i32, i32) {
    %c0_i32 = arith.constant 0 : i32
    %c0_i32_0 = arith.constant 0 : i32
    %c0_i32_1 = arith.constant 0 : i32
    return %c0_i32, %c0_i32_0 : i32, i32
  }
  func.func @transform_5(%arg0: i32) -> (i32, i32) {
    %c0_i32 = arith.constant 0 : i32
    %c0_i32_0 = arith.constant 0 : i32
    %c0_i32_1 = arith.constant 0 : i32
    return %c0_i32, %c0_i32_0 : i32, i32
  }
  func.func @transform_6(%arg0: i32) -> (i32, i32) {
    %c0_i32 = arith.constant 0 : i32
    %c0_i32_0 = arith.constant 0 : i32
    %c0_i32_1 = arith.constant 0 : i32
    return %c0_i32, %c0_i32_0 : i32, i32
  }
  func.func @transform_7(%arg0: i32) -> (i32, i32) {
    %c0_i32 = arith.constant 0 : i32
    %c0_i32_0 = arith.constant 0 : i32
    %c0_i32_1 = arith.constant 0 : i32
    return %c0_i32, %c0_i32_0 : i32, i32
  }
  func.func @transform_8(%arg0: i32) -> (i32, i32) {
    %c0_i32 = arith.constant 0 : i32
    %c0_i32_0 = arith.constant 0 : i32
    %c0_i32_1 = arith.constant 0 : i32
    return %c0_i32, %c0_i32_0 : i32, i32
  }
  func.func @transform_9(%arg0: i32) -> (i32, i32) {
    %c0_i32 = arith.constant 0 : i32
    %c0_i32_0 = arith.constant 0 : i32
    %c0_i32_1 = arith.constant 0 : i32
    return %c0_i32, %c0_i32_0 : i32, i32
  }
  func.func @transform_10(%arg0: i32) -> (i32, i32) {
    %c0_i32 = arith.constant 0 : i32
    %c0_i32_0 = arith.constant 0 : i32
    %c0_i32_1 = arith.constant 0 : i32
    return %c0_i32, %c0_i32_0 : i32, i32
  }
}

</mosaic_0001>

<llo_original>
// kernel: tpu_custom_call.1
$region0: #{tpu_custom_call.1}
  #allocation0 [shape = 'u32[]', space=smem, size = 0x4, offset = 0x4, fixed_abs, tag = 'smem constant byte address 0x4 - core index']
  #allocation1 [shape = 'u32[72,128]{1,0:T(1,128)}', space=vmem, size = 0x9000, scoped, tag = 'internal scratch']
  #allocation2 [shape = 'f32[64,768]{1,0:T(8,128)}', space=vmem, size = 0x30000, scoped, tag = 'scratch operand']
  #allocation3 [shape = 'f32[16,256]{1,0:T(8,128)}', space=vmem, size = 0x4000, scoped, tag = 'scratch operand']
  %s0 = inlined_call_operand.vmem [shape: bf16[128,32], index: 0, kind: input, shape index: {}]
  %s1 = inlined_call_operand.vmem [shape: s32[16,1], index: 1, kind: input, shape index: {}]
  %s2 = inlined_call_operand.hbm [shape: bf16[32,768], index: 2, kind: input, shape index: {}]
  %s3 = inlined_call_operand.vmem [shape: f32[1,768], index: 3, kind: input, shape index: {}]
  %s4 = inlined_call_operand.hbm [shape: bf16[256,768], index: 4, kind: input, shape index: {}]
  %s5 = inlined_call_operand.vmem [shape: f32[1,256], index: 5, kind: input, shape index: {}]
  %s6 = inlined_call_operand.hbm [shape: f32[256,128], index: 6, kind: input, shape index: {}]
  %s7 = inlined_call_operand.vmem [shape: f32[1,128], index: 7, kind: input, shape index: {}]
  %s8 = inlined_call_operand.hbm [shape: f32[128,128], index: 8, kind: input, shape index: {}]
  %s9 = inlined_call_operand.vmem [shape: f32[1,128], index: 9, kind: input, shape index: {}]
  %s10 = inlined_call_operand.hbm [shape: f32[16,128], index: 10, kind: output, shape index: {}]
  %s11 = sld [smem:[#allocation0]]
  $region97: #{tpu_custom_call.1} parent=0
    _
  %s13 = ssub.s32 1, %s11
  %s14 = scalar_select 0, %s13, %s11
  $region1: #{tpu_custom_call.1} parent=0
    #allocation4 [shape = 'u8[49152]{0}', space=vmem, size = 0xc000, scoped, tag = 'input window, operand 2, single buffered']
    #allocation5 [shape = 's32[2]{0}', space=sflag, size = 0x8, scoped, tag = 'scoped memory for tpu_custom_call.1']
    #allocation6 [shape = 's32[2]{0}', space=sflag, size = 0x8, scoped, tag = 'scoped memory for tpu_custom_call.1']
    #allocation7 [shape = 'u8[393216]{0}', space=vmem, size = 0x60000, scoped, tag = 'input window, operand 4, single buffered']
    #allocation8 [shape = 's32[1]{0}', space=sflag, size = 0x4, scoped, tag = 'scoped memory for tpu_custom_call.1']
    #allocation9 [shape = 'u8[131072]{0}', space=vmem, size = 0x20000, scoped, tag = 'input window, operand 6, single buffered']
    #allocation10 [shape = 'u8[65536]{0}', space=vmem, size = 0x10000, scoped, tag = 'input window, operand 8, single buffered']
    #allocation11 [shape = 's32[1]{0}', space=sflag, size = 0x4, scoped, tag = 'scoped memory for tpu_custom_call.1']
    #allocation12 [shape = 'u8[8192]{0}', space=vmem, size = 0x2000, scoped, tag = 'output window, operand 0, single buffered']
    %15 = vsyncpa [#allocation5], 0
    %16 = vsyncpa [#allocation8], 0
    %17 = vsyncpa [#allocation11], 0
    %18 = vsyncpa [#allocation6], 0
    loop: start=0, step=1, limit=4
    $region2: #{tpu_custom_call.1} parent=1 // loop_pre_header
      _
    $region3: #{tpu_custom_call.1} parent=1 // loop_header
      %s20 = sphi 0, %s24
      %p21 = scmp.ge.s32.totalorder %s20, 4
      %s30 = sphi 0, %s32
      %s33 = sphi 0, %s30
      %s34 = sphi 0, %s33
      %s50 = sphi 0, %s34
      %s54 = sphi 0, %s54
      %s56 = sphi 0, %s54
      %s57 = sphi 0, %s56
      %s71 = sphi 0, %s57
      %s75 = sphi 0, %s75
      %s77 = sphi 0, %s75
      %s78 = sphi 0, %s77
      %s92 = sphi 0, %s78
      %s96 = sphi 0, %s96
      %s98 = sphi 0, %s96
      %s99 = sphi 0, %s98
      %s113 = sphi 0, %s99
      %s117 = sphi 0, %s117
      %s119 = sphi 0, %s117
      %s120 = sphi 0, %s119
      %s134 = sphi 0, %s120
      %s138 = sphi 0, %s138
      %s140 = sphi 0, %s138
      %s141 = sphi 0, %s140
      %s155 = sphi 0, %s141
      %s159 = sphi 0, %s159
      %s161 = sphi 0, %s159
      %s162 = sphi 0, %s161
      %s176 = sphi 0, %s162
      %s180 = sphi 0, %s180
      %s182 = sphi 0, %s180
      %s183 = sphi 0, %s182
      %s197 = sphi 0, %s183
      %s201 = sphi 0, %s201
      %s203 = sphi 0, %s201
      %s204 = sphi 0, %s203
      %s218 = sphi 0, %s204
      %s222 = sphi 0, %s222
      %s224 = sphi 0, %s222
      %s225 = sphi 0, %s224
      %s239 = sphi 0, %s225
      %s243 = sphi 0, %s243
      %s245 = sphi 0, %s243
      %s246 = sphi 0, %s245
      %s260 = sphi 0, %s246
    $region4: #{tpu_custom_call.1} parent=1 // loop_header_branch
      %23 = sbr.rel (%p21) target = $region8
    $region5: #{tpu_custom_call.1} parent=1 // loop_body
      %s25 = ssub.s32 %s20, 1
      %s26 = ssub.s32 %s20, 2
      %s27 = sadd.s32 %s20, 1
      %s28 = ssub.s32 %s20, %s27
      %p29 = scmp.eq.s32.totalorder %s28, 0
      %s31 = sadd.s32 %s30, 1
      %s32 = scalar_select %p29, %s30, %s31
      %p35 = pneg %p29
      %p36 = scmp.eq.s32.totalorder %s20, 1
      %p37 = por %p35, %p36
      %p38 = scmp.ne.s32.totalorder %s30, %s33
      %p39 = scmp.eq.s32.totalorder %s20, 0
      %p40 = por %p38, %p39
      %p41 = scmp.ne.s32.totalorder %s30, %s33
      %p42 = scmp.eq.s32.totalorder %s25, 1
      %p43 = por %p41, %p42
      %p44 = scmp.ne.s32.totalorder %s33, %s34
      %p45 = scmp.eq.s32.totalorder %s25, 0
      %p46 = por %p44, %p45
      %p47 = scmp.ne.s32.totalorder %s33, %s34
      %p48 = scmp.eq.s32.totalorder %s26, 1
      %p49 = por %p47, %p48
      %p51 = scmp.ne.s32.totalorder %s34, %s50
      %p52 = scmp.eq.s32.totalorder %s26, 0
      %p53 = por %p51, %p52
      %s55 = sadd.s32 %s54, 1
      %p58 = scmp.eq.s32.totalorder %s20, 1
      %p59 = scmp.ne.s32.totalorder %s54, %s56
      %p60 = scmp.eq.s32.totalorder %s20, 0
      %p61 = por %p59, %p60
      %p62 = scmp.ne.s32.totalorder %s54, %s56
      %p63 = scmp.eq.s32.totalorder %s25, 1
      %p64 = por %p62, %p63
      %p65 = scmp.ne.s32.totalorder %s56, %s57
      %p66 = scmp.eq.s32.totalorder %s25, 0
      %p67 = por %p65, %p66
      %p68 = scmp.ne.s32.totalorder %s56, %s57
      %p69 = scmp.eq.s32.totalorder %s26, 1
      %p70 = por %p68, %p69
      %p72 = scmp.ne.s32.totalorder %s57, %s71
      %p73 = scmp.eq.s32.totalorder %s26, 0
      %p74 = por %p72, %p73
      %s76 = sadd.s32 %s75, 1
      %p79 = scmp.eq.s32.totalorder %s20, 1
      %p80 = scmp.ne.s32.totalorder %s75, %s77
      %p81 = scmp.eq.s32.totalorder %s20, 0
      %p82 = por %p80, %p81
      %p83 = scmp.ne.s32.totalorder %s75, %s77
      %p84 = scmp.eq.s32.totalorder %s25, 1
      %p85 = por %p83, %p84
      %p86 = scmp.ne.s32.totalorder %s77, %s78
      %p87 = scmp.eq.s32.totalorder %s25, 0
      %p88 = por %p86, %p87
      %p89 = scmp.ne.s32.totalorder %s77, %s78
      %p90 = scmp.eq.s32.totalorder %s26, 1
      %p91 = por %p89, %p90
      %p93 = scmp.ne.s32.totalorder %s78, %s92
      %p94 = scmp.eq.s32.totalorder %s26, 0
      %p95 = por %p93, %p94
      %s97 = sadd.s32 %s96, 1
      %p100 = scmp.eq.s32.totalorder %s20, 1
      %p101 = scmp.ne.s32.totalorder %s96, %s98
      %p102 = scmp.eq.s32.totalorder %s20, 0
      %p103 = por %p101, %p102
      %p104 = scmp.ne.s32.totalorder %s96, %s98
      %p105 = scmp.eq.s32.totalorder %s25, 1
      %p106 = por %p104, %p105
      %p107 = scmp.ne.s32.totalorder %s98, %s99
      %p108 = scmp.eq.s32.totalorder %s25, 0
      %p109 = por %p107, %p108
      %p110 = scmp.ne.s32.totalorder %s98, %s99
      %p111 = scmp.eq.s32.totalorder %s26, 1
      %p112 = por %p110, %p111
      %p114 = scmp.ne.s32.totalorder %s99, %s113
      %p115 = scmp.eq.s32.totalorder %s26, 0
      %p116 = por %p114, %p115
      %s118 = sadd.s32 %s117, 1
      %p121 = scmp.eq.s32.totalorder %s20, 1
      %p122 = scmp.ne.s32.totalorder %s117, %s119
      %p123 = scmp.eq.s32.totalorder %s20, 0
      %p124 = por %p122, %p123
      %p125 = scmp.ne.s32.totalorder %s117, %s119
      %p126 = scmp.eq.s32.totalorder %s25, 1
      %p127 = por %p125, %p126
      %p128 = scmp.ne.s32.totalorder %s119, %s120
      %p129 = scmp.eq.s32.totalorder %s25, 0
      %p130 = por %p128, %p129
      %p131 = scmp.ne.s32.totalorder %s119, %s120
      %p132 = scmp.eq.s32.totalorder %s26, 1
      %p133 = por %p131, %p132
      %p135 = scmp.ne.s32.totalorder %s120, %s134
      %p136 = scmp.eq.s32.totalorder %s26, 0
      %p137 = por %p135, %p136
      %s139 = sadd.s32 %s138, 1
      %p142 = scmp.eq.s32.totalorder %s20, 1
      %p143 = scmp.ne.s32.totalorder %s138, %s140
      %p144 = scmp.eq.s32.totalorder %s20, 0
      %p145 = por %p143, %p144
      %p146 = scmp.ne.s32.totalorder %s138, %s140
      %p147 = scmp.eq.s32.totalorder %s25, 1
      %p148 = por %p146, %p147
      %p149 = scmp.ne.s32.totalorder %s140, %s141
      %p150 = scmp.eq.s32.totalorder %s25, 0
      %p151 = por %p149, %p150
      %p152 = scmp.ne.s32.totalorder %s140, %s141
      %p153 = scmp.eq.s32.totalorder %s26, 1
      %p154 = por %p152, %p153
      %p156 = scmp.ne.s32.totalorder %s141, %s155
      %p157 = scmp.eq.s32.totalorder %s26, 0
      %p158 = por %p156, %p157
      %s160 = sadd.s32 %s159, 1
      %p163 = scmp.eq.s32.totalorder %s20, 1
      %p164 = scmp.ne.s32.totalorder %s159, %s161
      %p165 = scmp.eq.s32.totalorder %s20, 0
      %p166 = por %p164, %p165
      %p167 = scmp.ne.s32.totalorder %s159, %s161
      %p168 = scmp.eq.s32.totalorder %s25, 1
      %p169 = por %p167, %p168
      %p170 = scmp.ne.s32.totalorder %s161, %s162
      %p171 = scmp.eq.s32.totalorder %s25, 0
      %p172 = por %p170, %p171
      %p173 = scmp.ne.s32.totalorder %s161, %s162
      %p174 = scmp.eq.s32.totalorder %s26, 1
      %p175 = por %p173, %p174
      %p177 = scmp.ne.s32.totalorder %s162, %s176
      %p178 = scmp.eq.s32.totalorder %s26, 0
      %p179 = por %p177, %p178
      %s181 = sadd.s32 %s180, 1
      %p184 = scmp.eq.s32.totalorder %s20, 1
      %p185 = scmp.ne.s32.totalorder %s180, %s182
      %p186 = scmp.eq.s32.totalorder %s20, 0
      %p187 = por %p185, %p186
      %p188 = scmp.ne.s32.totalorder %s180, %s182
      %p189 = scmp.eq.s32.totalorder %s25, 1
      %p190 = por %p188, %p189
      %p191 = scmp.ne.s32.totalorder %s182, %s183
      %p192 = scmp.eq.s32.totalorder %s25, 0
      %p193 = por %p191, %p192
      %p194 = scmp.ne.s32.totalorder %s182, %s183
      %p195 = scmp.eq.s32.totalorder %s26, 1
      %p196 = por %p194, %p195
      %p198 = scmp.ne.s32.totalorder %s183, %s197
      %p199 = scmp.eq.s32.totalorder %s26, 0
      %p200 = por %p198, %p199
      %s202 = sadd.s32 %s201, 1
      %p205 = scmp.eq.s32.totalorder %s20, 1
      %p206 = scmp.ne.s32.totalorder %s201, %s203
      %p207 = scmp.eq.s32.totalorder %s20, 0
      %p208 = por %p206, %p207
      %p209 = scmp.ne.s32.totalorder %s201, %s203
      %p210 = scmp.eq.s32.totalorder %s25, 1
      %p211 = por %p209, %p210
      %p212 = scmp.ne.s32.totalorder %s203, %s204
      %p213 = scmp.eq.s32.totalorder %s25, 0
      %p214 = por %p212, %p213
      %p215 = scmp.ne.s32.totalorder %s203, %s204
      %p216 = scmp.eq.s32.totalorder %s26, 1
      %p217 = por %p215, %p216
      %p219 = scmp.ne.s32.totalorder %s204, %s218
      %p220 = scmp.eq.s32.totalorder %s26, 0
      %p221 = por %p219, %p220
      %s223 = sadd.s32 %s222, 1
      %p226 = scmp.eq.s32.totalorder %s20, 1
      %p227 = scmp.ne.s32.totalorder %s222, %s224
      %p228 = scmp.eq.s32.totalorder %s20, 0
      %p229 = por %p227, %p228
      %p230 = scmp.ne.s32.totalorder %s222, %s224
      %p231 = scmp.eq.s32.totalorder %s25, 1
      %p232 = por %p230, %p231
      %p233 = scmp.ne.s32.totalorder %s224, %s225
      %p234 = scmp.eq.s32.totalorder %s25, 0
      %p235 = por %p233, %p234
      %p236 = scmp.ne.s32.totalorder %s224, %s225
      %p237 = scmp.eq.s32.totalorder %s26, 1
      %p238 = por %p236, %p237
      %p240 = scmp.ne.s32.totalorder %s225, %s239
      %p241 = scmp.eq.s32.totalorder %s26, 0
      %p242 = por %p240, %p241
      %s244 = sadd.s32 %s243, 1
      %p247 = scmp.eq.s32.totalorder %s20, 1
      %p248 = scmp.ne.s32.totalorder %s243, %s245
      %p249 = scmp.eq.s32.totalorder %s20, 0
      %p250 = por %p248, %p249
      %p251 = scmp.ne.s32.totalorder %s243, %s245
      %p252 = scmp.eq.s32.totalorder %s25, 1
      %p253 = por %p251, %p252
      %p254 = scmp.ne.s32.totalorder %s245, %s246
      %p255 = scmp.eq.s32.totalorder %s25, 0
      %p256 = por %p254, %p255
      %p257 = scmp.ne.s32.totalorder %s245, %s246
      %p258 = scmp.eq.s32.totalorder %s26, 1
      %p259 = por %p257, %p258
      %p261 = scmp.ne.s32.totalorder %s246, %s260
      %p262 = scmp.eq.s32.totalorder %s26, 0
      %p263 = por %p261, %p262
      %p264 = scmp.le.s32.totalorder 1, %s20
      %p265 = scmp.lt.s32.totalorder %s20, 3
      %p266 = pnand %p264, %p265
      %p267 = pneg %p266
      // Predicated region
      $region9: #{tpu_custom_call.1} parent=5 // pred_check
        _
      $region10: #{tpu_custom_call.1} parent=5 // pred_check_branch
        %269 = sbr.rel (%p266) target = $region12
      $region11: #{tpu_custom_call.1} parent=5 // pred_region
        %s270 = ssub.s32 %s20, 1
        // Predicated region
        $region13: #{tpu_custom_call.1} parent=11 // pred_check
          %p271 = pneg %p67
        $region14: #{tpu_custom_call.1} parent=11 // pred_check_branch
          %273 = sbr.rel (%p271) target = $region16
        $region15: #{tpu_custom_call.1} parent=11 // pred_region
          _
        $region16: #{tpu_custom_call.1} parent=11 // pred_fallthru
          _
        // Predicated region
        $region17: #{tpu_custom_call.1} parent=11 // pred_check
          %p274 = pneg %p88
        $region18: #{tpu_custom_call.1} parent=11 // pred_check_branch
          %276 = sbr.rel (%p274) target = $region20
        $region19: #{tpu_custom_call.1} parent=11 // pred_region
          %278 = vsyncadd [#allocation5], 0
          %s279 = sshll.u32 %s2, 4
          %s280 = int_to_ptr.hbm [resolvable:$true] %s279
          %s281 = sshll.u32 [#allocation4], 4
          %s282 = int_to_ptr.vmem [resolvable:$true] %s281
          %287 = dma.hbm_to_vmem [thread:$0]  %s280, 1536, %s282, [#allocation5], 384, 384, 24
        $region20: #{tpu_custom_call.1} parent=11 // pred_fallthru
          _
        // Predicated region
        $region21: #{tpu_custom_call.1} parent=11 // pred_check
          %p288 = pneg %p109
        $region22: #{tpu_custom_call.1} parent=11 // pred_check_branch
          %290 = sbr.rel (%p288) target = $region24
        $region23: #{tpu_custom_call.1} parent=11 // pred_region
          _
        $region24: #{tpu_custom_call.1} parent=11 // pred_fallthru
          _
        // Predicated region
        $region25: #{tpu_custom_call.1} parent=11 // pred_check
          %p291 = pneg %p130
        $region26: #{tpu_custom_call.1} parent=11 // pred_check_branch
          %293 = sbr.rel (%p291) target = $region28
        $region27: #{tpu_custom_call.1} parent=11 // pred_region
          %295 = vsyncadd [#allocation8], 0
          %s296 = sshll.u32 %s4, 4
          %s297 = int_to_ptr.hbm [resolvable:$true] %s296
          %s298 = sshll.u32 [#allocation7], 4
          %s299 = int_to_ptr.vmem [resolvable:$true] %s298
          %304 = dma.hbm_to_vmem [thread:$0]  %s297, 12288, %s299, [#allocation8], 384, 384, 24
        $region28: #{tpu_custom_call.1} parent=11 // pred_fallthru
          _
        // Predicated region
        $region29: #{tpu_custom_call.1} parent=11 // pred_check
          %p305 = pneg %p151
        $region30: #{tpu_custom_call.1} parent=11 // pred_check_branch
          %307 = sbr.rel (%p305) target = $region32
        $region31: #{tpu_custom_call.1} parent=11 // pred_region
          _
        $region32: #{tpu_custom_call.1} parent=11 // pred_fallthru
          _
        // Predicated region
        $region33: #{tpu_custom_call.1} parent=11 // pred_check
          %p308 = pneg %p172
        $region34: #{tpu_custom_call.1} parent=11 // pred_check_branch
          %310 = sbr.rel (%p308) target = $region36
        $region35: #{tpu_custom_call.1} parent=11 // pred_region
          %312 = vsyncadd [#allocation8], 0
          %s313 = sshll.u32 %s6, 4
          %s314 = int_to_ptr.hbm [resolvable:$true] %s313
          %s315 = sshll.u32 [#allocation9], 4
          %s316 = int_to_ptr.vmem [resolvable:$true] %s315
          %321 = dma.hbm_to_vmem [thread:$0]  %s314, 4096, %s316, [#allocation8], 128, 128, 8
        $region36: #{tpu_custom_call.1} parent=11 // pred_fallthru
          _
        // Predicated region
        $region37: #{tpu_custom_call.1} parent=11 // pred_check
          %p322 = pneg %p193
        $region38: #{tpu_custom_call.1} parent=11 // pred_check_branch
          %324 = sbr.rel (%p322) target = $region40
        $region39: #{tpu_custom_call.1} parent=11 // pred_region
          _
        $region40: #{tpu_custom_call.1} parent=11 // pred_fallthru
          _
        // Predicated region
        $region41: #{tpu_custom_call.1} parent=11 // pred_check
          %p325 = pneg %p214
        $region42: #{tpu_custom_call.1} parent=11 // pred_check_branch
          %327 = sbr.rel (%p325) target = $region44
        $region43: #{tpu_custom_call.1} parent=11 // pred_region
          %329 = vsyncadd [#allocation11], 0
          %s330 = sshll.u32 %s8, 4
          %s331 = int_to_ptr.hbm [resolvable:$true] %s330
          %s332 = sshll.u32 [#allocation10], 4
          %s333 = int_to_ptr.vmem [resolvable:$true] %s332
          %338 = dma.hbm_to_vmem [thread:$0]  %s331, 2048, %s333, [#allocation11], 128, 128, 8
        $region44: #{tpu_custom_call.1} parent=11 // pred_fallthru
          _
        // Predicated region
        $region45: #{tpu_custom_call.1} parent=11 // pred_check
          %p339 = pneg %p235
        $region46: #{tpu_custom_call.1} parent=11 // pred_check_branch
          %341 = sbr.rel (%p339) target = $region48
        $region47: #{tpu_custom_call.1} parent=11 // pred_region
          _
        $region48: #{tpu_custom_call.1} parent=11 // pred_fallthru
          _
      $region12: #{tpu_custom_call.1} parent=5 // pred_fallthru
        _
      %p342 = scmp.lt.s32.totalorder %s20, 2
      // Predicated region
      $region49: #{tpu_custom_call.1} parent=5 // pred_check
        %p343 = pneg %p342
      $region50: #{tpu_custom_call.1} parent=5 // pred_check_branch
        %345 = sbr.rel (%p343) target = $region52
      $region51: #{tpu_custom_call.1} parent=5 // pred_region
        // Predicated region
        $region53: #{tpu_custom_call.1} parent=51 // pred_check
          %p346 = pneg %p40
        $region54: #{tpu_custom_call.1} parent=51 // pred_check_branch
          %348 = sbr.rel (%p346) target = $region56
        $region55: #{tpu_custom_call.1} parent=51 // pred_region
          %s349 = smul.u32 8, %s20
          %p350 = scmp.lt.s32.totalorder %s349, 15
          %s351 = scalar_select %p350, %s349, 15
          %s352 = smul.addr %s351, 4
          %s353 = scalar_lea.vmem %s0, %s352
          %s354 = smul.u32 8, %s20
        $region56: #{tpu_custom_call.1} parent=51 // pred_fallthru
          _
      $region52: #{tpu_custom_call.1} parent=5 // pred_fallthru
        _
      %p355 = scmp.le.s32.totalorder 1, %s20
      %p356 = scmp.lt.s32.totalorder %s20, 3
      %p357 = pnand %p355, %p356
      %p358 = pneg %p357
      // Predicated region
      $region57: #{tpu_custom_call.1} parent=5 // pred_check
        _
      $region58: #{tpu_custom_call.1} parent=5 // pred_check_branch
        %360 = sbr.rel (%p357) target = $region60
      $region59: #{tpu_custom_call.1} parent=5 // pred_region
        %s361 = ssub.s32 %s20, 1
        // Predicated region
        $region61: #{tpu_custom_call.1} parent=59 // pred_check
          %p362 = pneg %p88
        $region62: #{tpu_custom_call.1} parent=59 // pred_check_branch
          %364 = sbr.rel (%p362) target = $region64
        $region63: #{tpu_custom_call.1} parent=59 // pred_region
          %366 = dma.done [#allocation5], 1536
        $region64: #{tpu_custom_call.1} parent=59 // pred_fallthru
          _
        // Predicated region
        $region65: #{tpu_custom_call.1} parent=59 // pred_check
          %p367 = pneg %p130
        $region66: #{tpu_custom_call.1} parent=59 // pred_check_branch
          %369 = sbr.rel (%p367) target = $region68
        $region67: #{tpu_custom_call.1} parent=59 // pred_region
          %371 = dma.done [#allocation8], 12288
        $region68: #{tpu_custom_call.1} parent=59 // pred_fallthru
          _
        // Predicated region
        $region69: #{tpu_custom_call.1} parent=59 // pred_check
          %p372 = pneg %p172
        $region70: #{tpu_custom_call.1} parent=59 // pred_check_branch
          %374 = sbr.rel (%p372) target = $region72
        $region71: #{tpu_custom_call.1} parent=59 // pred_region
          %376 = dma.done [#allocation8], 4096
        $region72: #{tpu_custom_call.1} parent=59 // pred_fallthru
          _
        // Predicated region
        $region73: #{tpu_custom_call.1} parent=59 // pred_check
          %p377 = pneg %p214
        $region74: #{tpu_custom_call.1} parent=59 // pred_check_branch
          %379 = sbr.rel (%p377) target = $region76
        $region75: #{tpu_custom_call.1} parent=59 // pred_region
          %381 = dma.done [#allocation11], 2048
        $region76: #{tpu_custom_call.1} parent=59 // pred_fallthru
          _
        %s382 = smul.u32 8, %s25
        %p383 = scmp.lt.s32.totalorder %s382, 15
        %s384 = scalar_select %p383, %s382, 15
        %s385 = smul.addr %s384, 4
        %s386 = scalar_lea.vmem %s0, %s385
        %p387 = pneg %p46
        %p388 = pneg %p43
        %p389 = pneg %p67
        %p390 = pneg %p64
        %p391 = pneg %p88
        %p392 = pneg %p85
        %p393 = pneg %p109
        %p394 = pneg %p106
        %p395 = pneg %p130
        %p396 = pneg %p127
        %p397 = pneg %p151
        %p398 = pneg %p148
        %p399 = pneg %p172
        %p400 = pneg %p169
        %p401 = pneg %p193
        %p402 = pneg %p190
        %p403 = pneg %p214
        %p404 = pneg %p211
        %p405 = pneg %p235
        %p406 = pneg %p232
        %p407 = pneg %p256
        %p408 = pneg %p253
        %s409 = smul.u32 8, %s25
        %p410 = scmp.lt.s32.totalorder %s409, 15
        %s411 = scalar_select %p410, %s409, 15
        %s412 = smul.addr %s411, 4
        %s413 = scalar_lea.vmem %s0, %s412
        %s414 = smul.u32 8, %s25
        %p416 = scmp.eq.s32.totalorder %s25, 0
        // Predicated region
        $region77: #{tpu_custom_call.1} parent=59 // pred_check
          %p417 = pneg %p416
        $region78: #{tpu_custom_call.1} parent=59 // pred_check_branch
          %419 = sbr.rel (%p417) target = $region80
        $region79: #{tpu_custom_call.1} parent=59 // pred_region
          %420 = vst [vmem:[#allocation3] sm:$0xff] 0.0
          %421 = vst [vmem:[#allocation3 + $0x8] sm:$0xff] 0.0
          %422 = vst [vmem:[#allocation3 + $0x10] sm:$0xff] 0.0
          %423 = vst [vmem:[#allocation3 + $0x18] sm:$0xff] 0.0
        $region80: #{tpu_custom_call.1} parent=59 // pred_fallthru
          _
        %v424 = vld [vmem:[%s413] sm:$0xf]
        %v425 = vld [vmem:[%s413 + $0x4] sm:$0xf]
        %v426 = vld [vmem:[%s413 + $0x8] sm:$0xf]
        %v427 = vld [vmem:[%s413 + $0xc] sm:$0xf]
        %v428 = vld [vmem:[%s413 + $0x10] sm:$0xf]
        %v429 = vld [vmem:[%s413 + $0x14] sm:$0xf]
        %v430 = vld [vmem:[%s413 + $0x18] sm:$0xf]
        %v431 = vld [vmem:[%s413 + $0x1c] sm:$0xf]
        %v432 = vld [vmem:[#allocation4] sm:$0xff]
        %v433 = vld [vmem:[#allocation4 + $0x8] sm:$0xff]
        %v434 = vld [vmem:[#allocation4 + $0x10] sm:$0xff]
        %v435 = vld [vmem:[#allocation4 + $0x18] sm:$0xff]
        %v436 = vld [vmem:[#allocation4 + $0x20] sm:$0xff]
        %v437 = vld [vmem:[#allocation4 + $0x28] sm:$0xff]
        %v438 = vld [vmem:[#allocation4 + $0x30] sm:$0xff]
        %v439 = vld [vmem:[#allocation4 + $0x38] sm:$0xff]
        %v440 = vld [vmem:[#allocation4 + $0x40] sm:$0xff]
        %v441 = vld [vmem:[#allocation4 + $0x48] sm:$0xff]
        %v442 = vld [vmem:[#allocation4 + $0x50] sm:$0xff]
        %v443 = vld [vmem:[#allocation4 + $0x58] sm:$0xff]
        %v444 = vld [vmem:[%s3] sm:$0x3f]
        %v446 = vperm.slane %v444, 0
        %v447 = vperm.slane %v444, 1
        %v448 = vperm.slane %v444, 2
        %v449 = vperm.slane %v444, 3
        %v450 = vperm.slane %v444, 4
        %v451 = vperm.slane %v444, 5
        %v466 = vunpack.c.l.b16 %v424
        %v467 = vunpack.c.l.b16 %v425
        %v468 = vunpack.c.l.b16 %v426
        %v469 = vunpack.c.l.b16 %v427
        %v470 = vunpack.c.l.b16 %v428
        %v471 = vunpack.c.l.b16 %v429
        %v472 = vunpack.c.l.b16 %v430
        %v473 = vunpack.c.l.b16 %v431
        %v474 = vpack.c.b16 %v467, %v466
        %v475 = vpack.c.b16 %v469, %v468
        %v476 = vpack.c.b16 %v471, %v470
        %v477 = vpack.c.b16 %v473, %v472
        %v490 = vunpack.c.l.b16 %v432
        %v491 = vunpack.c.h.b16 %v432
        %v492 = vunpack.c.l.b16 %v433
        %v493 = vunpack.c.h.b16 %v433
        %v494 = vunpack.c.l.b16 %v434
        %v495 = vunpack.c.h.b16 %v434
        %v496 = vunpack.c.l.b16 %v435
        %v497 = vunpack.c.h.b16 %v435
        %v498 = vunpack.c.l.b16 %v436
        %v499 = vunpack.c.h.b16 %v436
        %v500 = vunpack.c.l.b16 %v437
        %v501 = vunpack.c.h.b16 %v437
        %v502 = vunpack.c.l.b16 %v438
        %v503 = vunpack.c.h.b16 %v438
        %v504 = vunpack.c.l.b16 %v439
        %v505 = vunpack.c.h.b16 %v439
        %v506 = vunpack.c.l.b16 %v440
        %v507 = vunpack.c.h.b16 %v440
        %v508 = vunpack.c.l.b16 %v441
        %v509 = vunpack.c.h.b16 %v441
        %v510 = vunpack.c.l.b16 %v442
        %v511 = vunpack.c.h.b16 %v442
        %v512 = vunpack.c.l.b16 %v443
        %v513 = vunpack.c.h.b16 %v443
        %v514 = vpack.c.b16 %v496, %v490
        %v515 = vpack.c.b16 %v497, %v491
        %v516 = vpack.c.b16 %v498, %v492
        %v517 = vpack.c.b16 %v499, %v493
        %v518 = vpack.c.b16 %v500, %v494
        %v519 = vpack.c.b16 %v501, %v495
        %v520 = vpack.c.b16 %v508, %v502
        %v521 = vpack.c.b16 %v509, %v503
        %v522 = vpack.c.b16 %v510, %v504
        %v523 = vpack.c.b16 %v511, %v505
        %v524 = vpack.c.b16 %v512, %v506
        %v525 = vpack.c.b16 %v513, %v507
        %vm538 = vcmask 261120
        %v540 = vsel %vm538, %v474, 0
        %v543 = vsel %vm538, %v475, 0
        %v546 = vsel %vm538, %v476, 0
        %v549 = vsel %vm538, %v477, 0
        %551 = vmatpush.bf16.msra.mxu0 0
        %552 = vmatpush.bf16.msra.mxu0 0
        %553 = vmatpush.bf16.msra.mxu0 0
        %554 = vmatpush.bf16.msra.mxu0 0
        %555 = vmatpush.bf16.msra.mxu0 0
        %556 = vmatpush.bf16.msra.mxu0 0
        %557 = vmatpush.bf16.msra.mxu0 %v520
        %558 = vmatpush.bf16.msra.mxu0 %v514
        %559 = vmatmul.bf16.gmra.mxu0 %v540
        %v560 = vpop.f32.mrf.mxu0
        %v561 = vadd.f32 %v446, %v560
        %v562 = vpop.f32.mrf.mxu0
        %v563 = vadd.f32 %v446, %v562
        %564 = vmatmul.bf16.gmra.mxu0 %v543
        %v565 = vpop.f32.mrf.mxu0
        %v566 = vadd.f32 %v446, %v565
        %v567 = vpop.f32.mrf.mxu0
        %v568 = vadd.f32 %v446, %v567
        %569 = vmatmul.bf16.gmra.mxu0 %v546
        %v570 = vpop.f32.mrf.mxu0
        %v571 = vadd.f32 %v446, %v570
        %v572 = vpop.f32.mrf.mxu0
        %v573 = vadd.f32 %v446, %v572
        %574 = vmatmul.bf16.gmra.mxu0 %v549
        %v575 = vpop.f32.mrf.mxu0
        %v576 = vadd.f32 %v446, %v575
        %v577 = vpop.f32.mrf.mxu0
        %v578 = vadd.f32 %v446, %v577
        %579 = vdwg.mxu0
        %580 = vmatpush.bf16.msra.mxu0 0
        %581 = vmatpush.bf16.msra.mxu0 0
        %582 = vmatpush.bf16.msra.mxu0 0
        %583 = vmatpush.bf16.msra.mxu0 0
        %584 = vmatpush.bf16.msra.mxu0 0
        %585 = vmatpush.bf16.msra.mxu0 0
        %586 = vmatpush.bf16.msra.mxu0 %v521
        %587 = vmatpush.bf16.msra.mxu0 %v515
        %588 = vmatmul.bf16.gmra.mxu0 %v540
        %v589 = vpop.f32.mrf.mxu0
        %v590 = vadd.f32 %v447, %v589
        %v591 = vpop.f32.mrf.mxu0
        %v592 = vadd.f32 %v447, %v591
        %593 = vmatmul.bf16.gmra.mxu0 %v543
        %v594 = vpop.f32.mrf.mxu0
        %v595 = vadd.f32 %v447, %v594
        %v596 = vpop.f32.mrf.mxu0
        %v597 = vadd.f32 %v447, %v596
        %598 = vmatmul.bf16.gmra.mxu0 %v546
        %v599 = vpop.f32.mrf.mxu0
        %v600 = vadd.f32 %v447, %v599
        %v601 = vpop.f32.mrf.mxu0
        %v602 = vadd.f32 %v447, %v601
        %603 = vmatmul.bf16.gmra.mxu0 %v549
        %v604 = vpop.f32.mrf.mxu0
        %v605 = vadd.f32 %v447, %v604
        %v606 = vpop.f32.mrf.mxu0
        %v607 = vadd.f32 %v447, %v606
        %608 = vdwg.mxu0
        %609 = vmatpush.bf16.msra.mxu0 0
        %610 = vmatpush.bf16.msra.mxu0 0
        %611 = vmatpush.bf16.msra.mxu0 0
        %612 = vmatpush.bf16.msra.mxu0 0
        %613 = vmatpush.bf16.msra.mxu0 0
        %614 = vmatpush.bf16.msra.mxu0 0
        %615 = vmatpush.bf16.msra.mxu0 %v522
        %616 = vmatpush.bf16.msra.mxu0 %v516
        %617 = vmatmul.bf16.gmra.mxu0 %v540
        %v618 = vpop.f32.mrf.mxu0
        %v619 = vadd.f32 %v448, %v618
        %v620 = vpop.f32.mrf.mxu0
        %v621 = vadd.f32 %v448, %v620
        %622 = vmatmul.bf16.gmra.mxu0 %v543
        %v623 = vpop.f32.mrf.mxu0
        %v624 = vadd.f32 %v448, %v623
        %v625 = vpop.f32.mrf.mxu0
        %v626 = vadd.f32 %v448, %v625
        %627 = vmatmul.bf16.gmra.mxu0 %v546
        %v628 = vpop.f32.mrf.mxu0
        %v629 = vadd.f32 %v448, %v628
        %v630 = vpop.f32.mrf.mxu0
        %v631 = vadd.f32 %v448, %v630
        %632 = vmatmul.bf16.gmra.mxu0 %v549
        %v633 = vpop.f32.mrf.mxu0
        %v634 = vadd.f32 %v448, %v633
        %v635 = vpop.f32.mrf.mxu0
        %v636 = vadd.f32 %v448, %v635
        %637 = vdwg.mxu0
        %638 = vmatpush.bf16.msra.mxu0 0
        %639 = vmatpush.bf16.msra.mxu0 0
        %640 = vmatpush.bf16.msra.mxu0 0
        %641 = vmatpush.bf16.msra.mxu0 0
        %642 = vmatpush.bf16.msra.mxu0 0
        %643 = vmatpush.bf16.msra.mxu0 0
        %644 = vmatpush.bf16.msra.mxu0 %v523
        %645 = vmatpush.bf16.msra.mxu0 %v517
        %646 = vmatmul.bf16.gmra.mxu0 %v540
        %v647 = vpop.f32.mrf.mxu0
        %v648 = vadd.f32 %v449, %v647
        %v649 = vpop.f32.mrf.mxu0
        %v650 = vadd.f32 %v449, %v649
        %651 = vmatmul.bf16.gmra.mxu0 %v543
        %v652 = vpop.f32.mrf.mxu0
        %v653 = vadd.f32 %v449, %v652
        %v654 = vpop.f32.mrf.mxu0
        %v655 = vadd.f32 %v449, %v654
        %656 = vmatmul.bf16.gmra.mxu0 %v546
        %v657 = vpop.f32.mrf.mxu0
        %v658 = vadd.f32 %v449, %v657
        %v659 = vpop.f32.mrf.mxu0
        %v660 = vadd.f32 %v449, %v659
        %661 = vmatmul.bf16.gmra.mxu0 %v549
        %v662 = vpop.f32.mrf.mxu0
        %v663 = vadd.f32 %v449, %v662
        %v664 = vpop.f32.mrf.mxu0
        %v665 = vadd.f32 %v449, %v664
        %666 = vdwg.mxu0
        %667 = vmatpush.bf16.msra.mxu0 0
        %668 = vmatpush.bf16.msra.mxu0 0
        %669 = vmatpush.bf16.msra.mxu0 0
        %670 = vmatpush.bf16.msra.mxu0 0
        %671 = vmatpush.bf16.msra.mxu0 0
        %672 = vmatpush.bf16.msra.mxu0 0
        %673 = vmatpush.bf16.msra.mxu0 %v524
        %674 = vmatpush.bf16.msra.mxu0 %v518
        %675 = vmatmul.bf16.gmra.mxu0 %v540
        %v676 = vpop.f32.mrf.mxu0
        %v677 = vadd.f32 %v450, %v676
        %v678 = vpop.f32.mrf.mxu0
        %v679 = vadd.f32 %v450, %v678
        %680 = vmatmul.bf16.gmra.mxu0 %v543
        %v681 = vpop.f32.mrf.mxu0
        %v682 = vadd.f32 %v450, %v681
        %v683 = vpop.f32.mrf.mxu0
        %v684 = vadd.f32 %v450, %v683
        %685 = vmatmul.bf16.gmra.mxu0 %v546
        %v686 = vpop.f32.mrf.mxu0
        %v687 = vadd.f32 %v450, %v686
        %v688 = vpop.f32.mrf.mxu0
        %v689 = vadd.f32 %v450, %v688
        %690 = vmatmul.bf16.gmra.mxu0 %v549
        %v691 = vpop.f32.mrf.mxu0
        %v692 = vadd.f32 %v450, %v691
        %v693 = vpop.f32.mrf.mxu0
        %v694 = vadd.f32 %v450, %v693
        %695 = vdwg.mxu0
        %696 = vmatpush.bf16.msra.mxu0 0
        %697 = vmatpush.bf16.msra.mxu0 0
        %698 = vmatpush.bf16.msra.mxu0 0
        %699 = vmatpush.bf16.msra.mxu0 0
        %700 = vmatpush.bf16.msra.mxu0 0
        %701 = vmatpush.bf16.msra.mxu0 0
        %702 = vmatpush.bf16.msra.mxu0 %v525
        %703 = vmatpush.bf16.msra.mxu0 %v519
        %704 = vmatmul.bf16.gmra.mxu0 %v540
        %v705 = vpop.f32.mrf.mxu0
        %v706 = vadd.f32 %v451, %v705
        %v707 = vpop.f32.mrf.mxu0
        %v708 = vadd.f32 %v451, %v707
        %709 = vmatmul.bf16.gmra.mxu0 %v543
        %v710 = vpop.f32.mrf.mxu0
        %v711 = vadd.f32 %v451, %v710
        %v712 = vpop.f32.mrf.mxu0
        %v713 = vadd.f32 %v451, %v712
        %714 = vmatmul.bf16.gmra.mxu0 %v546
        %v715 = vpop.f32.mrf.mxu0
        %v716 = vadd.f32 %v451, %v715
        %v717 = vpop.f32.mrf.mxu0
        %v718 = vadd.f32 %v451, %v717
        %719 = vmatmul.bf16.gmra.mxu0 %v549
        %v720 = vpop.f32.mrf.mxu0
        %v721 = vadd.f32 %v451, %v720
        %v722 = vpop.f32.mrf.mxu0
        %v723 = vadd.f32 %v451, %v722
        %724 = vdwg.mxu0
        %725 = vst [vmem:[#allocation2] sm:$0xff] %v561
        %726 = vst [vmem:[#allocation2 + $0x8] sm:$0xff] %v590
        %727 = vst [vmem:[#allocation2 + $0x10] sm:$0xff] %v619
        %728 = vst [vmem:[#allocation2 + $0x18] sm:$0xff] %v648
        %729 = vst [vmem:[#allocation2 + $0x20] sm:$0xff] %v677
        %730 = vst [vmem:[#allocation2 + $0x28] sm:$0xff] %v706
        %731 = vst [vmem:[#allocation2 + $0x30] sm:$0xff] %v563
        %732 = vst [vmem:[#allocation2 + $0x38] sm:$0xff] %v592
        %733 = vst [vmem:[#allocation2 + $0x40] sm:$0xff] %v621
        %734 = vst [vmem:[#allocation2 + $0x48] sm:$0xff] %v650
        %735 = vst [vmem:[#allocation2 + $0x50] sm:$0xff] %v679
        %736 = vst [vmem:[#allocation2 + $0x58] sm:$0xff] %v708
        %737 = vst [vmem:[#allocation2 + $0x60] sm:$0xff] %v566
        %738 = vst [vmem:[#allocation2 + $0x68] sm:$0xff] %v595
        %739 = vst [vmem:[#allocation2 + $0x70] sm:$0xff] %v624
        %740 = vst [vmem:[#allocation2 + $0x78] sm:$0xff] %v653
        %741 = vst [vmem:[#allocation2 + $0x80] sm:$0xff] %v682
        %742 = vst [vmem:[#allocation2 + $0x88] sm:$0xff] %v711
        %743 = vst [vmem:[#allocation2 + $0x90] sm:$0xff] %v568
        %744 = vst [vmem:[#allocation2 + $0x98] sm:$0xff] %v597
        %745 = vst [vmem:[#allocation2 + $0xa0] sm:$0xff] %v626
        %746 = vst [vmem:[#allocation2 + $0xa8] sm:$0xff] %v655
        %747 = vst [vmem:[#allocation2 + $0xb0] sm:$0xff] %v684
        %748 = vst [vmem:[#allocation2 + $0xb8] sm:$0xff] %v713
        %749 = vst [vmem:[#allocation2 + $0xc0] sm:$0xff] %v571
        %750 = vst [vmem:[#allocation2 + $0xc8] sm:$0xff] %v600
        %751 = vst [vmem:[#allocation2 + $0xd0] sm:$0xff] %v629
        %752 = vst [vmem:[#allocation2 + $0xd8] sm:$0xff] %v658
        %753 = vst [vmem:[#allocation2 + $0xe0] sm:$0xff] %v687
        %754 = vst [vmem:[#allocation2 + $0xe8] sm:$0xff] %v716
        %755 = vst [vmem:[#allocation2 + $0xf0] sm:$0xff] %v573
        %756 = vst [vmem:[#allocation2 + $0xf8] sm:$0xff] %v602
        %757 = vst [vmem:[#allocation2 + $0x100] sm:$0xff] %v631
        %758 = vst [vmem:[#allocation2 + $0x108] sm:$0xff] %v660
        %759 = vst [vmem:[#allocation2 + $0x110] sm:$0xff] %v689
        %760 = vst [vmem:[#allocation2 + $0x118] sm:$0xff] %v718
        %761 = vst [vmem:[#allocation2 + $0x120] sm:$0xff] %v576
        %762 = vst [vmem:[#allocation2 + $0x128] sm:$0xff] %v605
        %763 = vst [vmem:[#allocation2 + $0x130] sm:$0xff] %v634
        %764 = vst [vmem:[#allocation2 + $0x138] sm:$0xff] %v663
        %765 = vst [vmem:[#allocation2 + $0x140] sm:$0xff] %v692
        %766 = vst [vmem:[#allocation2 + $0x148] sm:$0xff] %v721
        %767 = vst [vmem:[#allocation2 + $0x150] sm:$0xff] %v578
        %768 = vst [vmem:[#allocation2 + $0x158] sm:$0xff] %v607
        %769 = vst [vmem:[#allocation2 + $0x160] sm:$0xff] %v636
        %770 = vst [vmem:[#allocation2 + $0x168] sm:$0xff] %v665
        %771 = vst [vmem:[#allocation2 + $0x170] sm:$0xff] %v694
        %772 = vst [vmem:[#allocation2 + $0x178] sm:$0xff] %v723
        %v773 = vld [vmem:[#allocation7] sm:$0xff]
        %v774 = vld [vmem:[#allocation7 + $0x8] sm:$0xff]
        %v775 = vld [vmem:[#allocation7 + $0x10] sm:$0xff]
        %v776 = vld [vmem:[#allocation7 + $0x18] sm:$0xff]
        %v777 = vld [vmem:[#allocation7 + $0x20] sm:$0xff]
        %v778 = vld [vmem:[#allocation7 + $0x28] sm:$0xff]
        %v779 = vld [vmem:[#allocation7 + $0x30] sm:$0xff]
        %v780 = vld [vmem:[#allocation7 + $0x38] sm:$0xff]
        %v781 = vld [vmem:[#allocation7 + $0x40] sm:$0xff]
        %v782 = vld [vmem:[#allocation7 + $0x48] sm:$0xff]
        %v783 = vld [vmem:[#allocation7 + $0x50] sm:$0xff]
        %v784 = vld [vmem:[#allocation7 + $0x58] sm:$0xff]
        %v785 = vld [vmem:[#allocation7 + $0x60] sm:$0xff]
        %v786 = vld [vmem:[#allocation7 + $0x68] sm:$0xff]
        %v787 = vld [vmem:[#allocation7 + $0x70] sm:$0xff]
        %v788 = vld [vmem:[#allocation7 + $0x78] sm:$0xff]
        %v789 = vld [vmem:[#allocation7 + $0x80] sm:$0xff]
        %v790 = vld [vmem:[#allocation7 + $0x88] sm:$0xff]
        %v791 = vld [vmem:[#allocation7 + $0x90] sm:$0xff]
        %v792 = vld [vmem:[#allocation7 + $0x98] sm:$0xff]
        %v793 = vld [vmem:[#allocation7 + $0xa0] sm:$0xff]
        %v794 = vld [vmem:[#allocation7 + $0xa8] sm:$0xff]
        %v795 = vld [vmem:[#allocation7 + $0xb0] sm:$0xff]
        %v796 = vld [vmem:[#allocation7 + $0xb8] sm:$0xff]
        %v797 = vld [vmem:[#allocation7 + $0xc0] sm:$0xff]
        %v798 = vld [vmem:[#allocation7 + $0xc8] sm:$0xff]
        %v799 = vld [vmem:[#allocation7 + $0xd0] sm:$0xff]
        %v800 = vld [vmem:[#allocation7 + $0xd8] sm:$0xff]
        %v801 = vld [vmem:[#allocation7 + $0xe0] sm:$0xff]
        %v802 = vld [vmem:[#allocation7 + $0xe8] sm:$0xff]
        %v803 = vld [vmem:[#allocation7 + $0xf0] sm:$0xff]
        %v804 = vld [vmem:[#allocation7 + $0xf8] sm:$0xff]
        %v805 = vld [vmem:[#allocation7 + $0x100] sm:$0xff]
        %v806 = vld [vmem:[#allocation7 + $0x108] sm:$0xff]
        %v807 = vld [vmem:[#allocation7 + $0x110] sm:$0xff]
        %v808 = vld [vmem:[#allocation7 + $0x118] sm:$0xff]
        %v809 = vld [vmem:[#allocation7 + $0x120] sm:$0xff]
        %v810 = vld [vmem:[#allocation7 + $0x128] sm:$0xff]
        %v811 = vld [vmem:[#allocation7 + $0x130] sm:$0xff]
        %v812 = vld [vmem:[#allocation7 + $0x138] sm:$0xff]
        %v813 = vld [vmem:[#allocation7 + $0x140] sm:$0xff]
        %v814 = vld [vmem:[#allocation7 + $0x148] sm:$0xff]
        %v815 = vld [vmem:[#allocation7 + $0x150] sm:$0xff]
        %v816 = vld [vmem:[#allocation7 + $0x158] sm:$0xff]
        %v817 = vld [vmem:[#allocation7 + $0x160] sm:$0xff]
        %v818 = vld [vmem:[#allocation7 + $0x168] sm:$0xff]
        %v819 = vld [vmem:[#allocation7 + $0x170] sm:$0xff]
        %v820 = vld [vmem:[#allocation7 + $0x178] sm:$0xff]
        %v821 = vld [vmem:[#allocation7 + $0x180] sm:$0xff]
        %v822 = vld [vmem:[#allocation7 + $0x188] sm:$0xff]
        %v823 = vld [vmem:[#allocation7 + $0x190] sm:$0xff]
        %v824 = vld [vmem:[#allocation7 + $0x198] sm:$0xff]
        %v825 = vld [vmem:[#allocation7 + $0x1a0] sm:$0xff]
        %v826 = vld [vmem:[#allocation7 + $0x1a8] sm:$0xff]
        %v827 = vld [vmem:[#allocation7 + $0x1b0] sm:$0xff]
        %v828 = vld [vmem:[#allocation7 + $0x1b8] sm:$0xff]
        %v829 = vld [vmem:[#allocation7 + $0x1c0] sm:$0xff]
        %v830 = vld [vmem:[#allocation7 + $0x1c8] sm:$0xff]
        %v831 = vld [vmem:[#allocation7 + $0x1d0] sm:$0xff]
        %v832 = vld [vmem:[#allocation7 + $0x1d8] sm:$0xff]
        %v833 = vld [vmem:[#allocation7 + $0x1e0] sm:$0xff]
        %v834 = vld [vmem:[#allocation7 + $0x1e8] sm:$0xff]
        %v835 = vld [vmem:[#allocation7 + $0x1f0] sm:$0xff]
        %v836 = vld [vmem:[#allocation7 + $0x1f8] sm:$0xff]
        %v837 = vld [vmem:[#allocation7 + $0x200] sm:$0xff]
        %v838 = vld [vmem:[#allocation7 + $0x208] sm:$0xff]
        %v839 = vld [vmem:[#allocation7 + $0x210] sm:$0xff]
        %v840 = vld [vmem:[#allocation7 + $0x218] sm:$0xff]
        %v841 = vld [vmem:[#allocation7 + $0x220] sm:$0xff]
        %v842 = vld [vmem:[#allocation7 + $0x228] sm:$0xff]
        %v843 = vld [vmem:[#allocation7 + $0x230] sm:$0xff]
        %v844 = vld [vmem:[#allocation7 + $0x238] sm:$0xff]
        %v845 = vld [vmem:[#allocation7 + $0x240] sm:$0xff]
        %v846 = vld [vmem:[#allocation7 + $0x248] sm:$0xff]
        %v847 = vld [vmem:[#allocation7 + $0x250] sm:$0xff]
        %v848 = vld [vmem:[#allocation7 + $0x258] sm:$0xff]
        %v849 = vld [vmem:[#allocation7 + $0x260] sm:$0xff]
        %v850 = vld [vmem:[#allocation7 + $0x268] sm:$0xff]
        %v851 = vld [vmem:[#allocation7 + $0x270] sm:$0xff]
        %v852 = vld [vmem:[#allocation7 + $0x278] sm:$0xff]
        %v853 = vld [vmem:[#allocation7 + $0x280] sm:$0xff]
        %v854 = vld [vmem:[#allocation7 + $0x288] sm:$0xff]
        %v855 = vld [vmem:[#allocation7 + $0x290] sm:$0xff]
        %v856 = vld [vmem:[#allocation7 + $0x298] sm:$0xff]
        %v857 = vld [vmem:[#allocation7 + $0x2a0] sm:$0xff]
        %v858 = vld [vmem:[#allocation7 + $0x2a8] sm:$0xff]
        %v859 = vld [vmem:[#allocation7 + $0x2b0] sm:$0xff]
        %v860 = vld [vmem:[#allocation7 + $0x2b8] sm:$0xff]
        %v861 = vld [vmem:[#allocation7 + $0x2c0] sm:$0xff]
        %v862 = vld [vmem:[#allocation7 + $0x2c8] sm:$0xff]
        %v863 = vld [vmem:[#allocation7 + $0x2d0] sm:$0xff]
        %v864 = vld [vmem:[#allocation7 + $0x2d8] sm:$0xff]
        %v865 = vld [vmem:[#allocation7 + $0x2e0] sm:$0xff]
        %v866 = vld [vmem:[#allocation7 + $0x2e8] sm:$0xff]
        %v867 = vld [vmem:[#allocation7 + $0x2f0] sm:$0xff]
        %v868 = vld [vmem:[#allocation7 + $0x2f8] sm:$0xff]
        %v869 = vld [vmem:[%s5] sm:$0x3]
        %v871 = vperm.slane %v869, 0
        %v872 = vperm.slane %v869, 1
        %v875 = vld [vmem:[%s1] sm:$0xff]
        %v876 = vld [vmem:[%s1 + $0x8] sm:$0xff]
        %v877 = vlaneseq
        %v878 = vand.u32 %v877, 127
        %v879 = vadd.s32 %v878, 128
        %vm880 = vcmp.ge.s32.totalorder %v878, 128
        %vm881 = vcmp.ge.s32.totalorder %v879, 128
        %v882 = vsub.s32 8, %v875
        %v883 = vsub.s32 8, %v876
        %884 = vset.pattern.permute.xlu0 0
        %885 = vperm.xlu0 %884, %v882
        %v886 = vpop.permute.xlu0 %885
        %887 = vset.pattern.permute.xlu0 0
        %888 = vperm.xlu0 %887, %v883
        %v889 = vpop.permute.xlu0 %888
        %v890 = vsel %vm880, %v886, 0
        %v891 = vsel %vm881, %v886, 0
        %v892 = vsel %vm880, %v889, 0
        %v893 = vsel %vm881, %v889, 0
        %894 = vset.pattern.permute.xlu0 0
        %895 = vperm.xlu0 %894, %v875
        %v896 = vpop.permute.xlu0 %895
        %897 = vset.pattern.permute.xlu0 0
        %898 = vperm.xlu0 %897, %v876
        %v899 = vpop.permute.xlu0 %898
        %v900 = vsel %vm880, 8, %v896
        %v901 = vsel %vm881, 8, %v896
        %v902 = vsel %vm880, 8, %v899
        %v903 = vsel %vm881, 8, %v899
        %s904 = smul.u32 %s25, 4
        %v905 = vld [vmem:[#allocation3] sm:$0xff]
        %v906 = vld [vmem:[#allocation3 + $0x8] sm:$0xff]
        %v907 = vld [vmem:[#allocation3 + $0x10] sm:$0xff]
        %v908 = vld [vmem:[#allocation3 + $0x18] sm:$0xff]
        %s909 = smul.u32 0, 6
        %s910 = smul.addr %s909, 8
        %s911 = scalar_lea.vmem [#allocation2], %s910
        %v912 = vld [vmem:[%s911] sm:$0xff]
        %v913 = vld [vmem:[%s911 + $0x8] sm:$0xff]
        %v914 = vld [vmem:[%s911 + $0x10] sm:$0xff]
        %v915 = vld [vmem:[%s911 + $0x18] sm:$0xff]
        %v916 = vld [vmem:[%s911 + $0x20] sm:$0xff]
        %v917 = vld [vmem:[%s911 + $0x28] sm:$0xff]
        %v918 = vld [vmem:[%s911 + $0x30] sm:$0xff]
        %v919 = vld [vmem:[%s911 + $0x38] sm:$0xff]
        %v920 = vld [vmem:[%s911 + $0x40] sm:$0xff]
        %v921 = vld [vmem:[%s911 + $0x48] sm:$0xff]
        %v922 = vld [vmem:[%s911 + $0x50] sm:$0xff]
        %v923 = vld [vmem:[%s911 + $0x58] sm:$0xff]
        %v924 = vpack.c.bf16 %v907, %v905
        %v925 = vpack.c.bf16 %v908, %v906
        %v1022 = vunpack.c.l.b16 %v773
        %v1023 = vunpack.c.h.b16 %v773
        %v1024 = vunpack.c.l.b16 %v774
        %v1025 = vunpack.c.h.b16 %v774
        %v1026 = vunpack.c.l.b16 %v775
        %v1027 = vunpack.c.h.b16 %v775
        %v1028 = vunpack.c.l.b16 %v776
        %v1029 = vunpack.c.h.b16 %v776
        %v1030 = vunpack.c.l.b16 %v777
        %v1031 = vunpack.c.h.b16 %v777
        %v1032 = vunpack.c.l.b16 %v778
        %v1033 = vunpack.c.h.b16 %v778
        %v1034 = vunpack.c.l.b16 %v779
        %v1035 = vunpack.c.h.b16 %v779
        %v1036 = vunpack.c.l.b16 %v780
        %v1037 = vunpack.c.h.b16 %v780
        %v1038 = vunpack.c.l.b16 %v781
        %v1039 = vunpack.c.h.b16 %v781
        %v1040 = vunpack.c.l.b16 %v782
        %v1041 = vunpack.c.h.b16 %v782
        %v1042 = vunpack.c.l.b16 %v783
        %v1043 = vunpack.c.h.b16 %v783
        %v1044 = vunpack.c.l.b16 %v784
        %v1045 = vunpack.c.h.b16 %v784
        %v1046 = vunpack.c.l.b16 %v785
        %v1047 = vunpack.c.h.b16 %v785
        %v1048 = vunpack.c.l.b16 %v786
        %v1049 = vunpack.c.h.b16 %v786
        %v1050 = vunpack.c.l.b16 %v787
        %v1051 = vunpack.c.h.b16 %v787
        %v1052 = vunpack.c.l.b16 %v788
        %v1053 = vunpack.c.h.b16 %v788
        %v1054 = vunpack.c.l.b16 %v789
        %v1055 = vunpack.c.h.b16 %v789
        %v1056 = vunpack.c.l.b16 %v790
        %v1057 = vunpack.c.h.b16 %v790
        %v1058 = vunpack.c.l.b16 %v791
        %v1059 = vunpack.c.h.b16 %v791
        %v1060 = vunpack.c.l.b16 %v792
        %v1061 = vunpack.c.h.b16 %v792
        %v1062 = vunpack.c.l.b16 %v793
        %v1063 = vunpack.c.h.b16 %v793
        %v1064 = vunpack.c.l.b16 %v794
        %v1065 = vunpack.c.h.b16 %v794
        %v1066 = vunpack.c.l.b16 %v795
        %v1067 = vunpack.c.h.b16 %v795
        %v1068 = vunpack.c.l.b16 %v796
        %v1069 = vunpack.c.h.b16 %v796
        %v1070 = vunpack.c.l.b16 %v797
        %v1071 = vunpack.c.h.b16 %v797
        %v1072 = vunpack.c.l.b16 %v798
        %v1073 = vunpack.c.h.b16 %v798
        %v1074 = vunpack.c.l.b16 %v799
        %v1075 = vunpack.c.h.b16 %v799
        %v1076 = vunpack.c.l.b16 %v800
        %v1077 = vunpack.c.h.b16 %v800
        %v1078 = vunpack.c.l.b16 %v801
        %v1079 = vunpack.c.h.b16 %v801
        %v1080 = vunpack.c.l.b16 %v802
        %v1081 = vunpack.c.h.b16 %v802
        %v1082 = vunpack.c.l.b16 %v803
        %v1083 = vunpack.c.h.b16 %v803
        %v1084 = vunpack.c.l.b16 %v804
        %v1085 = vunpack.c.h.b16 %v804
        %v1086 = vunpack.c.l.b16 %v805
        %v1087 = vunpack.c.h.b16 %v805
        %v1088 = vunpack.c.l.b16 %v806
        %v1089 = vunpack.c.h.b16 %v806
        %v1090 = vunpack.c.l.b16 %v807
        %v1091 = vunpack.c.h.b16 %v807
        %v1092 = vunpack.c.l.b16 %v808
        %v1093 = vunpack.c.h.b16 %v808
        %v1094 = vunpack.c.l.b16 %v809
        %v1095 = vunpack.c.h.b16 %v809
        %v1096 = vunpack.c.l.b16 %v810
        %v1097 = vunpack.c.h.b16 %v810
        %v1098 = vunpack.c.l.b16 %v811
        %v1099 = vunpack.c.h.b16 %v811
        %v1100 = vunpack.c.l.b16 %v812
        %v1101 = vunpack.c.h.b16 %v812
        %v1102 = vunpack.c.l.b16 %v813
        %v1103 = vunpack.c.h.b16 %v813
        %v1104 = vunpack.c.l.b16 %v814
        %v1105 = vunpack.c.h.b16 %v814
        %v1106 = vunpack.c.l.b16 %v815
        %v1107 = vunpack.c.h.b16 %v815
        %v1108 = vunpack.c.l.b16 %v816
        %v1109 = vunpack.c.h.b16 %v816
        %v1110 = vunpack.c.l.b16 %v817
        %v1111 = vunpack.c.h.b16 %v817
        %v1112 = vunpack.c.l.b16 %v818
        %v1113 = vunpack.c.h.b16 %v818
        %v1114 = vunpack.c.l.b16 %v819
        %v1115 = vunpack.c.h.b16 %v819
        %v1116 = vunpack.c.l.b16 %v820
        %v1117 = vunpack.c.h.b16 %v820
        %v1118 = vunpack.c.l.b16 %v821
        %v1119 = vunpack.c.h.b16 %v821
        %v1120 = vunpack.c.l.b16 %v822
        %v1121 = vunpack.c.h.b16 %v822
        %v1122 = vunpack.c.l.b16 %v823
        %v1123 = vunpack.c.h.b16 %v823
        %v1124 = vunpack.c.l.b16 %v824
        %v1125 = vunpack.c.h.b16 %v824
        %v1126 = vunpack.c.l.b16 %v825
        %v1127 = vunpack.c.h.b16 %v825
        %v1128 = vunpack.c.l.b16 %v826
        %v1129 = vunpack.c.h.b16 %v826
        %v1130 = vunpack.c.l.b16 %v827
        %v1131 = vunpack.c.h.b16 %v827
        %v1132 = vunpack.c.l.b16 %v828
        %v1133 = vunpack.c.h.b16 %v828
        %v1134 = vunpack.c.l.b16 %v829
        %v1135 = vunpack.c.h.b16 %v829
        %v1136 = vunpack.c.l.b16 %v830
        %v1137 = vunpack.c.h.b16 %v830
        %v1138 = vunpack.c.l.b16 %v831
        %v1139 = vunpack.c.h.b16 %v831
        %v1140 = vunpack.c.l.b16 %v832
        %v1141 = vunpack.c.h.b16 %v832
        %v1142 = vunpack.c.l.b16 %v833
        %v1143 = vunpack.c.h.b16 %v833
        %v1144 = vunpack.c.l.b16 %v834
        %v1145 = vunpack.c.h.b16 %v834
        %v1146 = vunpack.c.l.b16 %v835
        %v1147 = vunpack.c.h.b16 %v835
        %v1148 = vunpack.c.l.b16 %v836
        %v1149 = vunpack.c.h.b16 %v836
        %v1150 = vunpack.c.l.b16 %v837
        %v1151 = vunpack.c.h.b16 %v837
        %v1152 = vunpack.c.l.b16 %v838
        %v1153 = vunpack.c.h.b16 %v838
        %v1154 = vunpack.c.l.b16 %v839
        %v1155 = vunpack.c.h.b16 %v839
        %v1156 = vunpack.c.l.b16 %v840
        %v1157 = vunpack.c.h.b16 %v840
        %v1158 = vunpack.c.l.b16 %v841
        %v1159 = vunpack.c.h.b16 %v841
        %v1160 = vunpack.c.l.b16 %v842
        %v1161 = vunpack.c.h.b16 %v842
        %v1162 = vunpack.c.l.b16 %v843
        %v1163 = vunpack.c.h.b16 %v843
        %v1164 = vunpack.c.l.b16 %v844
        %v1165 = vunpack.c.h.b16 %v844
        %v1166 = vunpack.c.l.b16 %v845
        %v1167 = vunpack.c.h.b16 %v845
        %v1168 = vunpack.c.l.b16 %v846
        %v1169 = vunpack.c.h.b16 %v846
        %v1170 = vunpack.c.l.b16 %v847
        %v1171 = vunpack.c.h.b16 %v847
        %v1172 = vunpack.c.l.b16 %v848
        %v1173 = vunpack.c.h.b16 %v848
        %v1174 = vunpack.c.l.b16 %v849
        %v1175 = vunpack.c.h.b16 %v849
        %v1176 = vunpack.c.l.b16 %v850
        %v1177 = vunpack.c.h.b16 %v850
        %v1178 = vunpack.c.l.b16 %v851
        %v1179 = vunpack.c.h.b16 %v851
        %v1180 = vunpack.c.l.b16 %v852
        %v1181 = vunpack.c.h.b16 %v852
        %v1182 = vunpack.c.l.b16 %v853
        %v1183 = vunpack.c.h.b16 %v853
        %v1184 = vunpack.c.l.b16 %v854
        %v1185 = vunpack.c.h.b16 %v854
        %v1186 = vunpack.c.l.b16 %v855
        %v1187 = vunpack.c.h.b16 %v855
        %v1188 = vunpack.c.l.b16 %v856
        %v1189 = vunpack.c.h.b16 %v856
        %v1190 = vunpack.c.l.b16 %v857
        %v1191 = vunpack.c.h.b16 %v857
        %v1192 = vunpack.c.l.b16 %v858
        %v1193 = vunpack.c.h.b16 %v858
        %v1194 = vunpack.c.l.b16 %v859
        %v1195 = vunpack.c.h.b16 %v859
        %v1196 = vunpack.c.l.b16 %v860
        %v1197 = vunpack.c.h.b16 %v860
        %v1198 = vunpack.c.l.b16 %v861
        %v1199 = vunpack.c.h.b16 %v861
        %v1200 = vunpack.c.l.b16 %v862
        %v1201 = vunpack.c.h.b16 %v862
        %v1202 = vunpack.c.l.b16 %v863
        %v1203 = vunpack.c.h.b16 %v863
        %v1204 = vunpack.c.l.b16 %v864
        %v1205 = vunpack.c.h.b16 %v864
        %v1206 = vunpack.c.l.b16 %v865
        %v1207 = vunpack.c.h.b16 %v865
        %v1208 = vunpack.c.l.b16 %v866
        %v1209 = vunpack.c.h.b16 %v866
        %v1210 = vunpack.c.l.b16 %v867
        %v1211 = vunpack.c.h.b16 %v867
        %v1212 = vunpack.c.l.b16 %v868
        %v1213 = vunpack.c.h.b16 %v868
        %v1214 = vpack.c.b16 %v1028, %v1022
        %v1215 = vpack.c.b16 %v1029, %v1023
        %v1216 = vpack.c.b16 %v1030, %v1024
        %v1217 = vpack.c.b16 %v1031, %v1025
        %v1218 = vpack.c.b16 %v1032, %v1026
        %v1219 = vpack.c.b16 %v1033, %v1027
        %v1220 = vpack.c.b16 %v1040, %v1034
        %v1221 = vpack.c.b16 %v1041, %v1035
        %v1222 = vpack.c.b16 %v1042, %v1036
        %v1223 = vpack.c.b16 %v1043, %v1037
        %v1224 = vpack.c.b16 %v1044, %v1038
        %v1225 = vpack.c.b16 %v1045, %v1039
        %v1226 = vpack.c.b16 %v1052, %v1046
        %v1227 = vpack.c.b16 %v1053, %v1047
        %v1228 = vpack.c.b16 %v1054, %v1048
        %v1229 = vpack.c.b16 %v1055, %v1049
        %v1230 = vpack.c.b16 %v1056, %v1050
        %v1231 = vpack.c.b16 %v1057, %v1051
        %v1232 = vpack.c.b16 %v1064, %v1058
        %v1233 = vpack.c.b16 %v1065, %v1059
        %v1234 = vpack.c.b16 %v1066, %v1060
        %v1235 = vpack.c.b16 %v1067, %v1061
        %v1236 = vpack.c.b16 %v1068, %v1062
        %v1237 = vpack.c.b16 %v1069, %v1063
        %v1238 = vpack.c.b16 %v1076, %v1070
        %v1239 = vpack.c.b16 %v1077, %v1071
        %v1240 = vpack.c.b16 %v1078, %v1072
        %v1241 = vpack.c.b16 %v1079, %v1073
        %v1242 = vpack.c.b16 %v1080, %v1074
        %v1243 = vpack.c.b16 %v1081, %v1075
        %v1244 = vpack.c.b16 %v1088, %v1082
        %v1245 = vpack.c.b16 %v1089, %v1083
        %v1246 = vpack.c.b16 %v1090, %v1084
        %v1247 = vpack.c.b16 %v1091, %v1085
        %v1248 = vpack.c.b16 %v1092, %v1086
        %v1249 = vpack.c.b16 %v1093, %v1087
        %v1250 = vpack.c.b16 %v1100, %v1094
        %v1251 = vpack.c.b16 %v1101, %v1095
        %v1252 = vpack.c.b16 %v1102, %v1096
        %v1253 = vpack.c.b16 %v1103, %v1097
        %v1254 = vpack.c.b16 %v1104, %v1098
        %v1255 = vpack.c.b16 %v1105, %v1099
        %v1256 = vpack.c.b16 %v1112, %v1106
        %v1257 = vpack.c.b16 %v1113, %v1107
        %v1258 = vpack.c.b16 %v1114, %v1108
        %v1259 = vpack.c.b16 %v1115, %v1109
        %v1260 = vpack.c.b16 %v1116, %v1110
        %v1261 = vpack.c.b16 %v1117, %v1111
        %v1262 = vpack.c.b16 %v1124, %v1118
        %v1263 = vpack.c.b16 %v1125, %v1119
        %v1264 = vpack.c.b16 %v1126, %v1120
        %v1265 = vpack.c.b16 %v1127, %v1121
        %v1266 = vpack.c.b16 %v1128, %v1122
        %v1267 = vpack.c.b16 %v1129, %v1123
        %v1268 = vpack.c.b16 %v1136, %v1130
        %v1269 = vpack.c.b16 %v1137, %v1131
        %v1270 = vpack.c.b16 %v1138, %v1132
        %v1271 = vpack.c.b16 %v1139, %v1133
        %v1272 = vpack.c.b16 %v1140, %v1134
        %v1273 = vpack.c.b16 %v1141, %v1135
        %v1274 = vpack.c.b16 %v1148, %v1142
        %v1275 = vpack.c.b16 %v1149, %v1143
        %v1276 = vpack.c.b16 %v1150, %v1144
        %v1277 = vpack.c.b16 %v1151, %v1145
        %v1278 = vpack.c.b16 %v1152, %v1146
        %v1279 = vpack.c.b16 %v1153, %v1147
        %v1280 = vpack.c.b16 %v1160, %v1154
        %v1281 = vpack.c.b16 %v1161, %v1155
        %v1282 = vpack.c.b16 %v1162, %v1156
        %v1283 = vpack.c.b16 %v1163, %v1157
        %v1284 = vpack.c.b16 %v1164, %v1158
        %v1285 = vpack.c.b16 %v1165, %v1159
        %v1286 = vpack.c.b16 %v1172, %v1166
        %v1287 = vpack.c.b16 %v1173, %v1167
        %v1288 = vpack.c.b16 %v1174, %v1168
        %v1289 = vpack.c.b16 %v1175, %v1169
        %v1290 = vpack.c.b16 %v1176, %v1170
        %v1291 = vpack.c.b16 %v1177, %v1171
        %v1292 = vpack.c.b16 %v1184, %v1178
        %v1293 = vpack.c.b16 %v1185, %v1179
        %v1294 = vpack.c.b16 %v1186, %v1180
        %v1295 = vpack.c.b16 %v1187, %v1181
        %v1296 = vpack.c.b16 %v1188, %v1182
        %v1297 = vpack.c.b16 %v1189, %v1183
        %v1298 = vpack.c.b16 %v1196, %v1190
        %v1299 = vpack.c.b16 %v1197, %v1191
        %v1300 = vpack.c.b16 %v1198, %v1192
        %v1301 = vpack.c.b16 %v1199, %v1193
        %v1302 = vpack.c.b16 %v1200, %v1194
        %v1303 = vpack.c.b16 %v1201, %v1195
        %v1304 = vpack.c.b16 %v1208, %v1202
        %v1305 = vpack.c.b16 %v1209, %v1203
        %v1306 = vpack.c.b16 %v1210, %v1204
        %v1307 = vpack.c.b16 %v1211, %v1205
        %v1308 = vpack.c.b16 %v1212, %v1206
        %v1309 = vpack.c.b16 %v1213, %v1207
        %1406 = vmatpush.bf16.msra.mxu0 %v1256
        %1407 = vmatpush.bf16.msra.mxu0 %v1250
        %1408 = vmatpush.bf16.msra.mxu0 %v1244
        %1409 = vmatpush.bf16.msra.mxu0 %v1238
        %1410 = vmatpush.bf16.msra.mxu0 %v1232
        %1411 = vmatpush.bf16.msra.mxu0 %v1226
        %1412 = vmatpush.bf16.msra.mxu0 %v1220
        %1413 = vmatpush.bf16.msra.mxu0 %v1214
        %1414 = vmatmul.bf16.gmra.mxu0 %v924
        %v1415 = vpop.f32.mrf.mxu0
        %v1416 = vadd.f32 0.0, %v1415
        %v1417 = vpop.f32.mrf.mxu0
        %v1418 = vadd.f32 0.0, %v1417
        %1419 = vdwg.mxu0
        %1420 = vmatpush.bf16.msra.mxu0 %v1304
        %1421 = vmatpush.bf16.msra.mxu0 %v1298
        %1422 = vmatpush.bf16.msra.mxu0 %v1292
        %1423 = vmatpush.bf16.msra.mxu0 %v1286
        %1424 = vmatpush.bf16.msra.mxu0 %v1280
        %1425 = vmatpush.bf16.msra.mxu0 %v1274
        %1426 = vmatpush.bf16.msra.mxu0 %v1268
        %1427 = vmatpush.bf16.msra.mxu0 %v1262
        %1428 = vmatmul.bf16.gmra.mxu0 %v925
        %v1429 = vpop.f32.mrf.mxu0
        %v1430 = vadd.f32 %v1416, %v1429
        %v1431 = vpop.f32.mrf.mxu0
        %v1432 = vadd.f32 %v1418, %v1431
        %1433 = vdwg.mxu0
        %1434 = vmatpush.bf16.msra.mxu0 %v1257
        %1435 = vmatpush.bf16.msra.mxu0 %v1251
        %1436 = vmatpush.bf16.msra.mxu0 %v1245
        %1437 = vmatpush.bf16.msra.mxu0 %v1239
        %1438 = vmatpush.bf16.msra.mxu0 %v1233
        %1439 = vmatpush.bf16.msra.mxu0 %v1227
        %1440 = vmatpush.bf16.msra.mxu0 %v1221
        %1441 = vmatpush.bf16.msra.mxu0 %v1215
        %1442 = vmatmul.bf16.gmra.mxu0 %v924
        %v1443 = vpop.f32.mrf.mxu0
        %v1444 = vadd.f32 0.0, %v1443
        %v1445 = vpop.f32.mrf.mxu0
        %v1446 = vadd.f32 0.0, %v1445
        %1447 = vdwg.mxu0
        %1448 = vmatpush.bf16.msra.mxu0 %v1305
        %1449 = vmatpush.bf16.msra.mxu0 %v1299
        %1450 = vmatpush.bf16.msra.mxu0 %v1293
        %1451 = vmatpush.bf16.msra.mxu0 %v1287
        %1452 = vmatpush.bf16.msra.mxu0 %v1281
        %1453 = vmatpush.bf16.msra.mxu0 %v1275
        %1454 = vmatpush.bf16.msra.mxu0 %v1269
        %1455 = vmatpush.bf16.msra.mxu0 %v1263
        %1456 = vmatmul.bf16.gmra.mxu0 %v925
        %v1457 = vpop.f32.mrf.mxu0
        %v1458 = vadd.f32 %v1444, %v1457
        %v1459 = vpop.f32.mrf.mxu0
        %v1460 = vadd.f32 %v1446, %v1459
        %1461 = vdwg.mxu0
        %1462 = vmatpush.bf16.msra.mxu0 %v1258
        %1463 = vmatpush.bf16.msra.mxu0 %v1252
        %1464 = vmatpush.bf16.msra.mxu0 %v1246
        %1465 = vmatpush.bf16.msra.mxu0 %v1240
        %1466 = vmatpush.bf16.msra.mxu0 %v1234
        %1467 = vmatpush.bf16.msra.mxu0 %v1228
        %1468 = vmatpush.bf16.msra.mxu0 %v1222
        %1469 = vmatpush.bf16.msra.mxu0 %v1216
        %1470 = vmatmul.bf16.gmra.mxu0 %v924
        %v1471 = vpop.f32.mrf.mxu0
        %v1472 = vadd.f32 0.0, %v1471
        %v1473 = vpop.f32.mrf.mxu0
        %v1474 = vadd.f32 0.0, %v1473
        %1475 = vdwg.mxu0
        %1476 = vmatpush.bf16.msra.mxu0 %v1306
        %1477 = vmatpush.bf16.msra.mxu0 %v1300
        %1478 = vmatpush.bf16.msra.mxu0 %v1294
        %1479 = vmatpush.bf16.msra.mxu0 %v1288
        %1480 = vmatpush.bf16.msra.mxu0 %v1282
        %1481 = vmatpush.bf16.msra.mxu0 %v1276
        %1482 = vmatpush.bf16.msra.mxu0 %v1270
        %1483 = vmatpush.bf16.msra.mxu0 %v1264
        %1484 = vmatmul.bf16.gmra.mxu0 %v925
        %v1485 = vpop.f32.mrf.mxu0
        %v1486 = vadd.f32 %v1472, %v1485
        %v1487 = vpop.f32.mrf.mxu0
        %v1488 = vadd.f32 %v1474, %v1487
        %1489 = vdwg.mxu0
        %1490 = vmatpush.bf16.msra.mxu0 %v1259
        %1491 = vmatpush.bf16.msra.mxu0 %v1253
        %1492 = vmatpush.bf16.msra.mxu0 %v1247
        %1493 = vmatpush.bf16.msra.mxu0 %v1241
        %1494 = vmatpush.bf16.msra.mxu0 %v1235
        %1495 = vmatpush.bf16.msra.mxu0 %v1229
        %1496 = vmatpush.bf16.msra.mxu0 %v1223
        %1497 = vmatpush.bf16.msra.mxu0 %v1217
        %1498 = vmatmul.bf16.gmra.mxu0 %v924
        %v1499 = vpop.f32.mrf.mxu0
        %v1500 = vadd.f32 0.0, %v1499
        %v1501 = vpop.f32.mrf.mxu0
        %v1502 = vadd.f32 0.0, %v1501
        %1503 = vdwg.mxu0
        %1504 = vmatpush.bf16.msra.mxu0 %v1307
        %1505 = vmatpush.bf16.msra.mxu0 %v1301
        %1506 = vmatpush.bf16.msra.mxu0 %v1295
        %1507 = vmatpush.bf16.msra.mxu0 %v1289
        %1508 = vmatpush.bf16.msra.mxu0 %v1283
        %1509 = vmatpush.bf16.msra.mxu0 %v1277
        %1510 = vmatpush.bf16.msra.mxu0 %v1271
        %1511 = vmatpush.bf16.msra.mxu0 %v1265
        %1512 = vmatmul.bf16.gmra.mxu0 %v925
        %v1513 = vpop.f32.mrf.mxu0
        %v1514 = vadd.f32 %v1500, %v1513
        %v1515 = vpop.f32.mrf.mxu0
        %v1516 = vadd.f32 %v1502, %v1515
        %1517 = vdwg.mxu0
        %1518 = vmatpush.bf16.msra.mxu0 %v1260
        %1519 = vmatpush.bf16.msra.mxu0 %v1254
        %1520 = vmatpush.bf16.msra.mxu0 %v1248
        %1521 = vmatpush.bf16.msra.mxu0 %v1242
        %1522 = vmatpush.bf16.msra.mxu0 %v1236
        %1523 = vmatpush.bf16.msra.mxu0 %v1230
        %1524 = vmatpush.bf16.msra.mxu0 %v1224
        %1525 = vmatpush.bf16.msra.mxu0 %v1218
        %1526 = vmatmul.bf16.gmra.mxu0 %v924
        %v1527 = vpop.f32.mrf.mxu0
        %v1528 = vadd.f32 0.0, %v1527
        %v1529 = vpop.f32.mrf.mxu0
        %v1530 = vadd.f32 0.0, %v1529
        %1531 = vdwg.mxu0
        %1532 = vmatpush.bf16.msra.mxu0 %v1308
        %1533 = vmatpush.bf16.msra.mxu0 %v1302
        %1534 = vmatpush.bf16.msra.mxu0 %v1296
        %1535 = vmatpush.bf16.msra.mxu0 %v1290
        %1536 = vmatpush.bf16.msra.mxu0 %v1284
        %1537 = vmatpush.bf16.msra.mxu0 %v1278
        %1538 = vmatpush.bf16.msra.mxu0 %v1272
        %1539 = vmatpush.bf16.msra.mxu0 %v1266
        %1540 = vmatmul.bf16.gmra.mxu0 %v925
        %v1541 = vpop.f32.mrf.mxu0
        %v1542 = vadd.f32 %v1528, %v1541
        %v1543 = vpop.f32.mrf.mxu0
        %v1544 = vadd.f32 %v1530, %v1543
        %1545 = vdwg.mxu0
        %1546 = vmatpush.bf16.msra.mxu0 %v1261
        %1547 = vmatpush.bf16.msra.mxu0 %v1255
        %1548 = vmatpush.bf16.msra.mxu0 %v1249
        %1549 = vmatpush.bf16.msra.mxu0 %v1243
        %1550 = vmatpush.bf16.msra.mxu0 %v1237
        %1551 = vmatpush.bf16.msra.mxu0 %v1231
        %1552 = vmatpush.bf16.msra.mxu0 %v1225
        %1553 = vmatpush.bf16.msra.mxu0 %v1219
        %1554 = vmatmul.bf16.gmra.mxu0 %v924
        %v1555 = vpop.f32.mrf.mxu0
        %v1556 = vadd.f32 0.0, %v1555
        %v1557 = vpop.f32.mrf.mxu0
        %v1558 = vadd.f32 0.0, %v1557
        %1559 = vdwg.mxu0
        %1560 = vmatpush.bf16.msra.mxu0 %v1309
        %1561 = vmatpush.bf16.msra.mxu0 %v1303
        %1562 = vmatpush.bf16.msra.mxu0 %v1297
        %1563 = vmatpush.bf16.msra.mxu0 %v1291
        %1564 = vmatpush.bf16.msra.mxu0 %v1285
        %1565 = vmatpush.bf16.msra.mxu0 %v1279
        %1566 = vmatpush.bf16.msra.mxu0 %v1273
        %1567 = vmatpush.bf16.msra.mxu0 %v1267
        %1568 = vmatmul.bf16.gmra.mxu0 %v925
        %v1569 = vpop.f32.mrf.mxu0
        %v1570 = vadd.f32 %v1556, %v1569
        %v1571 = vpop.f32.mrf.mxu0
        %v1572 = vadd.f32 %v1558, %v1571
        %1573 = vdwg.mxu0
        %v1574 = vadd.f32 %v912, %v1430
        %v1575 = vadd.f32 %v913, %v1458
        %v1576 = vadd.f32 %v914, %v1486
        %v1577 = vadd.f32 %v915, %v1514
        %v1578 = vadd.f32 %v918, %v1432
        %v1579 = vadd.f32 %v919, %v1460
        %v1580 = vadd.f32 %v920, %v1488
        %v1581 = vadd.f32 %v921, %v1516
        %v1582 = vxor.u32 %v1574, 2147483648
        %v1583 = vxor.u32 %v1575, 2147483648
        %v1584 = vxor.u32 %v1576, 2147483648
        %v1585 = vxor.u32 %v1577, 2147483648
        %v1586 = vxor.u32 %v1578, 2147483648
        %v1587 = vxor.u32 %v1579, 2147483648
        %v1588 = vxor.u32 %v1580, 2147483648
        %v1589 = vxor.u32 %v1581, 2147483648
        %v1590 = vmul.f32 %v1582, 1.442695
        %v1591 = vpow.pop %v1590
        %v1592 = vmul.f32 %v1583, 1.442695
        %v1593 = vpow.pop %v1592
        %v1594 = vmul.f32 %v1584, 1.442695
        %v1595 = vpow.pop %v1594
        %v1596 = vmul.f32 %v1585, 1.442695
        %v1597 = vpow.pop %v1596
        %v1598 = vmul.f32 %v1586, 1.442695
        %v1599 = vpow.pop %v1598
        %v1600 = vmul.f32 %v1587, 1.442695
        %v1601 = vpow.pop %v1600
        %v1602 = vmul.f32 %v1588, 1.442695
        %v1603 = vpow.pop %v1602
        %v1604 = vmul.f32 %v1589, 1.442695
        %v1605 = vpow.pop %v1604
        %v1606 = vadd.f32 %v1591, 1.0
        %v1607 = vadd.f32 %v1593, 1.0
        %v1608 = vadd.f32 %v1595, 1.0
        %v1609 = vadd.f32 %v1597, 1.0
        %v1610 = vadd.f32 %v1599, 1.0
        %v1611 = vadd.f32 %v1601, 1.0
        %v1612 = vadd.f32 %v1603, 1.0
        %v1613 = vadd.f32 %v1605, 1.0
        %v1614 = vrcp.pop %v1606
        %v1615 = vmul.f32 %v1606, %v1614
        %v1616 = vsub.f32 1.0, %v1615
        %v1617 = vmul.f32 %v1614, %v1616
        %v1618 = vadd.f32 %v1614, %v1617
        %vm1619 = vweird.f32 %v1606
        %vm1620 = vweird.f32 %v1614
        %vm1621 = vmor %vm1619, %vm1620
        %v1622 = vsel %vm1621, %v1614, %v1618
        %v1623 = vand.u32 2147483647, %v1606
        %vm1624 = vcmp.eq.f32.partialorder %v1623, 8.507059e+37
        %v1625 = vand.u32 %v1606, 2147483648
        %v1626 = vor.u32 1.1754944e-38, %v1625
        %v1627 = vsel %vm1624, %v1626, %v1622
        %v1628 = vmul.f32 1.0, %v1627
        %v1629 = vrcp.pop %v1607
        %v1630 = vmul.f32 %v1607, %v1629
        %v1631 = vsub.f32 1.0, %v1630
        %v1632 = vmul.f32 %v1629, %v1631
        %v1633 = vadd.f32 %v1629, %v1632
        %vm1634 = vweird.f32 %v1607
        %vm1635 = vweird.f32 %v1629
        %vm1636 = vmor %vm1634, %vm1635
        %v1637 = vsel %vm1636, %v1629, %v1633
        %v1638 = vand.u32 2147483647, %v1607
        %vm1639 = vcmp.eq.f32.partialorder %v1638, 8.507059e+37
        %v1640 = vand.u32 %v1607, 2147483648
        %v1641 = vor.u32 1.1754944e-38, %v1640
        %v1642 = vsel %vm1639, %v1641, %v1637
        %v1643 = vmul.f32 1.0, %v1642
        %v1644 = vrcp.pop %v1608
        %v1645 = vmul.f32 %v1608, %v1644
        %v1646 = vsub.f32 1.0, %v1645
        %v1647 = vmul.f32 %v1644, %v1646
        %v1648 = vadd.f32 %v1644, %v1647
        %vm1649 = vweird.f32 %v1608
        %vm1650 = vweird.f32 %v1644
        %vm1651 = vmor %vm1649, %vm1650
        %v1652 = vsel %vm1651, %v1644, %v1648
        %v1653 = vand.u32 2147483647, %v1608
        %vm1654 = vcmp.eq.f32.partialorder %v1653, 8.507059e+37
        %v1655 = vand.u32 %v1608, 2147483648
        %v1656 = vor.u32 1.1754944e-38, %v1655
        %v1657 = vsel %vm1654, %v1656, %v1652
        %v1658 = vmul.f32 1.0, %v1657
        %v1659 = vrcp.pop %v1609
        %v1660 = vmul.f32 %v1609, %v1659
        %v1661 = vsub.f32 1.0, %v1660
        %v1662 = vmul.f32 %v1659, %v1661
        %v1663 = vadd.f32 %v1659, %v1662
        %vm1664 = vweird.f32 %v1609
        %vm1665 = vweird.f32 %v1659
        %vm1666 = vmor %vm1664, %vm1665
        %v1667 = vsel %vm1666, %v1659, %v1663
        %v1668 = vand.u32 2147483647, %v1609
        %vm1669 = vcmp.eq.f32.partialorder %v1668, 8.507059e+37
        %v1670 = vand.u32 %v1609, 2147483648
        %v1671 = vor.u32 1.1754944e-38, %v1670
        %v1672 = vsel %vm1669, %v1671, %v1667
        %v1673 = vmul.f32 1.0, %v1672
        %v1674 = vrcp.pop %v1610
        %v1675 = vmul.f32 %v1610, %v1674
        %v1676 = vsub.f32 1.0, %v1675
        %v1677 = vmul.f32 %v1674, %v1676
        %v1678 = vadd.f32 %v1674, %v1677
        %vm1679 = vweird.f32 %v1610
        %vm1680 = vweird.f32 %v1674
        %vm1681 = vmor %vm1679, %vm1680
        %v1682 = vsel %vm1681, %v1674, %v1678
        %v1683 = vand.u32 2147483647, %v1610
        %vm1684 = vcmp.eq.f32.partialorder %v1683, 8.507059e+37
        %v1685 = vand.u32 %v1610, 2147483648
        %v1686 = vor.u32 1.1754944e-38, %v1685
        %v1687 = vsel %vm1684, %v1686, %v1682
        %v1688 = vmul.f32 1.0, %v1687
        %v1689 = vrcp.pop %v1611
        %v1690 = vmul.f32 %v1611, %v1689
        %v1691 = vsub.f32 1.0, %v1690
        %v1692 = vmul.f32 %v1689, %v1691
        %v1693 = vadd.f32 %v1689, %v1692
        %vm1694 = vweird.f32 %v1611
        %vm1695 = vweird.f32 %v1689
        %vm1696 = vmor %vm1694, %vm1695
        %v1697 = vsel %vm1696, %v1689, %v1693
        %v1698 = vand.u32 2147483647, %v1611
        %vm1699 = vcmp.eq.f32.partialorder %v1698, 8.507059e+37
        %v1700 = vand.u32 %v1611, 2147483648
        %v1701 = vor.u32 1.1754944e-38, %v1700
        %v1702 = vsel %vm1699, %v1701, %v1697
        %v1703 = vmul.f32 1.0, %v1702
        %v1704 = vrcp.pop %v1612
        %v1705 = vmul.f32 %v1612, %v1704
        %v1706 = vsub.f32 1.0, %v1705
        %v1707 = vmul.f32 %v1704, %v1706
        %v1708 = vadd.f32 %v1704, %v1707
        %vm1709 = vweird.f32 %v1612
        %vm1710 = vweird.f32 %v1704
        %vm1711 = vmor %vm1709, %vm1710
        %v1712 = vsel %vm1711, %v1704, %v1708
        %v1713 = vand.u32 2147483647, %v1612
        %vm1714 = vcmp.eq.f32.partialorder %v1713, 8.507059e+37
        %v1715 = vand.u32 %v1612, 2147483648
        %v1716 = vor.u32 1.1754944e-38, %v1715
        %v1717 = vsel %vm1714, %v1716, %v1712
        %v1718 = vmul.f32 1.0, %v1717
        %v1719 = vrcp.pop %v1613
        %v1720 = vmul.f32 %v1613, %v1719
        %v1721 = vsub.f32 1.0, %v1720
        %v1722 = vmul.f32 %v1719, %v1721
        %v1723 = vadd.f32 %v1719, %v1722
        %vm1724 = vweird.f32 %v1613
        %vm1725 = vweird.f32 %v1719
        %vm1726 = vmor %vm1724, %vm1725
        %v1727 = vsel %vm1726, %v1719, %v1723
        %v1728 = vand.u32 2147483647, %v1613
        %vm1729 = vcmp.eq.f32.partialorder %v1728, 8.507059e+37
        %v1730 = vand.u32 %v1613, 2147483648
        %v1731 = vor.u32 1.1754944e-38, %v1730
        %v1732 = vsel %vm1729, %v1731, %v1727
        %v1733 = vmul.f32 1.0, %v1732
        %v1734 = vadd.f32 %v1542, %v871
        %v1735 = vadd.f32 %v1570, %v872
        %v1736 = vadd.f32 %v1544, %v871
        %v1737 = vadd.f32 %v1572, %v872
        %v1738 = vmul.f32 %v1628, %v1734
        %v1739 = vmul.f32 %v1643, %v1735
        %v1740 = vmul.f32 %v1688, %v1736
        %v1741 = vmul.f32 %v1703, %v1737
        %v1742 = vadd.f32 %v916, %v1738
        %v1743 = vadd.f32 %v917, %v1739
        %v1744 = vadd.f32 %v922, %v1740
        %v1745 = vadd.f32 %v923, %v1741
        %v1746 = vtanh.pop %v1742
        %v1747 = vtanh.pop %v1743
        %v1748 = vtanh.pop %v1744
        %v1749 = vtanh.pop %v1745
        %v1750 = vsub.f32 1.0, %v1658
        %v1751 = vsub.f32 1.0, %v1673
        %v1752 = vsub.f32 1.0, %v1718
        %v1753 = vsub.f32 1.0, %v1733
        %v1754 = vmul.f32 %v1750, %v1746
        %v1755 = vmul.f32 %v1751, %v1747
        %v1756 = vmul.f32 %v1752, %v1748
        %v1757 = vmul.f32 %v1753, %v1749
        %v1758 = vmul.f32 %v1658, %v905
        %v1759 = vmul.f32 %v1673, %v906
        %v1760 = vmul.f32 %v1718, %v907
        %v1761 = vmul.f32 %v1733, %v908
        %v1762 = vadd.f32 %v1754, %v1758
        %v1763 = vadd.f32 %v1755, %v1759
        %v1764 = vadd.f32 %v1756, %v1760
        %v1765 = vadd.f32 %v1757, %v1761
        %v1766 = vstv %s904
        %vm1767 = vcmp.ge.s32.totalorder %v1766, %v890
        %vm1768 = vcmp.ge.s32.totalorder %v1766, %v891
        %vm1769 = vcmp.ge.s32.totalorder %v1766, %v892
        %vm1770 = vcmp.ge.s32.totalorder %v1766, %v893
        %vm1771 = vcmp.lt.s32.totalorder %v1766, %v900
        %vm1772 = vcmp.lt.s32.totalorder %v1766, %v901
        %vm1773 = vcmp.lt.s32.totalorder %v1766, %v902
        %vm1774 = vcmp.lt.s32.totalorder %v1766, %v903
        %vm1775 = vmand %vm1767, %vm1771
        %vm1776 = vmand %vm1768, %vm1772
        %vm1777 = vmand %vm1769, %vm1773
        %vm1778 = vmand %vm1770, %vm1774
        %v1779 = vsel %vm1775, %v1762, %v905
        %v1780 = vsel %vm1776, %v1763, %v906
        %v1781 = vsel %vm1777, %v1764, %v907
        %v1782 = vsel %vm1778, %v1765, %v908
        %s1783 = sadd.s32 %s904, 1
        %s1784 = smul.u32 2, 6
        %s1785 = smul.addr %s1784, 8
        %s1786 = scalar_lea.vmem [#allocation2], %s1785
        %v1787 = vld [vmem:[%s1786] sm:$0xff]
        %v1788 = vld [vmem:[%s1786 + $0x8] sm:$0xff]
        %v1789 = vld [vmem:[%s1786 + $0x10] sm:$0xff]
        %v1790 = vld [vmem:[%s1786 + $0x18] sm:$0xff]
        %v1791 = vld [vmem:[%s1786 + $0x20] sm:$0xff]
        %v1792 = vld [vmem:[%s1786 + $0x28] sm:$0xff]
        %v1793 = vld [vmem:[%s1786 + $0x30] sm:$0xff]
        %v1794 = vld [vmem:[%s1786 + $0x38] sm:$0xff]
        %v1795 = vld [vmem:[%s1786 + $0x40] sm:$0xff]
        %v1796 = vld [vmem:[%s1786 + $0x48] sm:$0xff]
        %v1797 = vld [vmem:[%s1786 + $0x50] sm:$0xff]
        %v1798 = vld [vmem:[%s1786 + $0x58] sm:$0xff]
        %v1799 = vpack.c.bf16 %v1781, %v1779
        %v1800 = vpack.c.bf16 %v1782, %v1780
        %1801 = vmatpush.bf16.msra.mxu0 %v1256
        %1802 = vmatpush.bf16.msra.mxu0 %v1250
        %1803 = vmatpush.bf16.msra.mxu0 %v1244
        %1804 = vmatpush.bf16.msra.mxu0 %v1238
        %1805 = vmatpush.bf16.msra.mxu0 %v1232
        %1806 = vmatpush.bf16.msra.mxu0 %v1226
        %1807 = vmatpush.bf16.msra.mxu0 %v1220
        %1808 = vmatpush.bf16.msra.mxu0 %v1214
        %1809 = vmatmul.bf16.gmra.mxu0 %v1799
        %v1810 = vpop.f32.mrf.mxu0
        %v1811 = vadd.f32 0.0, %v1810
        %v1812 = vpop.f32.mrf.mxu0
        %v1813 = vadd.f32 0.0, %v1812
        %1814 = vdwg.mxu0
        %1815 = vmatpush.bf16.msra.mxu0 %v1304
        %1816 = vmatpush.bf16.msra.mxu0 %v1298
        %1817 = vmatpush.bf16.msra.mxu0 %v1292
        %1818 = vmatpush.bf16.msra.mxu0 %v1286
        %1819 = vmatpush.bf16.msra.mxu0 %v1280
        %1820 = vmatpush.bf16.msra.mxu0 %v1274
        %1821 = vmatpush.bf16.msra.mxu0 %v1268
        %1822 = vmatpush.bf16.msra.mxu0 %v1262
        %1823 = vmatmul.bf16.gmra.mxu0 %v1800
        %v1824 = vpop.f32.mrf.mxu0
        %v1825 = vadd.f32 %v1811, %v1824
        %v1826 = vpop.f32.mrf.mxu0
        %v1827 = vadd.f32 %v1813, %v1826
        %1828 = vdwg.mxu0
        %1829 = vmatpush.bf16.msra.mxu0 %v1257
        %1830 = vmatpush.bf16.msra.mxu0 %v1251
        %1831 = vmatpush.bf16.msra.mxu0 %v1245
        %1832 = vmatpush.bf16.msra.mxu0 %v1239
        %1833 = vmatpush.bf16.msra.mxu0 %v1233
        %1834 = vmatpush.bf16.msra.mxu0 %v1227
        %1835 = vmatpush.bf16.msra.mxu0 %v1221
        %1836 = vmatpush.bf16.msra.mxu0 %v1215
        %1837 = vmatmul.bf16.gmra.mxu0 %v1799
        %v1838 = vpop.f32.mrf.mxu0
        %v1839 = vadd.f32 0.0, %v1838
        %v1840 = vpop.f32.mrf.mxu0
        %v1841 = vadd.f32 0.0, %v1840
        %1842 = vdwg.mxu0
        %1843 = vmatpush.bf16.msra.mxu0 %v1305
        %1844 = vmatpush.bf16.msra.mxu0 %v1299
        %1845 = vmatpush.bf16.msra.mxu0 %v1293
        %1846 = vmatpush.bf16.msra.mxu0 %v1287
        %1847 = vmatpush.bf16.msra.mxu0 %v1281
        %1848 = vmatpush.bf16.msra.mxu0 %v1275
        %1849 = vmatpush.bf16.msra.mxu0 %v1269
        %1850 = vmatpush.bf16.msra.mxu0 %v1263
        %1851 = vmatmul.bf16.gmra.mxu0 %v1800
        %v1852 = vpop.f32.mrf.mxu0
        %v1853 = vadd.f32 %v1839, %v1852
        %v1854 = vpop.f32.mrf.mxu0
        %v1855 = vadd.f32 %v1841, %v1854
        %1856 = vdwg.mxu0
        %1857 = vmatpush.bf16.msra.mxu0 %v1258
        %1858 = vmatpush.bf16.msra.mxu0 %v1252
        %1859 = vmatpush.bf16.msra.mxu0 %v1246
        %1860 = vmatpush.bf16.msra.mxu0 %v1240
        %1861 = vmatpush.bf16.msra.mxu0 %v1234
        %1862 = vmatpush.bf16.msra.mxu0 %v1228
        %1863 = vmatpush.bf16.msra.mxu0 %v1222
        %1864 = vmatpush.bf16.msra.mxu0 %v1216
        %1865 = vmatmul.bf16.gmra.mxu0 %v1799
        %v1866 = vpop.f32.mrf.mxu0
        %v1867 = vadd.f32 0.0, %v1866
        %v1868 = vpop.f32.mrf.mxu0
        %v1869 = vadd.f32 0.0, %v1868
        %1870 = vdwg.mxu0
        %1871 = vmatpush.bf16.msra.mxu0 %v1306
        %1872 = vmatpush.bf16.msra.mxu0 %v1300
        %1873 = vmatpush.bf16.msra.mxu0 %v1294
        %1874 = vmatpush.bf16.msra.mxu0 %v1288
        %1875 = vmatpush.bf16.msra.mxu0 %v1282
        %1876 = vmatpush.bf16.msra.mxu0 %v1276
        %1877 = vmatpush.bf16.msra.mxu0 %v1270
        %1878 = vmatpush.bf16.msra.mxu0 %v1264
        %1879 = vmatmul.bf16.gmra.mxu0 %v1800
        %v1880 = vpop.f32.mrf.mxu0
        %v1881 = vadd.f32 %v1867, %v1880
        %v1882 = vpop.f32.mrf.mxu0
        %v1883 = vadd.f32 %v1869, %v1882
        %1884 = vdwg.mxu0
        %1885 = vmatpush.bf16.msra.mxu0 %v1259
        %1886 = vmatpush.bf16.msra.mxu0 %v1253
        %1887 = vmatpush.bf16.msra.mxu0 %v1247
        %1888 = vmatpush.bf16.msra.mxu0 %v1241
        %1889 = vmatpush.bf16.msra.mxu0 %v1235
        %1890 = vmatpush.bf16.msra.mxu0 %v1229
        %1891 = vmatpush.bf16.msra.mxu0 %v1223
        %1892 = vmatpush.bf16.msra.mxu0 %v1217
        %1893 = vmatmul.bf16.gmra.mxu0 %v1799
        %v1894 = vpop.f32.mrf.mxu0
        %v1895 = vadd.f32 0.0, %v1894
        %v1896 = vpop.f32.mrf.mxu0
        %v1897 = vadd.f32 0.0, %v1896
        %1898 = vdwg.mxu0
        %1899 = vmatpush.bf16.msra.mxu0 %v1307
        %1900 = vmatpush.bf16.msra.mxu0 %v1301
        %1901 = vmatpush.bf16.msra.mxu0 %v1295
        %1902 = vmatpush.bf16.msra.mxu0 %v1289
        %1903 = vmatpush.bf16.msra.mxu0 %v1283
        %1904 = vmatpush.bf16.msra.mxu0 %v1277
        %1905 = vmatpush.bf16.msra.mxu0 %v1271
        %1906 = vmatpush.bf16.msra.mxu0 %v1265
        %1907 = vmatmul.bf16.gmra.mxu0 %v1800
        %v1908 = vpop.f32.mrf.mxu0
        %v1909 = vadd.f32 %v1895, %v1908
        %v1910 = vpop.f32.mrf.mxu0
        %v1911 = vadd.f32 %v1897, %v1910
        %1912 = vdwg.mxu0
        %1913 = vmatpush.bf16.msra.mxu0 %v1260
        %1914 = vmatpush.bf16.msra.mxu0 %v1254
        %1915 = vmatpush.bf16.msra.mxu0 %v1248
        %1916 = vmatpush.bf16.msra.mxu0 %v1242
        %1917 = vmatpush.bf16.msra.mxu0 %v1236
        %1918 = vmatpush.bf16.msra.mxu0 %v1230
        %1919 = vmatpush.bf16.msra.mxu0 %v1224
        %1920 = vmatpush.bf16.msra.mxu0 %v1218
        %1921 = vmatmul.bf16.gmra.mxu0 %v1799
        %v1922 = vpop.f32.mrf.mxu0
        %v1923 = vadd.f32 0.0, %v1922
        %v1924 = vpop.f32.mrf.mxu0
        %v1925 = vadd.f32 0.0, %v1924
        %1926 = vdwg.mxu0
        %1927 = vmatpush.bf16.msra.mxu0 %v1308
        %1928 = vmatpush.bf16.msra.mxu0 %v1302
        %1929 = vmatpush.bf16.msra.mxu0 %v1296
        %1930 = vmatpush.bf16.msra.mxu0 %v1290
        %1931 = vmatpush.bf16.msra.mxu0 %v1284
        %1932 = vmatpush.bf16.msra.mxu0 %v1278
        %1933 = vmatpush.bf16.msra.mxu0 %v1272
        %1934 = vmatpush.bf16.msra.mxu0 %v1266
        %1935 = vmatmul.bf16.gmra.mxu0 %v1800
        %v1936 = vpop.f32.mrf.mxu0
        %v1937 = vadd.f32 %v1923, %v1936
        %v1938 = vpop.f32.mrf.mxu0
        %v1939 = vadd.f32 %v1925, %v1938
        %1940 = vdwg.mxu0
        %1941 = vmatpush.bf16.msra.mxu0 %v1261
        %1942 = vmatpush.bf16.msra.mxu0 %v1255
        %1943 = vmatpush.bf16.msra.mxu0 %v1249
        %1944 = vmatpush.bf16.msra.mxu0 %v1243
        %1945 = vmatpush.bf16.msra.mxu0 %v1237
        %1946 = vmatpush.bf16.msra.mxu0 %v1231
        %1947 = vmatpush.bf16.msra.mxu0 %v1225
        %1948 = vmatpush.bf16.msra.mxu0 %v1219
        %1949 = vmatmul.bf16.gmra.mxu0 %v1799
        %v1950 = vpop.f32.mrf.mxu0
        %v1951 = vadd.f32 0.0, %v1950
        %v1952 = vpop.f32.mrf.mxu0
        %v1953 = vadd.f32 0.0, %v1952
        %1954 = vdwg.mxu0
        %1955 = vmatpush.bf16.msra.mxu0 %v1309
        %1956 = vmatpush.bf16.msra.mxu0 %v1303
        %1957 = vmatpush.bf16.msra.mxu0 %v1297
        %1958 = vmatpush.bf16.msra.mxu0 %v1291
        %1959 = vmatpush.bf16.msra.mxu0 %v1285
        %1960 = vmatpush.bf16.msra.mxu0 %v1279
        %1961 = vmatpush.bf16.msra.mxu0 %v1273
        %1962 = vmatpush.bf16.msra.mxu0 %v1267
        %1963 = vmatmul.bf16.gmra.mxu0 %v1800
        %v1964 = vpop.f32.mrf.mxu0
        %v1965 = vadd.f32 %v1951, %v1964
        %v1966 = vpop.f32.mrf.mxu0
        %v1967 = vadd.f32 %v1953, %v1966
        %1968 = vdwg.mxu0
        %v1969 = vadd.f32 %v1787, %v1825
        %v1970 = vadd.f32 %v1788, %v1853
        %v1971 = vadd.f32 %v1789, %v1881
        %v1972 = vadd.f32 %v1790, %v1909
        %v1973 = vadd.f32 %v1793, %v1827
        %v1974 = vadd.f32 %v1794, %v1855
        %v1975 = vadd.f32 %v1795, %v1883
        %v1976 = vadd.f32 %v1796, %v1911
        %v1977 = vxor.u32 %v1969, 2147483648
        %v1978 = vxor.u32 %v1970, 2147483648
        %v1979 = vxor.u32 %v1971, 2147483648
        %v1980 = vxor.u32 %v1972, 2147483648
        %v1981 = vxor.u32 %v1973, 2147483648
        %v1982 = vxor.u32 %v1974, 2147483648
        %v1983 = vxor.u32 %v1975, 2147483648
        %v1984 = vxor.u32 %v1976, 2147483648
        %v1985 = vmul.f32 %v1977, 1.442695
        %v1986 = vpow.pop %v1985
        %v1987 = vmul.f32 %v1978, 1.442695
        %v1988 = vpow.pop %v1987
        %v1989 = vmul.f32 %v1979, 1.442695
        %v1990 = vpow.pop %v1989
        %v1991 = vmul.f32 %v1980, 1.442695
        %v1992 = vpow.pop %v1991
        %v1993 = vmul.f32 %v1981, 1.442695
        %v1994 = vpow.pop %v1993
        %v1995 = vmul.f32 %v1982, 1.442695
        %v1996 = vpow.pop %v1995
        %v1997 = vmul.f32 %v1983, 1.442695
        %v1998 = vpow.pop %v1997
        %v1999 = vmul.f32 %v1984, 1.442695
        %v2000 = vpow.pop %v1999
        %v2001 = vadd.f32 %v1986, 1.0
        %v2002 = vadd.f32 %v1988, 1.0
        %v2003 = vadd.f32 %v1990, 1.0
        %v2004 = vadd.f32 %v1992, 1.0
        %v2005 = vadd.f32 %v1994, 1.0
        %v2006 = vadd.f32 %v1996, 1.0
        %v2007 = vadd.f32 %v1998, 1.0
        %v2008 = vadd.f32 %v2000, 1.0
        %v2009 = vrcp.pop %v2001
        %v2010 = vmul.f32 %v2001, %v2009
        %v2011 = vsub.f32 1.0, %v2010
        %v2012 = vmul.f32 %v2009, %v2011
        %v2013 = vadd.f32 %v2009, %v2012
        %vm2014 = vweird.f32 %v2001
        %vm2015 = vweird.f32 %v2009
        %vm2016 = vmor %vm2014, %vm2015
        %v2017 = vsel %vm2016, %v2009, %v2013
        %v2018 = vand.u32 2147483647, %v2001
        %vm2019 = vcmp.eq.f32.partialorder %v2018, 8.507059e+37
        %v2020 = vand.u32 %v2001, 2147483648
        %v2021 = vor.u32 1.1754944e-38, %v2020
        %v2022 = vsel %vm2019, %v2021, %v2017
        %v2023 = vmul.f32 1.0, %v2022
        %v2024 = vrcp.pop %v2002
        %v2025 = vmul.f32 %v2002, %v2024
        %v2026 = vsub.f32 1.0, %v2025
        %v2027 = vmul.f32 %v2024, %v2026
        %v2028 = vadd.f32 %v2024, %v2027
        %vm2029 = vweird.f32 %v2002
        %vm2030 = vweird.f32 %v2024
        %vm2031 = vmor %vm2029, %vm2030
        %v2032 = vsel %vm2031, %v2024, %v2028
        %v2033 = vand.u32 2147483647, %v2002
        %vm2034 = vcmp.eq.f32.partialorder %v2033, 8.507059e+37
        %v2035 = vand.u32 %v2002, 2147483648
        %v2036 = vor.u32 1.1754944e-38, %v2035
        %v2037 = vsel %vm2034, %v2036, %v2032
        %v2038 = vmul.f32 1.0, %v2037
        %v2039 = vrcp.pop %v2003
        %v2040 = vmul.f32 %v2003, %v2039
        %v2041 = vsub.f32 1.0, %v2040
        %v2042 = vmul.f32 %v2039, %v2041
        %v2043 = vadd.f32 %v2039, %v2042
        %vm2044 = vweird.f32 %v2003
        %vm2045 = vweird.f32 %v2039
        %vm2046 = vmor %vm2044, %vm2045
        %v2047 = vsel %vm2046, %v2039, %v2043
        %v2048 = vand.u32 2147483647, %v2003
        %vm2049 = vcmp.eq.f32.partialorder %v2048, 8.507059e+37
        %v2050 = vand.u32 %v2003, 2147483648
        %v2051 = vor.u32 1.1754944e-38, %v2050
        %v2052 = vsel %vm2049, %v2051, %v2047
        %v2053 = vmul.f32 1.0, %v2052
        %v2054 = vrcp.pop %v2004
        %v2055 = vmul.f32 %v2004, %v2054
        %v2056 = vsub.f32 1.0, %v2055
        %v2057 = vmul.f32 %v2054, %v2056
        %v2058 = vadd.f32 %v2054, %v2057
        %vm2059 = vweird.f32 %v2004
        %vm2060 = vweird.f32 %v2054
        %vm2061 = vmor %vm2059, %vm2060
        %v2062 = vsel %vm2061, %v2054, %v2058
        %v2063 = vand.u32 2147483647, %v2004
        %vm2064 = vcmp.eq.f32.partialorder %v2063, 8.507059e+37
        %v2065 = vand.u32 %v2004, 2147483648
        %v2066 = vor.u32 1.1754944e-38, %v2065
        %v2067 = vsel %vm2064, %v2066, %v2062
        %v2068 = vmul.f32 1.0, %v2067
        %v2069 = vrcp.pop %v2005
        %v2070 = vmul.f32 %v2005, %v2069
        %v2071 = vsub.f32 1.0, %v2070
        %v2072 = vmul.f32 %v2069, %v2071
        %v2073 = vadd.f32 %v2069, %v2072
        %vm2074 = vweird.f32 %v2005
        %vm2075 = vweird.f32 %v2069
        %vm2076 = vmor %vm2074, %vm2075
        %v2077 = vsel %vm2076, %v2069, %v2073
        %v2078 = vand.u32 2147483647, %v2005
        %vm2079 = vcmp.eq.f32.partialorder %v2078, 8.507059e+37
        %v2080 = vand.u32 %v2005, 2147483648
        %v2081 = vor.u32 1.1754944e-38, %v2080
        %v2082 = vsel %vm2079, %v2081, %v2077
        %v2083 = vmul.f32 1.0, %v2082
        %v2084 = vrcp.pop %v2006
        %v2085 = vmul.f32 %v2006, %v2084
        %v2086 = vsub.f32 1.0, %v2085
        %v2087 = vmul.f32 %v2084, %v2086
        %v2088 = vadd.f32 %v2084, %v2087
        %vm2089 = vweird.f32 %v2006
        %vm2090 = vweird.f32 %v2084
        %vm2091 = vmor %vm2089, %vm2090
        %v2092 = vsel %vm2091, %v2084, %v2088
        %v2093 = vand.u32 2147483647, %v2006
        %vm2094 = vcmp.eq.f32.partialorder %v2093, 8.507059e+37
        %v2095 = vand.u32 %v2006, 2147483648
        %v2096 = vor.u32 1.1754944e-38, %v2095
        %v2097 = vsel %vm2094, %v2096, %v2092
        %v2098 = vmul.f32 1.0, %v2097
        %v2099 = vrcp.pop %v2007
        %v2100 = vmul.f32 %v2007, %v2099
        %v2101 = vsub.f32 1.0, %v2100
        %v2102 = vmul.f32 %v2099, %v2101
        %v2103 = vadd.f32 %v2099, %v2102
        %vm2104 = vweird.f32 %v2007
        %vm2105 = vweird.f32 %v2099
        %vm2106 = vmor %vm2104, %vm2105
        %v2107 = vsel %vm2106, %v2099, %v2103
        %v2108 = vand.u32 2147483647, %v2007
        %vm2109 = vcmp.eq.f32.partialorder %v2108, 8.507059e+37
        %v2110 = vand.u32 %v2007, 2147483648
        %v2111 = vor.u32 1.1754944e-38, %v2110
        %v2112 = vsel %vm2109, %v2111, %v2107
        %v2113 = vmul.f32 1.0, %v2112
        %v2114 = vrcp.pop %v2008
        %v2115 = vmul.f32 %v2008, %v2114
        %v2116 = vsub.f32 1.0, %v2115
        %v2117 = vmul.f32 %v2114, %v2116
        %v2118 = vadd.f32 %v2114, %v2117
        %vm2119 = vweird.f32 %v2008
        %vm2120 = vweird.f32 %v2114
        %vm2121 = vmor %vm2119, %vm2120
        %v2122 = vsel %vm2121, %v2114, %v2118
        %v2123 = vand.u32 2147483647, %v2008
        %vm2124 = vcmp.eq.f32.partialorder %v2123, 8.507059e+37
        %v2125 = vand.u32 %v2008, 2147483648
        %v2126 = vor.u32 1.1754944e-38, %v2125
        %v2127 = vsel %vm2124, %v2126, %v2122
        %v2128 = vmul.f32 1.0, %v2127
        %v2129 = vadd.f32 %v1937, %v871
        %v2130 = vadd.f32 %v1965, %v872
        %v2131 = vadd.f32 %v1939, %v871
        %v2132 = vadd.f32 %v1967, %v872
        %v2133 = vmul.f32 %v2023, %v2129
        %v2134 = vmul.f32 %v2038, %v2130
        %v2135 = vmul.f32 %v2083, %v2131
        %v2136 = vmul.f32 %v2098, %v2132
        %v2137 = vadd.f32 %v1791, %v2133
        %v2138 = vadd.f32 %v1792, %v2134
        %v2139 = vadd.f32 %v1797, %v2135
        %v2140 = vadd.f32 %v1798, %v2136
        %v2141 = vtanh.pop %v2137
        %v2142 = vtanh.pop %v2138
        %v2143 = vtanh.pop %v2139
        %v2144 = vtanh.pop %v2140
        %v2145 = vsub.f32 1.0, %v2053
        %v2146 = vsub.f32 1.0, %v2068
        %v2147 = vsub.f32 1.0, %v2113
        %v2148 = vsub.f32 1.0, %v2128
        %v2149 = vmul.f32 %v2145, %v2141
        %v2150 = vmul.f32 %v2146, %v2142
        %v2151 = vmul.f32 %v2147, %v2143
        %v2152 = vmul.f32 %v2148, %v2144
        %v2153 = vmul.f32 %v2053, %v1779
        %v2154 = vmul.f32 %v2068, %v1780
        %v2155 = vmul.f32 %v2113, %v1781
        %v2156 = vmul.f32 %v2128, %v1782
        %v2157 = vadd.f32 %v2149, %v2153
        %v2158 = vadd.f32 %v2150, %v2154
        %v2159 = vadd.f32 %v2151, %v2155
        %v2160 = vadd.f32 %v2152, %v2156
        %v2161 = vstv %s1783
        %vm2162 = vcmp.ge.s32.totalorder %v2161, %v890
        %vm2163 = vcmp.ge.s32.totalorder %v2161, %v891
        %vm2164 = vcmp.ge.s32.totalorder %v2161, %v892
        %vm2165 = vcmp.ge.s32.totalorder %v2161, %v893
        %vm2166 = vcmp.lt.s32.totalorder %v2161, %v900
        %vm2167 = vcmp.lt.s32.totalorder %v2161, %v901
        %vm2168 = vcmp.lt.s32.totalorder %v2161, %v902
        %vm2169 = vcmp.lt.s32.totalorder %v2161, %v903
        %vm2170 = vmand %vm2162, %vm2166
        %vm2171 = vmand %vm2163, %vm2167
        %vm2172 = vmand %vm2164, %vm2168
        %vm2173 = vmand %vm2165, %vm2169
        %v2174 = vsel %vm2170, %v2157, %v1779
        %v2175 = vsel %vm2171, %v2158, %v1780
        %v2176 = vsel %vm2172, %v2159, %v1781
        %v2177 = vsel %vm2173, %v2160, %v1782
        %s2178 = sadd.s32 %s904, 2
        %s2179 = smul.u32 4, 6
        %s2180 = smul.addr %s2179, 8
        %s2181 = scalar_lea.vmem [#allocation2], %s2180
        %v2182 = vld [vmem:[%s2181] sm:$0xff]
        %v2183 = vld [vmem:[%s2181 + $0x8] sm:$0xff]
        %v2184 = vld [vmem:[%s2181 + $0x10] sm:$0xff]
        %v2185 = vld [vmem:[%s2181 + $0x18] sm:$0xff]
        %v2186 = vld [vmem:[%s2181 + $0x20] sm:$0xff]
        %v2187 = vld [vmem:[%s2181 + $0x28] sm:$0xff]
        %v2188 = vld [vmem:[%s2181 + $0x30] sm:$0xff]
        %v2189 = vld [vmem:[%s2181 + $0x38] sm:$0xff]
        %v2190 = vld [vmem:[%s2181 + $0x40] sm:$0xff]
        %v2191 = vld [vmem:[%s2181 + $0x48] sm:$0xff]
        %v2192 = vld [vmem:[%s2181 + $0x50] sm:$0xff]
        %v2193 = vld [vmem:[%s2181 + $0x58] sm:$0xff]
        %v2194 = vpack.c.bf16 %v2176, %v2174
        %v2195 = vpack.c.bf16 %v2177, %v2175
        %2196 = vmatpush.bf16.msra.mxu0 %v1256
        %2197 = vmatpush.bf16.msra.mxu0 %v1250
        %2198 = vmatpush.bf16.msra.mxu0 %v1244
        %2199 = vmatpush.bf16.msra.mxu0 %v1238
        %2200 = vmatpush.bf16.msra.mxu0 %v1232
        %2201 = vmatpush.bf16.msra.mxu0 %v1226
        %2202 = vmatpush.bf16.msra.mxu0 %v1220
        %2203 = vmatpush.bf16.msra.mxu0 %v1214
        %2204 = vmatmul.bf16.gmra.mxu0 %v2194
        %v2205 = vpop.f32.mrf.mxu0
        %v2206 = vadd.f32 0.0, %v2205
        %v2207 = vpop.f32.mrf.mxu0
        %v2208 = vadd.f32 0.0, %v2207
        %2209 = vdwg.mxu0
        %2210 = vmatpush.bf16.msra.mxu0 %v1304
        %2211 = vmatpush.bf16.msra.mxu0 %v1298
        %2212 = vmatpush.bf16.msra.mxu0 %v1292
        %2213 = vmatpush.bf16.msra.mxu0 %v1286
        %2214 = vmatpush.bf16.msra.mxu0 %v1280
        %2215 = vmatpush.bf16.msra.mxu0 %v1274
        %2216 = vmatpush.bf16.msra.mxu0 %v1268
        %2217 = vmatpush.bf16.msra.mxu0 %v1262
        %2218 = vmatmul.bf16.gmra.mxu0 %v2195
        %v2219 = vpop.f32.mrf.mxu0
        %v2220 = vadd.f32 %v2206, %v2219
        %v2221 = vpop.f32.mrf.mxu0
        %v2222 = vadd.f32 %v2208, %v2221
        %2223 = vdwg.mxu0
        %2224 = vmatpush.bf16.msra.mxu0 %v1257
        %2225 = vmatpush.bf16.msra.mxu0 %v1251
        %2226 = vmatpush.bf16.msra.mxu0 %v1245
        %2227 = vmatpush.bf16.msra.mxu0 %v1239
        %2228 = vmatpush.bf16.msra.mxu0 %v1233
        %2229 = vmatpush.bf16.msra.mxu0 %v1227
        %2230 = vmatpush.bf16.msra.mxu0 %v1221
        %2231 = vmatpush.bf16.msra.mxu0 %v1215
        %2232 = vmatmul.bf16.gmra.mxu0 %v2194
        %v2233 = vpop.f32.mrf.mxu0
        %v2234 = vadd.f32 0.0, %v2233
        %v2235 = vpop.f32.mrf.mxu0
        %v2236 = vadd.f32 0.0, %v2235
        %2237 = vdwg.mxu0
        %2238 = vmatpush.bf16.msra.mxu0 %v1305
        %2239 = vmatpush.bf16.msra.mxu0 %v1299
        %2240 = vmatpush.bf16.msra.mxu0 %v1293
        %2241 = vmatpush.bf16.msra.mxu0 %v1287
        %2242 = vmatpush.bf16.msra.mxu0 %v1281
        %2243 = vmatpush.bf16.msra.mxu0 %v1275
        %2244 = vmatpush.bf16.msra.mxu0 %v1269
        %2245 = vmatpush.bf16.msra.mxu0 %v1263
        %2246 = vmatmul.bf16.gmra.mxu0 %v2195
        %v2247 = vpop.f32.mrf.mxu0
        %v2248 = vadd.f32 %v2234, %v2247
        %v2249 = vpop.f32.mrf.mxu0
        %v2250 = vadd.f32 %v2236, %v2249
        %2251 = vdwg.mxu0
        %2252 = vmatpush.bf16.msra.mxu0 %v1258
        %2253 = vmatpush.bf16.msra.mxu0 %v1252
        %2254 = vmatpush.bf16.msra.mxu0 %v1246
        %2255 = vmatpush.bf16.msra.mxu0 %v1240
        %2256 = vmatpush.bf16.msra.mxu0 %v1234
        %2257 = vmatpush.bf16.msra.mxu0 %v1228
        %2258 = vmatpush.bf16.msra.mxu0 %v1222
        %2259 = vmatpush.bf16.msra.mxu0 %v1216
        %2260 = vmatmul.bf16.gmra.mxu0 %v2194
        %v2261 = vpop.f32.mrf.mxu0
        %v2262 = vadd.f32 0.0, %v2261
        %v2263 = vpop.f32.mrf.mxu0
        %v2264 = vadd.f32 0.0, %v2263
        %2265 = vdwg.mxu0
        %2266 = vmatpush.bf16.msra.mxu0 %v1306
        %2267 = vmatpush.bf16.msra.mxu0 %v1300
        %2268 = vmatpush.bf16.msra.mxu0 %v1294
        %2269 = vmatpush.bf16.msra.mxu0 %v1288
        %2270 = vmatpush.bf16.msra.mxu0 %v1282
        %2271 = vmatpush.bf16.msra.mxu0 %v1276
        %2272 = vmatpush.bf16.msra.mxu0 %v1270
        %2273 = vmatpush.bf16.msra.mxu0 %v1264
        %2274 = vmatmul.bf16.gmra.mxu0 %v2195
        %v2275 = vpop.f32.mrf.mxu0
        %v2276 = vadd.f32 %v2262, %v2275
        %v2277 = vpop.f32.mrf.mxu0
        %v2278 = vadd.f32 %v2264, %v2277
        %2279 = vdwg.mxu0
        %2280 = vmatpush.bf16.msra.mxu0 %v1259
        %2281 = vmatpush.bf16.msra.mxu0 %v1253
        %2282 = vmatpush.bf16.msra.mxu0 %v1247
        %2283 = vmatpush.bf16.msra.mxu0 %v1241
        %2284 = vmatpush.bf16.msra.mxu0 %v1235
        %2285 = vmatpush.bf16.msra.mxu0 %v1229
        %2286 = vmatpush.bf16.msra.mxu0 %v1223
        %2287 = vmatpush.bf16.msra.mxu0 %v1217
        %2288 = vmatmul.bf16.gmra.mxu0 %v2194
        %v2289 = vpop.f32.mrf.mxu0
        %v2290 = vadd.f32 0.0, %v2289
        %v2291 = vpop.f32.mrf.mxu0
        %v2292 = vadd.f32 0.0, %v2291
        %2293 = vdwg.mxu0
        %2294 = vmatpush.bf16.msra.mxu0 %v1307
        %2295 = vmatpush.bf16.msra.mxu0 %v1301
        %2296 = vmatpush.bf16.msra.mxu0 %v1295
        %2297 = vmatpush.bf16.msra.mxu0 %v1289
        %2298 = vmatpush.bf16.msra.mxu0 %v1283
        %2299 = vmatpush.bf16.msra.mxu0 %v1277
        %2300 = vmatpush.bf16.msra.mxu0 %v1271
        %2301 = vmatpush.bf16.msra.mxu0 %v1265
        %2302 = vmatmul.bf16.gmra.mxu0 %v2195
        %v2303 = vpop.f32.mrf.mxu0
        %v2304 = vadd.f32 %v2290, %v2303
        %v2305 = vpop.f32.mrf.mxu0
        %v2306 = vadd.f32 %v2292, %v2305
        %2307 = vdwg.mxu0
        %2308 = vmatpush.bf16.msra.mxu0 %v1260
        %2309 = vmatpush.bf16.msra.mxu0 %v1254
        %2310 = vmatpush.bf16.msra.mxu0 %v1248
        %2311 = vmatpush.bf16.msra.mxu0 %v1242
        %2312 = vmatpush.bf16.msra.mxu0 %v1236
        %2313 = vmatpush.bf16.msra.mxu0 %v1230
        %2314 = vmatpush.bf16.msra.mxu0 %v1224
        %2315 = vmatpush.bf16.msra.mxu0 %v1218
        %2316 = vmatmul.bf16.gmra.mxu0 %v2194
        %v2317 = vpop.f32.mrf.mxu0
        %v2318 = vadd.f32 0.0, %v2317
        %v2319 = vpop.f32.mrf.mxu0
        %v2320 = vadd.f32 0.0, %v2319
        %2321 = vdwg.mxu0
        %2322 = vmatpush.bf16.msra.mxu0 %v1308
        %2323 = vmatpush.bf16.msra.mxu0 %v1302
        %2324 = vmatpush.bf16.msra.mxu0 %v1296
        %2325 = vmatpush.bf16.msra.mxu0 %v1290
        %2326 = vmatpush.bf16.msra.mxu0 %v1284
        %2327 = vmatpush.bf16.msra.mxu0 %v1278
        %2328 = vmatpush.bf16.msra.mxu0 %v1272
        %2329 = vmatpush.bf16.msra.mxu0 %v1266
        %2330 = vmatmul.bf16.gmra.mxu0 %v2195
        %v2331 = vpop.f32.mrf.mxu0
        %v2332 = vadd.f32 %v2318, %v2331
        %v2333 = vpop.f32.mrf.mxu0
        %v2334 = vadd.f32 %v2320, %v2333
        %2335 = vdwg.mxu0
        %2336 = vmatpush.bf16.msra.mxu0 %v1261
        %2337 = vmatpush.bf16.msra.mxu0 %v1255
        %2338 = vmatpush.bf16.msra.mxu0 %v1249
        %2339 = vmatpush.bf16.msra.mxu0 %v1243
        %2340 = vmatpush.bf16.msra.mxu0 %v1237
        %2341 = vmatpush.bf16.msra.mxu0 %v1231
        %2342 = vmatpush.bf16.msra.mxu0 %v1225
        %2343 = vmatpush.bf16.msra.mxu0 %v1219
        %2344 = vmatmul.bf16.gmra.mxu0 %v2194
        %v2345 = vpop.f32.mrf.mxu0
        %v2346 = vadd.f32 0.0, %v2345
        %v2347 = vpop.f32.mrf.mxu0
        %v2348 = vadd.f32 0.0, %v2347
        %2349 = vdwg.mxu0
        %2350 = vmatpush.bf16.msra.mxu0 %v1309
        %2351 = vmatpush.bf16.msra.mxu0 %v1303
        %2352 = vmatpush.bf16.msra.mxu0 %v1297
        %2353 = vmatpush.bf16.msra.mxu0 %v1291
        %2354 = vmatpush.bf16.msra.mxu0 %v1285
        %2355 = vmatpush.bf16.msra.mxu0 %v1279
        %2356 = vmatpush.bf16.msra.mxu0 %v1273
        %2357 = vmatpush.bf16.msra.mxu0 %v1267
        %2358 = vmatmul.bf16.gmra.mxu0 %v2195
        %v2359 = vpop.f32.mrf.mxu0
        %v2360 = vadd.f32 %v2346, %v2359
        %v2361 = vpop.f32.mrf.mxu0
        %v2362 = vadd.f32 %v2348, %v2361
        %2363 = vdwg.mxu0
        %v2364 = vadd.f32 %v2182, %v2220
        %v2365 = vadd.f32 %v2183, %v2248
        %v2366 = vadd.f32 %v2184, %v2276
        %v2367 = vadd.f32 %v2185, %v2304
        %v2368 = vadd.f32 %v2188, %v2222
        %v2369 = vadd.f32 %v2189, %v2250
        %v2370 = vadd.f32 %v2190, %v2278
        %v2371 = vadd.f32 %v2191, %v2306
        %v2372 = vxor.u32 %v2364, 2147483648
        %v2373 = vxor.u32 %v2365, 2147483648
        %v2374 = vxor.u32 %v2366, 2147483648
        %v2375 = vxor.u32 %v2367, 2147483648
        %v2376 = vxor.u32 %v2368, 2147483648
        %v2377 = vxor.u32 %v2369, 2147483648
        %v2378 = vxor.u32 %v2370, 2147483648
        %v2379 = vxor.u32 %v2371, 2147483648
        %v2380 = vmul.f32 %v2372, 1.442695
        %v2381 = vpow.pop %v2380
        %v2382 = vmul.f32 %v2373, 1.442695
        %v2383 = vpow.pop %v2382
        %v2384 = vmul.f32 %v2374, 1.442695
        %v2385 = vpow.pop %v2384
        %v2386 = vmul.f32 %v2375, 1.442695
        %v2387 = vpow.pop %v2386
        %v2388 = vmul.f32 %v2376, 1.442695
        %v2389 = vpow.pop %v2388
        %v2390 = vmul.f32 %v2377, 1.442695
        %v2391 = vpow.pop %v2390
        %v2392 = vmul.f32 %v2378, 1.442695
        %v2393 = vpow.pop %v2392
        %v2394 = vmul.f32 %v2379, 1.442695
        %v2395 = vpow.pop %v2394
        %v2396 = vadd.f32 %v2381, 1.0
        %v2397 = vadd.f32 %v2383, 1.0
        %v2398 = vadd.f32 %v2385, 1.0
        %v2399 = vadd.f32 %v2387, 1.0
        %v2400 = vadd.f32 %v2389, 1.0
        %v2401 = vadd.f32 %v2391, 1.0
        %v2402 = vadd.f32 %v2393, 1.0
        %v2403 = vadd.f32 %v2395, 1.0
        %v2404 = vrcp.pop %v2396
        %v2405 = vmul.f32 %v2396, %v2404
        %v2406 = vsub.f32 1.0, %v2405
        %v2407 = vmul.f32 %v2404, %v2406
        %v2408 = vadd.f32 %v2404, %v2407
        %vm2409 = vweird.f32 %v2396
        %vm2410 = vweird.f32 %v2404
        %vm2411 = vmor %vm2409, %vm2410
        %v2412 = vsel %vm2411, %v2404, %v2408
        %v2413 = vand.u32 2147483647, %v2396
        %vm2414 = vcmp.eq.f32.partialorder %v2413, 8.507059e+37
        %v2415 = vand.u32 %v2396, 2147483648
        %v2416 = vor.u32 1.1754944e-38, %v2415
        %v2417 = vsel %vm2414, %v2416, %v2412
        %v2418 = vmul.f32 1.0, %v2417
        %v2419 = vrcp.pop %v2397
        %v2420 = vmul.f32 %v2397, %v2419
        %v2421 = vsub.f32 1.0, %v2420
        %v2422 = vmul.f32 %v2419, %v2421
        %v2423 = vadd.f32 %v2419, %v2422
        %vm2424 = vweird.f32 %v2397
        %vm2425 = vweird.f32 %v2419
        %vm2426 = vmor %vm2424, %vm2425
        %v2427 = vsel %vm2426, %v2419, %v2423
        %v2428 = vand.u32 2147483647, %v2397
        %vm2429 = vcmp.eq.f32.partialorder %v2428, 8.507059e+37
        %v2430 = vand.u32 %v2397, 2147483648
        %v2431 = vor.u32 1.1754944e-38, %v2430
        %v2432 = vsel %vm2429, %v2431, %v2427
        %v2433 = vmul.f32 1.0, %v2432
        %v2434 = vrcp.pop %v2398
        %v2435 = vmul.f32 %v2398, %v2434
        %v2436 = vsub.f32 1.0, %v2435
        %v2437 = vmul.f32 %v2434, %v2436
        %v2438 = vadd.f32 %v2434, %v2437
        %vm2439 = vweird.f32 %v2398
        %vm2440 = vweird.f32 %v2434
        %vm2441 = vmor %vm2439, %vm2440
        %v2442 = vsel %vm2441, %v2434, %v2438
        %v2443 = vand.u32 2147483647, %v2398
        %vm2444 = vcmp.eq.f32.partialorder %v2443, 8.507059e+37
        %v2445 = vand.u32 %v2398, 2147483648
        %v2446 = vor.u32 1.1754944e-38, %v2445
        %v2447 = vsel %vm2444, %v2446, %v2442
        %v2448 = vmul.f32 1.0, %v2447
        %v2449 = vrcp.pop %v2399
        %v2450 = vmul.f32 %v2399, %v2449
        %v2451 = vsub.f32 1.0, %v2450
        %v2452 = vmul.f32 %v2449, %v2451
        %v2453 = vadd.f32 %v2449, %v2452
        %vm2454 = vweird.f32 %v2399
        %vm2455 = vweird.f32 %v2449
        %vm2456 = vmor %vm2454, %vm2455
        %v2457 = vsel %vm2456, %v2449, %v2453
        %v2458 = vand.u32 2147483647, %v2399
        %vm2459 = vcmp.eq.f32.partialorder %v2458, 8.507059e+37
        %v2460 = vand.u32 %v2399, 2147483648
        %v2461 = vor.u32 1.1754944e-38, %v2460
        %v2462 = vsel %vm2459, %v2461, %v2457
        %v2463 = vmul.f32 1.0, %v2462
        %v2464 = vrcp.pop %v2400
        %v2465 = vmul.f32 %v2400, %v2464
        %v2466 = vsub.f32 1.0, %v2465
        %v2467 = vmul.f32 %v2464, %v2466
        %v2468 = vadd.f32 %v2464, %v2467
        %vm2469 = vweird.f32 %v2400
        %vm2470 = vweird.f32 %v2464
        %vm2471 = vmor %vm2469, %vm2470
        %v2472 = vsel %vm2471, %v2464, %v2468
        %v2473 = vand.u32 2147483647, %v2400
        %vm2474 = vcmp.eq.f32.partialorder %v2473, 8.507059e+37
        %v2475 = vand.u32 %v2400, 2147483648
        %v2476 = vor.u32 1.1754944e-38, %v2475
        %v2477 = vsel %vm2474, %v2476, %v2472
        %v2478 = vmul.f32 1.0, %v2477
        %v2479 = vrcp.pop %v2401
        %v2480 = vmul.f32 %v2401, %v2479
        %v2481 = vsub.f32 1.0, %v2480
        %v2482 = vmul.f32 %v2479, %v2481
        %v2483 = vadd.f32 %v2479, %v2482
        %vm2484 = vweird.f32 %v2401
        %vm2485 = vweird.f32 %v2479
        %vm2486 = vmor %vm2484, %vm2485
        %v2487 = vsel %vm2486, %v2479, %v2483
        %v2488 = vand.u32 2147483647, %v2401
        %vm2489 = vcmp.eq.f32.partialorder %v2488, 8.507059e+37
        %v2490 = vand.u32 %v2401, 2147483648
        %v2491 = vor.u32 1.1754944e-38, %v2490
        %v2492 = vsel %vm2489, %v2491, %v2487
        %v2493 = vmul.f32 1.0, %v2492
        %v2494 = vrcp.pop %v2402
        %v2495 = vmul.f32 %v2402, %v2494
        %v2496 = vsub.f32 1.0, %v2495
        %v2497 = vmul.f32 %v2494, %v2496
        %v2498 = vadd.f32 %v2494, %v2497
        %vm2499 = vweird.f32 %v2402
        %vm2500 = vweird.f32 %v2494
        %vm2501 = vmor %vm2499, %vm2500
        %v2502 = vsel %vm2501, %v2494, %v2498
        %v2503 = vand.u32 2147483647, %v2402
        %vm2504 = vcmp.eq.f32.partialorder %v2503, 8.507059e+37
        %v2505 = vand.u32 %v2402, 2147483648
        %v2506 = vor.u32 1.1754944e-38, %v2505
        %v2507 = vsel %vm2504, %v2506, %v2502
        %v2508 = vmul.f32 1.0, %v2507
        %v2509 = vrcp.pop %v2403
        %v2510 = vmul.f32 %v2403, %v2509
        %v2511 = vsub.f32 1.0, %v2510
        %v2512 = vmul.f32 %v2509, %v2511
        %v2513 = vadd.f32 %v2509, %v2512
        %vm2514 = vweird.f32 %v2403
        %vm2515 = vweird.f32 %v2509
        %vm2516 = vmor %vm2514, %vm2515
        %v2517 = vsel %vm2516, %v2509, %v2513
        %v2518 = vand.u32 2147483647, %v2403
        %vm2519 = vcmp.eq.f32.partialorder %v2518, 8.507059e+37
        %v2520 = vand.u32 %v2403, 2147483648
        %v2521 = vor.u32 1.1754944e-38, %v2520
        %v2522 = vsel %vm2519, %v2521, %v2517
        %v2523 = vmul.f32 1.0, %v2522
        %v2524 = vadd.f32 %v2332, %v871
        %v2525 = vadd.f32 %v2360, %v872
        %v2526 = vadd.f32 %v2334, %v871
        %v2527 = vadd.f32 %v2362, %v872
        %v2528 = vmul.f32 %v2418, %v2524
        %v2529 = vmul.f32 %v2433, %v2525
        %v2530 = vmul.f32 %v2478, %v2526
        %v2531 = vmul.f32 %v2493, %v2527
        %v2532 = vadd.f32 %v2186, %v2528
        %v2533 = vadd.f32 %v2187, %v2529
        %v2534 = vadd.f32 %v2192, %v2530
        %v2535 = vadd.f32 %v2193, %v2531
        %v2536 = vtanh.pop %v2532
        %v2537 = vtanh.pop %v2533
        %v2538 = vtanh.pop %v2534
        %v2539 = vtanh.pop %v2535
        %v2540 = vsub.f32 1.0, %v2448
        %v2541 = vsub.f32 1.0, %v2463
        %v2542 = vsub.f32 1.0, %v2508
        %v2543 = vsub.f32 1.0, %v2523
        %v2544 = vmul.f32 %v2540, %v2536
        %v2545 = vmul.f32 %v2541, %v2537
        %v2546 = vmul.f32 %v2542, %v2538
        %v2547 = vmul.f32 %v2543, %v2539
        %v2548 = vmul.f32 %v2448, %v2174
        %v2549 = vmul.f32 %v2463, %v2175
        %v2550 = vmul.f32 %v2508, %v2176
        %v2551 = vmul.f32 %v2523, %v2177
        %v2552 = vadd.f32 %v2544, %v2548
        %v2553 = vadd.f32 %v2545, %v2549
        %v2554 = vadd.f32 %v2546, %v2550
        %v2555 = vadd.f32 %v2547, %v2551
        %v2556 = vstv %s2178
        %vm2557 = vcmp.ge.s32.totalorder %v2556, %v890
        %vm2558 = vcmp.ge.s32.totalorder %v2556, %v891
        %vm2559 = vcmp.ge.s32.totalorder %v2556, %v892
        %vm2560 = vcmp.ge.s32.totalorder %v2556, %v893
        %vm2561 = vcmp.lt.s32.totalorder %v2556, %v900
        %vm2562 = vcmp.lt.s32.totalorder %v2556, %v901
        %vm2563 = vcmp.lt.s32.totalorder %v2556, %v902
        %vm2564 = vcmp.lt.s32.totalorder %v2556, %v903
        %vm2565 = vmand %vm2557, %vm2561
        %vm2566 = vmand %vm2558, %vm2562
        %vm2567 = vmand %vm2559, %vm2563
        %vm2568 = vmand %vm2560, %vm2564
        %v2569 = vsel %vm2565, %v2552, %v2174
        %v2570 = vsel %vm2566, %v2553, %v2175
        %v2571 = vsel %vm2567, %v2554, %v2176
        %v2572 = vsel %vm2568, %v2555, %v2177
        %s2573 = sadd.s32 %s904, 3
        %s2574 = smul.u32 6, 6
        %s2575 = smul.addr %s2574, 8
        %s2576 = scalar_lea.vmem [#allocation2], %s2575
        %v2577 = vld [vmem:[%s2576] sm:$0xff]
        %v2578 = vld [vmem:[%s2576 + $0x8] sm:$0xff]
        %v2579 = vld [vmem:[%s2576 + $0x10] sm:$0xff]
        %v2580 = vld [vmem:[%s2576 + $0x18] sm:$0xff]
        %v2581 = vld [vmem:[%s2576 + $0x20] sm:$0xff]
        %v2582 = vld [vmem:[%s2576 + $0x28] sm:$0xff]
        %v2583 = vld [vmem:[%s2576 + $0x30] sm:$0xff]
        %v2584 = vld [vmem:[%s2576 + $0x38] sm:$0xff]
        %v2585 = vld [vmem:[%s2576 + $0x40] sm:$0xff]
        %v2586 = vld [vmem:[%s2576 + $0x48] sm:$0xff]
        %v2587 = vld [vmem:[%s2576 + $0x50] sm:$0xff]
        %v2588 = vld [vmem:[%s2576 + $0x58] sm:$0xff]
        %v2589 = vpack.c.bf16 %v2571, %v2569
        %v2590 = vpack.c.bf16 %v2572, %v2570
        %2591 = vmatpush.bf16.msra.mxu0 %v1256
        %2592 = vmatpush.bf16.msra.mxu0 %v1250
        %2593 = vmatpush.bf16.msra.mxu0 %v1244
        %2594 = vmatpush.bf16.msra.mxu0 %v1238
        %2595 = vmatpush.bf16.msra.mxu0 %v1232
        %2596 = vmatpush.bf16.msra.mxu0 %v1226
        %2597 = vmatpush.bf16.msra.mxu0 %v1220
        %2598 = vmatpush.bf16.msra.mxu0 %v1214
        %2599 = vmatmul.bf16.gmra.mxu0 %v2589
        %v2600 = vpop.f32.mrf.mxu0
        %v2601 = vadd.f32 0.0, %v2600
        %v2602 = vpop.f32.mrf.mxu0
        %v2603 = vadd.f32 0.0, %v2602
        %2604 = vdwg.mxu0
        %2605 = vmatpush.bf16.msra.mxu0 %v1304
        %2606 = vmatpush.bf16.msra.mxu0 %v1298
        %2607 = vmatpush.bf16.msra.mxu0 %v1292
        %2608 = vmatpush.bf16.msra.mxu0 %v1286
        %2609 = vmatpush.bf16.msra.mxu0 %v1280
        %2610 = vmatpush.bf16.msra.mxu0 %v1274
        %2611 = vmatpush.bf16.msra.mxu0 %v1268
        %2612 = vmatpush.bf16.msra.mxu0 %v1262
        %2613 = vmatmul.bf16.gmra.mxu0 %v2590
        %v2614 = vpop.f32.mrf.mxu0
        %v2615 = vadd.f32 %v2601, %v2614
        %v2616 = vpop.f32.mrf.mxu0
        %v2617 = vadd.f32 %v2603, %v2616
        %2618 = vdwg.mxu0
        %2619 = vmatpush.bf16.msra.mxu0 %v1257
        %2620 = vmatpush.bf16.msra.mxu0 %v1251
        %2621 = vmatpush.bf16.msra.mxu0 %v1245
        %2622 = vmatpush.bf16.msra.mxu0 %v1239
        %2623 = vmatpush.bf16.msra.mxu0 %v1233
        %2624 = vmatpush.bf16.msra.mxu0 %v1227
        %2625 = vmatpush.bf16.msra.mxu0 %v1221
        %2626 = vmatpush.bf16.msra.mxu0 %v1215
        %2627 = vmatmul.bf16.gmra.mxu0 %v2589
        %v2628 = vpop.f32.mrf.mxu0
        %v2629 = vadd.f32 0.0, %v2628
        %v2630 = vpop.f32.mrf.mxu0
        %v2631 = vadd.f32 0.0, %v2630
        %2632 = vdwg.mxu0
        %2633 = vmatpush.bf16.msra.mxu0 %v1305
        %2634 = vmatpush.bf16.msra.mxu0 %v1299
        %2635 = vmatpush.bf16.msra.mxu0 %v1293
        %2636 = vmatpush.bf16.msra.mxu0 %v1287
        %2637 = vmatpush.bf16.msra.mxu0 %v1281
        %2638 = vmatpush.bf16.msra.mxu0 %v1275
        %2639 = vmatpush.bf16.msra.mxu0 %v1269
        %2640 = vmatpush.bf16.msra.mxu0 %v1263
        %2641 = vmatmul.bf16.gmra.mxu0 %v2590
        %v2642 = vpop.f32.mrf.mxu0
        %v2643 = vadd.f32 %v2629, %v2642
        %v2644 = vpop.f32.mrf.mxu0
        %v2645 = vadd.f32 %v2631, %v2644
        %2646 = vdwg.mxu0
        %2647 = vmatpush.bf16.msra.mxu0 %v1258
        %2648 = vmatpush.bf16.msra.mxu0 %v1252
        %2649 = vmatpush.bf16.msra.mxu0 %v1246
        %2650 = vmatpush.bf16.msra.mxu0 %v1240
        %2651 = vmatpush.bf16.msra.mxu0 %v1234
        %2652 = vmatpush.bf16.msra.mxu0 %v1228
        %2653 = vmatpush.bf16.msra.mxu0 %v1222
        %2654 = vmatpush.bf16.msra.mxu0 %v1216
        %2655 = vmatmul.bf16.gmra.mxu0 %v2589
        %v2656 = vpop.f32.mrf.mxu0
        %v2657 = vadd.f32 0.0, %v2656
        %v2658 = vpop.f32.mrf.mxu0
        %v2659 = vadd.f32 0.0, %v2658
        %2660 = vdwg.mxu0
        %2661 = vmatpush.bf16.msra.mxu0 %v1306
        %2662 = vmatpush.bf16.msra.mxu0 %v1300
        %2663 = vmatpush.bf16.msra.mxu0 %v1294
        %2664 = vmatpush.bf16.msra.mxu0 %v1288
        %2665 = vmatpush.bf16.msra.mxu0 %v1282
        %2666 = vmatpush.bf16.msra.mxu0 %v1276
        %2667 = vmatpush.bf16.msra.mxu0 %v1270
        %2668 = vmatpush.bf16.msra.mxu0 %v1264
        %2669 = vmatmul.bf16.gmra.mxu0 %v2590
        %v2670 = vpop.f32.mrf.mxu0
        %v2671 = vadd.f32 %v2657, %v2670
        %v2672 = vpop.f32.mrf.mxu0
        %v2673 = vadd.f32 %v2659, %v2672
        %2674 = vdwg.mxu0
        %2675 = vmatpush.bf16.msra.mxu0 %v1259
        %2676 = vmatpush.bf16.msra.mxu0 %v1253
        %2677 = vmatpush.bf16.msra.mxu0 %v1247
        %2678 = vmatpush.bf16.msra.mxu0 %v1241
        %2679 = vmatpush.bf16.msra.mxu0 %v1235
        %2680 = vmatpush.bf16.msra.mxu0 %v1229
        %2681 = vmatpush.bf16.msra.mxu0 %v1223
        %2682 = vmatpush.bf16.msra.mxu0 %v1217
        %2683 = vmatmul.bf16.gmra.mxu0 %v2589
        %v2684 = vpop.f32.mrf.mxu0
        %v2685 = vadd.f32 0.0, %v2684
        %v2686 = vpop.f32.mrf.mxu0
        %v2687 = vadd.f32 0.0, %v2686
        %2688 = vdwg.mxu0
        %2689 = vmatpush.bf16.msra.mxu0 %v1307
        %2690 = vmatpush.bf16.msra.mxu0 %v1301
        %2691 = vmatpush.bf16.msra.mxu0 %v1295
        %2692 = vmatpush.bf16.msra.mxu0 %v1289
        %2693 = vmatpush.bf16.msra.mxu0 %v1283
        %2694 = vmatpush.bf16.msra.mxu0 %v1277
        %2695 = vmatpush.bf16.msra.mxu0 %v1271
        %2696 = vmatpush.bf16.msra.mxu0 %v1265
        %2697 = vmatmul.bf16.gmra.mxu0 %v2590
        %v2698 = vpop.f32.mrf.mxu0
        %v2699 = vadd.f32 %v2685, %v2698
        %v2700 = vpop.f32.mrf.mxu0
        %v2701 = vadd.f32 %v2687, %v2700
        %2702 = vdwg.mxu0
        %2703 = vmatpush.bf16.msra.mxu0 %v1260
        %2704 = vmatpush.bf16.msra.mxu0 %v1254
        %2705 = vmatpush.bf16.msra.mxu0 %v1248
        %2706 = vmatpush.bf16.msra.mxu0 %v1242
        %2707 = vmatpush.bf16.msra.mxu0 %v1236
        %2708 = vmatpush.bf16.msra.mxu0 %v1230
        %2709 = vmatpush.bf16.msra.mxu0 %v1224
        %2710 = vmatpush.bf16.msra.mxu0 %v1218
        %2711 = vmatmul.bf16.gmra.mxu0 %v2589
        %v2712 = vpop.f32.mrf.mxu0
        %v2713 = vadd.f32 0.0, %v2712
        %v2714 = vpop.f32.mrf.mxu0
        %v2715 = vadd.f32 0.0, %v2714
        %2716 = vdwg.mxu0
        %2717 = vmatpush.bf16.msra.mxu0 %v1308
        %2718 = vmatpush.bf16.msra.mxu0 %v1302
        %2719 = vmatpush.bf16.msra.mxu0 %v1296
        %2720 = vmatpush.bf16.msra.mxu0 %v1290
        %2721 = vmatpush.bf16.msra.mxu0 %v1284
        %2722 = vmatpush.bf16.msra.mxu0 %v1278
        %2723 = vmatpush.bf16.msra.mxu0 %v1272
        %2724 = vmatpush.bf16.msra.mxu0 %v1266
        %2725 = vmatmul.bf16.gmra.mxu0 %v2590
        %v2726 = vpop.f32.mrf.mxu0
        %v2727 = vadd.f32 %v2713, %v2726
        %v2728 = vpop.f32.mrf.mxu0
        %v2729 = vadd.f32 %v2715, %v2728
        %2730 = vdwg.mxu0
        %2731 = vmatpush.bf16.msra.mxu0 %v1261
        %2732 = vmatpush.bf16.msra.mxu0 %v1255
        %2733 = vmatpush.bf16.msra.mxu0 %v1249
        %2734 = vmatpush.bf16.msra.mxu0 %v1243
        %2735 = vmatpush.bf16.msra.mxu0 %v1237
        %2736 = vmatpush.bf16.msra.mxu0 %v1231
        %2737 = vmatpush.bf16.msra.mxu0 %v1225
        %2738 = vmatpush.bf16.msra.mxu0 %v1219
        %2739 = vmatmul.bf16.gmra.mxu0 %v2589
        %v2740 = vpop.f32.mrf.mxu0
        %v2741 = vadd.f32 0.0, %v2740
        %v2742 = vpop.f32.mrf.mxu0
        %v2743 = vadd.f32 0.0, %v2742
        %2744 = vdwg.mxu0
        %2745 = vmatpush.bf16.msra.mxu0 %v1309
        %2746 = vmatpush.bf16.msra.mxu0 %v1303
        %2747 = vmatpush.bf16.msra.mxu0 %v1297
        %2748 = vmatpush.bf16.msra.mxu0 %v1291
        %2749 = vmatpush.bf16.msra.mxu0 %v1285
        %2750 = vmatpush.bf16.msra.mxu0 %v1279
        %2751 = vmatpush.bf16.msra.mxu0 %v1273
        %2752 = vmatpush.bf16.msra.mxu0 %v1267
        %2753 = vmatmul.bf16.gmra.mxu0 %v2590
        %v2754 = vpop.f32.mrf.mxu0
        %v2755 = vadd.f32 %v2741, %v2754
        %v2756 = vpop.f32.mrf.mxu0
        %v2757 = vadd.f32 %v2743, %v2756
        %2758 = vdwg.mxu0
        %v2759 = vadd.f32 %v2577, %v2615
        %v2760 = vadd.f32 %v2578, %v2643
        %v2761 = vadd.f32 %v2579, %v2671
        %v2762 = vadd.f32 %v2580, %v2699
        %v2763 = vadd.f32 %v2583, %v2617
        %v2764 = vadd.f32 %v2584, %v2645
        %v2765 = vadd.f32 %v2585, %v2673
        %v2766 = vadd.f32 %v2586, %v2701
        %v2767 = vxor.u32 %v2759, 2147483648
        %v2768 = vxor.u32 %v2760, 2147483648
        %v2769 = vxor.u32 %v2761, 2147483648
        %v2770 = vxor.u32 %v2762, 2147483648
        %v2771 = vxor.u32 %v2763, 2147483648
        %v2772 = vxor.u32 %v2764, 2147483648
        %v2773 = vxor.u32 %v2765, 2147483648
        %v2774 = vxor.u32 %v2766, 2147483648
        %v2775 = vmul.f32 %v2767, 1.442695
        %v2776 = vpow.pop %v2775
        %v2777 = vmul.f32 %v2768, 1.442695
        %v2778 = vpow.pop %v2777
        %v2779 = vmul.f32 %v2769, 1.442695
        %v2780 = vpow.pop %v2779
        %v2781 = vmul.f32 %v2770, 1.442695
        %v2782 = vpow.pop %v2781
        %v2783 = vmul.f32 %v2771, 1.442695
        %v2784 = vpow.pop %v2783
        %v2785 = vmul.f32 %v2772, 1.442695
        %v2786 = vpow.pop %v2785
        %v2787 = vmul.f32 %v2773, 1.442695
        %v2788 = vpow.pop %v2787
        %v2789 = vmul.f32 %v2774, 1.442695
        %v2790 = vpow.pop %v2789
        %v2791 = vadd.f32 %v2776, 1.0
        %v2792 = vadd.f32 %v2778, 1.0
        %v2793 = vadd.f32 %v2780, 1.0
        %v2794 = vadd.f32 %v2782, 1.0
        %v2795 = vadd.f32 %v2784, 1.0
        %v2796 = vadd.f32 %v2786, 1.0
        %v2797 = vadd.f32 %v2788, 1.0
        %v2798 = vadd.f32 %v2790, 1.0
        %v2799 = vrcp.pop %v2791
        %v2800 = vmul.f32 %v2791, %v2799
        %v2801 = vsub.f32 1.0, %v2800
        %v2802 = vmul.f32 %v2799, %v2801
        %v2803 = vadd.f32 %v2799, %v2802
        %vm2804 = vweird.f32 %v2791
        %vm2805 = vweird.f32 %v2799
        %vm2806 = vmor %vm2804, %vm2805
        %v2807 = vsel %vm2806, %v2799, %v2803
        %v2808 = vand.u32 2147483647, %v2791
        %vm2809 = vcmp.eq.f32.partialorder %v2808, 8.507059e+37
        %v2810 = vand.u32 %v2791, 2147483648
        %v2811 = vor.u32 1.1754944e-38, %v2810
        %v2812 = vsel %vm2809, %v2811, %v2807
        %v2813 = vmul.f32 1.0, %v2812
        %v2814 = vrcp.pop %v2792
        %v2815 = vmul.f32 %v2792, %v2814
        %v2816 = vsub.f32 1.0, %v2815
        %v2817 = vmul.f32 %v2814, %v2816
        %v2818 = vadd.f32 %v2814, %v2817
        %vm2819 = vweird.f32 %v2792
        %vm2820 = vweird.f32 %v2814
        %vm2821 = vmor %vm2819, %vm2820
        %v2822 = vsel %vm2821, %v2814, %v2818
        %v2823 = vand.u32 2147483647, %v2792
        %vm2824 = vcmp.eq.f32.partialorder %v2823, 8.507059e+37
        %v2825 = vand.u32 %v2792, 2147483648
        %v2826 = vor.u32 1.1754944e-38, %v2825
        %v2827 = vsel %vm2824, %v2826, %v2822
        %v2828 = vmul.f32 1.0, %v2827
        %v2829 = vrcp.pop %v2793
        %v2830 = vmul.f32 %v2793, %v2829
        %v2831 = vsub.f32 1.0, %v2830
        %v2832 = vmul.f32 %v2829, %v2831
        %v2833 = vadd.f32 %v2829, %v2832
        %vm2834 = vweird.f32 %v2793
        %vm2835 = vweird.f32 %v2829
        %vm2836 = vmor %vm2834, %vm2835
        %v2837 = vsel %vm2836, %v2829, %v2833
        %v2838 = vand.u32 2147483647, %v2793
        %vm2839 = vcmp.eq.f32.partialorder %v2838, 8.507059e+37
        %v2840 = vand.u32 %v2793, 2147483648
        %v2841 = vor.u32 1.1754944e-38, %v2840
        %v2842 = vsel %vm2839, %v2841, %v2837
        %v2843 = vmul.f32 1.0, %v2842
        %v2844 = vrcp.pop %v2794
        %v2845 = vmul.f32 %v2794, %v2844
        %v2846 = vsub.f32 1.0, %v2845
        %v2847 = vmul.f32 %v2844, %v2846
        %v2848 = vadd.f32 %v2844, %v2847
        %vm2849 = vweird.f32 %v2794
        %vm2850 = vweird.f32 %v2844
        %vm2851 = vmor %vm2849, %vm2850
        %v2852 = vsel %vm2851, %v2844, %v2848
        %v2853 = vand.u32 2147483647, %v2794
        %vm2854 = vcmp.eq.f32.partialorder %v2853, 8.507059e+37
        %v2855 = vand.u32 %v2794, 2147483648
        %v2856 = vor.u32 1.1754944e-38, %v2855
        %v2857 = vsel %vm2854, %v2856, %v2852
        %v2858 = vmul.f32 1.0, %v2857
        %v2859 = vrcp.pop %v2795
        %v2860 = vmul.f32 %v2795, %v2859
        %v2861 = vsub.f32 1.0, %v2860
        %v2862 = vmul.f32 %v2859, %v2861
        %v2863 = vadd.f32 %v2859, %v2862
        %vm2864 = vweird.f32 %v2795
        %vm2865 = vweird.f32 %v2859
        %vm2866 = vmor %vm2864, %vm2865
        %v2867 = vsel %vm2866, %v2859, %v2863
        %v2868 = vand.u32 2147483647, %v2795
        %vm2869 = vcmp.eq.f32.partialorder %v2868, 8.507059e+37
        %v2870 = vand.u32 %v2795, 2147483648
        %v2871 = vor.u32 1.1754944e-38, %v2870
        %v2872 = vsel %vm2869, %v2871, %v2867
        %v2873 = vmul.f32 1.0, %v2872
        %v2874 = vrcp.pop %v2796
        %v2875 = vmul.f32 %v2796, %v2874
        %v2876 = vsub.f32 1.0, %v2875
        %v2877 = vmul.f32 %v2874, %v2876
        %v2878 = vadd.f32 %v2874, %v2877
        %vm2879 = vweird.f32 %v2796
        %vm2880 = vweird.f32 %v2874
        %vm2881 = vmor %vm2879, %vm2880
        %v2882 = vsel %vm2881, %v2874, %v2878
        %v2883 = vand.u32 2147483647, %v2796
        %vm2884 = vcmp.eq.f32.partialorder %v2883, 8.507059e+37
        %v2885 = vand.u32 %v2796, 2147483648
        %v2886 = vor.u32 1.1754944e-38, %v2885
        %v2887 = vsel %vm2884, %v2886, %v2882
        %v2888 = vmul.f32 1.0, %v2887
        %v2889 = vrcp.pop %v2797
        %v2890 = vmul.f32 %v2797, %v2889
        %v2891 = vsub.f32 1.0, %v2890
        %v2892 = vmul.f32 %v2889, %v2891
        %v2893 = vadd.f32 %v2889, %v2892
        %vm2894 = vweird.f32 %v2797
        %vm2895 = vweird.f32 %v2889
        %vm2896 = vmor %vm2894, %vm2895
        %v2897 = vsel %vm2896, %v2889, %v2893
        %v2898 = vand.u32 2147483647, %v2797
        %vm2899 = vcmp.eq.f32.partialorder %v2898, 8.507059e+37
        %v2900 = vand.u32 %v2797, 2147483648
        %v2901 = vor.u32 1.1754944e-38, %v2900
        %v2902 = vsel %vm2899, %v2901, %v2897
        %v2903 = vmul.f32 1.0, %v2902
        %v2904 = vrcp.pop %v2798
        %v2905 = vmul.f32 %v2798, %v2904
        %v2906 = vsub.f32 1.0, %v2905
        %v2907 = vmul.f32 %v2904, %v2906
        %v2908 = vadd.f32 %v2904, %v2907
        %vm2909 = vweird.f32 %v2798
        %vm2910 = vweird.f32 %v2904
        %vm2911 = vmor %vm2909, %vm2910
        %v2912 = vsel %vm2911, %v2904, %v2908
        %v2913 = vand.u32 2147483647, %v2798
        %vm2914 = vcmp.eq.f32.partialorder %v2913, 8.507059e+37
        %v2915 = vand.u32 %v2798, 2147483648
        %v2916 = vor.u32 1.1754944e-38, %v2915
        %v2917 = vsel %vm2914, %v2916, %v2912
        %v2918 = vmul.f32 1.0, %v2917
        %v2919 = vadd.f32 %v2727, %v871
        %v2920 = vadd.f32 %v2755, %v872
        %v2921 = vadd.f32 %v2729, %v871
        %v2922 = vadd.f32 %v2757, %v872
        %v2923 = vmul.f32 %v2813, %v2919
        %v2924 = vmul.f32 %v2828, %v2920
        %v2925 = vmul.f32 %v2873, %v2921
        %v2926 = vmul.f32 %v2888, %v2922
        %v2927 = vadd.f32 %v2581, %v2923
        %v2928 = vadd.f32 %v2582, %v2924
        %v2929 = vadd.f32 %v2587, %v2925
        %v2930 = vadd.f32 %v2588, %v2926
        %v2931 = vtanh.pop %v2927
        %v2932 = vtanh.pop %v2928
        %v2933 = vtanh.pop %v2929
        %v2934 = vtanh.pop %v2930
        %v2935 = vsub.f32 1.0, %v2843
        %v2936 = vsub.f32 1.0, %v2858
        %v2937 = vsub.f32 1.0, %v2903
        %v2938 = vsub.f32 1.0, %v2918
        %v2939 = vmul.f32 %v2935, %v2931
        %v2940 = vmul.f32 %v2936, %v2932
        %v2941 = vmul.f32 %v2937, %v2933
        %v2942 = vmul.f32 %v2938, %v2934
        %v2943 = vmul.f32 %v2843, %v2569
        %v2944 = vmul.f32 %v2858, %v2570
        %v2945 = vmul.f32 %v2903, %v2571
        %v2946 = vmul.f32 %v2918, %v2572
        %v2947 = vadd.f32 %v2939, %v2943
        %v2948 = vadd.f32 %v2940, %v2944
        %v2949 = vadd.f32 %v2941, %v2945
        %v2950 = vadd.f32 %v2942, %v2946
        %v2951 = vstv %s2573
        %vm2952 = vcmp.ge.s32.totalorder %v2951, %v890
        %vm2953 = vcmp.ge.s32.totalorder %v2951, %v891
        %vm2954 = vcmp.ge.s32.totalorder %v2951, %v892
        %vm2955 = vcmp.ge.s32.totalorder %v2951, %v893
        %vm2956 = vcmp.lt.s32.totalorder %v2951, %v900
        %vm2957 = vcmp.lt.s32.totalorder %v2951, %v901
        %vm2958 = vcmp.lt.s32.totalorder %v2951, %v902
        %vm2959 = vcmp.lt.s32.totalorder %v2951, %v903
        %vm2960 = vmand %vm2952, %vm2956
        %vm2961 = vmand %vm2953, %vm2957
        %vm2962 = vmand %vm2954, %vm2958
        %vm2963 = vmand %vm2955, %vm2959
        %v2964 = vsel %vm2960, %v2947, %v2569
        %v2965 = vsel %vm2961, %v2948, %v2570
        %v2966 = vsel %vm2962, %v2949, %v2571
        %v2967 = vsel %vm2963, %v2950, %v2572
        %2968 = vst [vmem:[#allocation3] sm:$0xff] %v2964
        %2969 = vst [vmem:[#allocation3 + $0x8] sm:$0xff] %v2965
        %2970 = vst [vmem:[#allocation3 + $0x10] sm:$0xff] %v2966
        %2971 = vst [vmem:[#allocation3 + $0x18] sm:$0xff] %v2967
        %p2972 = scmp.eq.s32.totalorder %s25, 1
        // Predicated region
        $region81: #{tpu_custom_call.1} parent=59 // pred_check
          %p2973 = pneg %p2972
        $region82: #{tpu_custom_call.1} parent=59 // pred_check_branch
          %2975 = sbr.rel (%p2973) target = $region84
        $region83: #{tpu_custom_call.1} parent=59 // pred_region
          %v2976 = vld [vmem:[#allocation9] sm:$0xff]
          %v2977 = vld [vmem:[#allocation9 + $0x8] sm:$0xff]
          %v2978 = vld [vmem:[#allocation9 + $0x10] sm:$0xff]
          %v2979 = vld [vmem:[#allocation9 + $0x18] sm:$0xff]
          %v2980 = vld [vmem:[#allocation9 + $0x20] sm:$0xff]
          %v2981 = vld [vmem:[#allocation9 + $0x28] sm:$0xff]
          %v2982 = vld [vmem:[#allocation9 + $0x30] sm:$0xff]
          %v2983 = vld [vmem:[#allocation9 + $0x38] sm:$0xff]
          %v2984 = vld [vmem:[#allocation9 + $0x40] sm:$0xff]
          %v2985 = vld [vmem:[#allocation9 + $0x48] sm:$0xff]
          %v2986 = vld [vmem:[#allocation9 + $0x50] sm:$0xff]
          %v2987 = vld [vmem:[#allocation9 + $0x58] sm:$0xff]
          %v2988 = vld [vmem:[#allocation9 + $0x60] sm:$0xff]
          %v2989 = vld [vmem:[#allocation9 + $0x68] sm:$0xff]
          %v2990 = vld [vmem:[#allocation9 + $0x70] sm:$0xff]
          %v2991 = vld [vmem:[#allocation9 + $0x78] sm:$0xff]
          %v2992 = vld [vmem:[#allocation9 + $0x80] sm:$0xff]
          %v2993 = vld [vmem:[#allocation9 + $0x88] sm:$0xff]
          %v2994 = vld [vmem:[#allocation9 + $0x90] sm:$0xff]
          %v2995 = vld [vmem:[#allocation9 + $0x98] sm:$0xff]
          %v2996 = vld [vmem:[#allocation9 + $0xa0] sm:$0xff]
          %v2997 = vld [vmem:[#allocation9 + $0xa8] sm:$0xff]
          %v2998 = vld [vmem:[#allocation9 + $0xb0] sm:$0xff]
          %v2999 = vld [vmem:[#allocation9 + $0xb8] sm:$0xff]
          %v3000 = vld [vmem:[#allocation9 + $0xc0] sm:$0xff]
          %v3001 = vld [vmem:[#allocation9 + $0xc8] sm:$0xff]
          %v3002 = vld [vmem:[#allocation9 + $0xd0] sm:$0xff]
          %v3003 = vld [vmem:[#allocation9 + $0xd8] sm:$0xff]
          %v3004 = vld [vmem:[#allocation9 + $0xe0] sm:$0xff]
          %v3005 = vld [vmem:[#allocation9 + $0xe8] sm:$0xff]
          %v3006 = vld [vmem:[#allocation9 + $0xf0] sm:$0xff]
          %v3007 = vld [vmem:[#allocation9 + $0xf8] sm:$0xff]
          %v3008 = vld [vmem:[%s7] sm:$0x1]
          %v3010 = vperm.slane %v3008, 0
          %3012 = vmatpush.msra.mxu0 %v2991
          %3013 = vmatpush.msra.mxu0 %v2990
          %3014 = vmatpush.msra.mxu0 %v2989
          %3015 = vmatpush.msra.mxu0 %v2988
          %3016 = vmatpush.msra.mxu0 %v2987
          %3017 = vmatpush.msra.mxu0 %v2986
          %3018 = vmatpush.msra.mxu0 %v2985
          %3019 = vmatpush.msra.mxu0 %v2984
          %3020 = vmatpush.msra.mxu0 %v2983
          %3021 = vmatpush.msra.mxu0 %v2982
          %3022 = vmatpush.msra.mxu0 %v2981
          %3023 = vmatpush.msra.mxu0 %v2980
          %3024 = vmatpush.msra.mxu0 %v2979
          %3025 = vmatpush.msra.mxu0 %v2978
          %3026 = vmatpush.msra.mxu0 %v2977
          %3027 = vmatpush.msra.mxu0 %v2976
          %3028 = vmatmul.f32.gmra.mxu0 %v2964
          %v3029 = vpop.f32.mrf.mxu0
          %v3030 = vadd.f32 %v3010, %v3029
          %3031 = vmatmul.f32.gmra.mxu0 %v2966
          %v3032 = vpop.f32.mrf.mxu0
          %v3033 = vadd.f32 %v3010, %v3032
          %3034 = vdwg.mxu0
          %3035 = vmatpush.msra.mxu0 %v3007
          %3036 = vmatpush.msra.mxu0 %v3006
          %3037 = vmatpush.msra.mxu0 %v3005
          %3038 = vmatpush.msra.mxu0 %v3004
          %3039 = vmatpush.msra.mxu0 %v3003
          %3040 = vmatpush.msra.mxu0 %v3002
          %3041 = vmatpush.msra.mxu0 %v3001
          %3042 = vmatpush.msra.mxu0 %v3000
          %3043 = vmatpush.msra.mxu0 %v2999
          %3044 = vmatpush.msra.mxu0 %v2998
          %3045 = vmatpush.msra.mxu0 %v2997
          %3046 = vmatpush.msra.mxu0 %v2996
          %3047 = vmatpush.msra.mxu0 %v2995
          %3048 = vmatpush.msra.mxu0 %v2994
          %3049 = vmatpush.msra.mxu0 %v2993
          %3050 = vmatpush.msra.mxu0 %v2992
          %3051 = vmatmul.f32.gmra.mxu0 %v2965
          %v3052 = vpop.f32.mrf.mxu0
          %v3053 = vadd.f32 %v3030, %v3052
          %3054 = vmatmul.f32.gmra.mxu0 %v2967
          %v3055 = vpop.f32.mrf.mxu0
          %v3056 = vadd.f32 %v3033, %v3055
          %3057 = vdwg.mxu0
          %v3058 = vmax.f32 %v3053, 0.0
          %v3059 = vmax.f32 %v3056, 0.0
          %v3060 = vld [vmem:[#allocation10] sm:$0xff]
          %v3061 = vld [vmem:[#allocation10 + $0x8] sm:$0xff]
          %v3062 = vld [vmem:[#allocation10 + $0x10] sm:$0xff]
          %v3063 = vld [vmem:[#allocation10 + $0x18] sm:$0xff]
          %v3064 = vld [vmem:[#allocation10 + $0x20] sm:$0xff]
          %v3065 = vld [vmem:[#allocation10 + $0x28] sm:$0xff]
          %v3066 = vld [vmem:[#allocation10 + $0x30] sm:$0xff]
          %v3067 = vld [vmem:[#allocation10 + $0x38] sm:$0xff]
          %v3068 = vld [vmem:[#allocation10 + $0x40] sm:$0xff]
          %v3069 = vld [vmem:[#allocation10 + $0x48] sm:$0xff]
          %v3070 = vld [vmem:[#allocation10 + $0x50] sm:$0xff]
          %v3071 = vld [vmem:[#allocation10 + $0x58] sm:$0xff]
          %v3072 = vld [vmem:[#allocation10 + $0x60] sm:$0xff]
          %v3073 = vld [vmem:[#allocation10 + $0x68] sm:$0xff]
          %v3074 = vld [vmem:[#allocation10 + $0x70] sm:$0xff]
          %v3075 = vld [vmem:[#allocation10 + $0x78] sm:$0xff]
          %v3076 = vld [vmem:[%s9] sm:$0x1]
          %v3078 = vperm.slane %v3076, 0
          %3080 = vmatpush.msra.mxu0 %v3075
          %3081 = vmatpush.msra.mxu0 %v3074
          %3082 = vmatpush.msra.mxu0 %v3073
          %3083 = vmatpush.msra.mxu0 %v3072
          %3084 = vmatpush.msra.mxu0 %v3071
          %3085 = vmatpush.msra.mxu0 %v3070
          %3086 = vmatpush.msra.mxu0 %v3069
          %3087 = vmatpush.msra.mxu0 %v3068
          %3088 = vmatpush.msra.mxu0 %v3067
          %3089 = vmatpush.msra.mxu0 %v3066
          %3090 = vmatpush.msra.mxu0 %v3065
          %3091 = vmatpush.msra.mxu0 %v3064
          %3092 = vmatpush.msra.mxu0 %v3063
          %3093 = vmatpush.msra.mxu0 %v3062
          %3094 = vmatpush.msra.mxu0 %v3061
          %3095 = vmatpush.msra.mxu0 %v3060
          %3096 = vmatmul.f32.gmra.mxu0 %v3058
          %v3097 = vpop.f32.mrf.mxu0
          %v3098 = vadd.f32 %v3078, %v3097
          %3099 = vmatmul.f32.gmra.mxu0 %v3059
          %v3100 = vpop.f32.mrf.mxu0
          %v3101 = vadd.f32 %v3078, %v3100
          %3102 = vdwg.mxu0
          %3103 = vst [vmem:[#allocation12] sm:$0xff] %v3098
          %3104 = vst [vmem:[#allocation12 + $0x8] sm:$0xff] %v3101
        $region84: #{tpu_custom_call.1} parent=59 // pred_fallthru
          _
        // Predicated region
        $region85: #{tpu_custom_call.1} parent=59 // pred_check
          %p3105 = pneg %p253
        $region86: #{tpu_custom_call.1} parent=59 // pred_check_branch
          %3107 = sbr.rel (%p3105) target = $region88
        $region87: #{tpu_custom_call.1} parent=59 // pred_region
          %3109 = vsyncadd [#allocation6], 0
          %s3110 = sshll.u32 [#allocation12], 4
          %s3111 = int_to_ptr.vmem [resolvable:$true] %s3110
          %s3112 = sshll.u32 %s10, 4
          %s3113 = int_to_ptr.hbm [resolvable:$true] %s3112
          %3118 = dma.vmem_to_hbm [thread:$0]  %s3111, 256, %s3113, [#allocation6], 128, 128, 8
        $region88: #{tpu_custom_call.1} parent=59 // pred_fallthru
          _
        // Predicated region
        $region89: #{tpu_custom_call.1} parent=59 // pred_check
          %p3119 = pneg %p253
        $region90: #{tpu_custom_call.1} parent=59 // pred_check_branch
          %3121 = sbr.rel (%p3119) target = $region92
        $region91: #{tpu_custom_call.1} parent=59 // pred_region
          %3123 = dma.done [#allocation6], 256
        $region92: #{tpu_custom_call.1} parent=59 // pred_fallthru
          _
      $region60: #{tpu_custom_call.1} parent=5 // pred_fallthru
        _
      %p3124 = scmp.le.s32.totalorder 2, %s20
      // Predicated region
      $region93: #{tpu_custom_call.1} parent=5 // pred_check
        %p3125 = pneg %p3124
      $region94: #{tpu_custom_call.1} parent=5 // pred_check_branch
        %3127 = sbr.rel (%p3125) target = $region96
      $region95: #{tpu_custom_call.1} parent=5 // pred_region
        %s3128 = ssub.s32 %s20, 2
      $region96: #{tpu_custom_call.1} parent=5 // pred_fallthru
        _
    $region6: #{tpu_custom_call.1} parent=1 // loop_footer
      %s24 = sadd.s32 1, %s20
    $region7: #{tpu_custom_call.1} parent=1 // loop_footer_branch
      %19 = sbr.rel target = $region3
    $region8: #{tpu_custom_call.1} parent=1 // loop_exit
      _
    %3129 = vsyncpa [#allocation5], 1
    %s3130 = scalar_lea.sflag [#allocation5], 1
    %3131 = vsyncpa %s3130, 1
    %3132 = vsyncpa [#allocation8], 1
    %3133 = vsyncpa [#allocation11], 1
    %3134 = vsyncpa [#allocation6], 1
    %s3135 = scalar_lea.sflag [#allocation6], 1
    %3136 = vsyncpa %s3135, 1

</llo_original>
